<compile_context>
chip_gen: v7x
topology: tpu7x:2x2x1
jax: 0.10.0
libtpu: 0.0.40
codegen_flags: <defaults>
</compile_context>

<pallas_src>
import functools

import jax
import jax.numpy as jnp
from jax.experimental import pallas as pl
from jax.experimental.pallas import tpu as pltpu

_EPS = 1e-5


def _double_blaze_kernel(H, W,
                         x_ref, yy_ref, xx_ref,
                         wdw1_ref, bdw1_ref, g1_ref, be1_ref,
                         wpw1_ref, bpw1_ref, g2_ref, be2_ref,
                         wdw2_ref, bdw2_ref, g3_ref, be3_ref,
                         wpw2_ref, bpw2_ref, g4_ref, be4_ref,
                         out_ref):
    x = x_ref[...]                  # (Cin, R): channels on sublanes, R=N*H*W on lanes
    R = x.shape[1]
    inv_r = 1.0 / R
    yy = yy_ref[...]                # (1, R) int32 spatial row coordinate per lane
    xx = xx_ref[...]                # (1, R) int32 spatial col coordinate per lane

    def dw5x5(src, w, b):
        # 5x5 depthwise conv, stride 1, zero "same" padding.
        # src: (C, R); w: (C, 25) taps on lanes; b: (C, 1).
        acc = jnp.zeros(src.shape, jnp.float32)
        for k in range(25):
            oy, ox = k // 5 - 2, k % 5 - 2
            off = oy * W + ox
            # lane rotation on the XLU instead of a materialized shifted slice
            shifted = src if off == 0 else pltpu.roll(src, shift=(-off) % R, axis=1)
            # zero-padding handled by a per-lane validity mask (also kills the
            # wrap-around across image / batch boundaries introduced by roll)
            valid = jnp.where((yy + oy >= 0) & (yy + oy < H) &
                              (xx + ox >= 0) & (xx + ox < W), 1.0, 0.0)   # (1, R)
            acc = acc + shifted * (w[:, k:k + 1] * valid)                 # (C,1)*(1,R)->(C,R)
        return acc + b

    def bn(t, gamma, beta):
        # training-mode BatchNorm: per-channel (row) stats over all R lanes,
        # fused single pass (sum + sum of squares), folded into scale/shift.
        s1 = jnp.sum(t, axis=1, keepdims=True)
        s2 = jnp.sum(t * t, axis=1, keepdims=True)
        mu = s1 * inv_r
        var = s2 * inv_r - mu * mu                      # biased variance
        scale = gamma * jax.lax.rsqrt(var + _EPS)
        return t * scale + (beta - mu * scale)

    def pw1x1(t, w_t, b):
        # 1x1 conv as unrolled VPU FMAs.  t: (Cin_, R); w_t: (Cout_, Cin_); b: (Cout_, 1)
        cin = t.shape[0]
        cout = w_t.shape[0]
        acc = jnp.zeros((cout, t.shape[1]), jnp.float32)
        for c in range(cin):
            acc = acc + t[c:c + 1, :] * w_t[:, c:c + 1]   # (1,R)*(Cout,1)->(Cout,R)
        return acc + b

    # branch1
    t = bn(dw5x5(x, wdw1_ref[...], bdw1_ref[...]), g1_ref[...], be1_ref[...])
    t = jnp.maximum(bn(pw1x1(t, wpw1_ref[...], bpw1_ref[...]),
                       g2_ref[...], be2_ref[...]), 0.0)
    u = bn(dw5x5(t, wdw2_ref[...], bdw2_ref[...]), g3_ref[...], be3_ref[...])
    u = bn(pw1x1(u, wpw2_ref[...], bpw2_ref[...]), g4_ref[...], be4_ref[...])

    # identity shortcut (stride=1) + ReLU; lane-dense full-width store
    out_ref[...] = jnp.maximum(u + x, 0.0)


def init_params(key, cin, cmid, cout):
    ks = jax.random.split(key, 16)

    def nrm(k, shape, scale=0.1):
        return scale * jax.random.normal(k, shape, jnp.float32)

    return {
        # depthwise 5x5 (groups=cin): PyTorch weight (cin,1,5,5) -> (cin, 25)
        "w_dw1": nrm(ks[0], (cin, 25)),
        "b_dw1": nrm(ks[1], (cin, 1)),
        "g1": 1.0 + nrm(ks[2], (cin, 1)),
        "be1": nrm(ks[3], (cin, 1)),
        # 1x1 conv cin->cmid: PyTorch weight (cmid,cin,1,1) -> (cmid, cin)
        "w_pw1": nrm(ks[4], (cmid, cin)),
        "b_pw1": nrm(ks[5], (cmid, 1)),
        "g2": 1.0 + nrm(ks[6], (cmid, 1)),
        "be2": nrm(ks[7], (cmid, 1)),
        # depthwise 5x5 (groups=cmid)
        "w_dw2": nrm(ks[8], (cmid, 25)),
        "b_dw2": nrm(ks[9], (cmid, 1)),
        "g3": 1.0 + nrm(ks[10], (cmid, 1)),
        "be3": nrm(ks[11], (cmid, 1)),
        # 1x1 conv cmid->cout
        "w_pw2": nrm(ks[12], (cout, cmid)),
        "b_pw2": nrm(ks[13], (cout, 1)),
        "g4": 1.0 + nrm(ks[14], (cout, 1)),
        "be4": nrm(ks[15], (cout, 1)),
    }


def double_blaze_block(x_nchw, params, stride=1):
    assert stride == 1, "only the stride=1 (identity-shortcut) variant is implemented"
    N, Cin, H, W = x_nchw.shape
    Cmid = params["w_pw1"].shape[0]
    Cout = params["w_pw2"].shape[0]
    assert Cout == Cin, "stride=1 residual add requires out_channels == in_channels"
    R = N * H * W

    # Lane-dense working layout: channels on sublanes, R = N*H*W on lanes.
    x2d = jnp.transpose(x_nchw, (1, 0, 2, 3)).reshape(Cin, R).astype(jnp.float32)

    # Per-lane spatial coordinates for the in-kernel "same"-padding masks.
    sp = jnp.arange(R, dtype=jnp.int32) % (H * W)
    yy = (sp // W).reshape(1, R)
    xx = (sp % W).reshape(1, R)

    flat = (
        params["w_dw1"], params["b_dw1"], params["g1"], params["be1"],
        params["w_pw1"], params["b_pw1"], params["g2"], params["be2"],
        params["w_dw2"], params["b_dw2"], params["g3"], params["be3"],
        params["w_pw2"], params["b_pw2"], params["g4"], params["be4"],
    )
    n_inputs = 3 + len(flat)

    out2d = pl.pallas_call(
        functools.partial(_double_blaze_kernel, H, W),
        out_shape=jax.ShapeDtypeStruct((Cout, R), jnp.float32),
        in_specs=[pl.BlockSpec(memory_space=pltpu.MemorySpace.VMEM)] * n_inputs,
        out_specs=pl.BlockSpec(memory_space=pltpu.MemorySpace.VMEM),
    )(x2d, yy, xx, *flat)

    # (Cout, R) -> NCHW (wrapper-side layout plumbing).
    return jnp.transpose(out2d.reshape(Cout, N, H, W), (1, 0, 2, 3))


def _reference(x_nchw, params):
    """Pure-JAX (non-Pallas) reference mirroring the PyTorch module forward."""
    x = jnp.transpose(x_nchw, (0, 2, 3, 1)).astype(jnp.float32)  # NHWC
    N, H, W, _ = x.shape

    def dw5(t, w, b):                       # w: (C, 25), b: (C, 1)
        tp = jnp.pad(t, ((0, 0), (2, 2), (2, 2), (0, 0)))
        acc = jnp.zeros_like(t)
        for k in range(25):
            dy, dx = k // 5, k % 5
            acc = acc + tp[:, dy:dy + H, dx:dx + W, :] * w[:, k][None, None, None, :]
        return acc + b[:, 0][None, None, None, :]

    def bn(t, g, be):
        mu = jnp.mean(t, axis=(0, 1, 2), keepdims=True)
        var = jnp.mean((t - mu) ** 2, axis=(0, 1, 2), keepdims=True)
        return (t - mu) * jax.lax.rsqrt(var + _EPS) * g[:, 0] + be[:, 0]

    def pw(t, w, b):                        # w: (Cout, Cin), b: (Cout, 1)
        return jnp.einsum("nhwc,oc->nhwo", t, w) + b[:, 0]

    t = bn(dw5(x, params["w_dw1"], params["b_dw1"]), params["g1"], params["be1"])
    t = jnp.maximum(bn(pw(t, params["w_pw1"], params["b_pw1"]),
                       params["g2"], params["be2"]), 0.0)
    u = bn(dw5(t, params["w_dw2"], params["b_dw2"]), params["g3"], params["be3"])
    u = bn(pw(u, params["w_pw2"], params["b_pw2"]), params["g4"], params["be4"])
    y = jnp.maximum(u + x, 0.0)
    return jnp.transpose(y, (0, 3, 1, 2))


if __name__ == "__main__":
    key = jax.random.PRNGKey(0)
    kx, kp = jax.random.split(key)

    N, Cin, H, W = 2, 4, 16, 16     # x: (2, 4, 16, 16) NCHW
    Cmid, Cout = 8, 4               # mid_channels=8, out_channels=in_channels (stride=1)

    x = jax.random.normal(kx, (N, Cin, H, W), jnp.float32)
    params = init_params(kp, Cin, Cmid, Cout)

    y = double_blaze_block(x, params, stride=1)
    y = jax.block_until_ready(y)

    assert y.shape == (N, Cout, H, W), y.shape
    assert bool(jnp.all(jnp.isfinite(y)))
    assert bool(jnp.all(y >= 0.0))          # output of a ReLU

    y_ref = _reference(x, params)
    max_err = float(jnp.max(jnp.abs(y - y_ref)))
    assert max_err < 5e-3, f"max abs err vs reference = {max_err}"

    print("KERNEL_OK")
</pallas_src>

<mosaic_0001>
module attributes {stable_mosaic.version = 11 : i64} {
  func.func @_double_blaze_kernel(%arg0: memref<4x512xf32, #tpu.memory_space<vmem>>, %arg1: memref<1x512xi32, #tpu.memory_space<vmem>>, %arg2: memref<1x512xi32, #tpu.memory_space<vmem>>, %arg3: memref<4x25xf32, #tpu.memory_space<vmem>>, %arg4: memref<4x1xf32, #tpu.memory_space<vmem>>, %arg5: memref<4x1xf32, #tpu.memory_space<vmem>>, %arg6: memref<4x1xf32, #tpu.memory_space<vmem>>, %arg7: memref<8x4xf32, #tpu.memory_space<vmem>>, %arg8: memref<8x1xf32, #tpu.memory_space<vmem>>, %arg9: memref<8x1xf32, #tpu.memory_space<vmem>>, %arg10: memref<8x1xf32, #tpu.memory_space<vmem>>, %arg11: memref<8x25xf32, #tpu.memory_space<vmem>>, %arg12: memref<8x1xf32, #tpu.memory_space<vmem>>, %arg13: memref<8x1xf32, #tpu.memory_space<vmem>>, %arg14: memref<8x1xf32, #tpu.memory_space<vmem>>, %arg15: memref<4x8xf32, #tpu.memory_space<vmem>>, %arg16: memref<4x1xf32, #tpu.memory_space<vmem>>, %arg17: memref<4x1xf32, #tpu.memory_space<vmem>>, %arg18: memref<4x1xf32, #tpu.memory_space<vmem>>, %arg19: memref<4x512xf32, #tpu.memory_space<vmem>>) attributes {dimension_semantics = [], scalar_prefetch = 0 : i64, scratch_operands = 0 : i64, tpu.core_type = #tpu.core_type<tc>} {
    %c0 = arith.constant 0 : index
    %c0_0 = arith.constant 0 : index
    %0 = vector.load %arg0[%c0, %c0_0] : memref<4x512xf32, #tpu.memory_space<vmem>>, vector<4x512xf32>
    %c0_1 = arith.constant 0 : index
    %c0_2 = arith.constant 0 : index
    %1 = vector.load %arg1[%c0_1, %c0_2] : memref<1x512xi32, #tpu.memory_space<vmem>>, vector<1x512xi32>
    %c0_3 = arith.constant 0 : index
    %c0_4 = arith.constant 0 : index
    %2 = vector.load %arg2[%c0_3, %c0_4] : memref<1x512xi32, #tpu.memory_space<vmem>>, vector<1x512xi32>
    %c0_5 = arith.constant 0 : index
    %c0_6 = arith.constant 0 : index
    %3 = vector.load %arg3[%c0_5, %c0_6] : memref<4x25xf32, #tpu.memory_space<vmem>>, vector<4x25xf32>
    %c0_7 = arith.constant 0 : index
    %c0_8 = arith.constant 0 : index
    %4 = vector.load %arg4[%c0_7, %c0_8] : memref<4x1xf32, #tpu.memory_space<vmem>>, vector<4x1xf32>
    %cst = arith.constant 0.000000e+00 : f32
    %5 = vector.broadcast %cst : f32 to vector<4x512xf32>
    %c34_i32 = arith.constant 34 : i32
    %6 = tpu.dynamic_rotate %0 by %c34_i32 dim 1 : vector<4x512xf32>, i32 -> vector<4x512xf32>
    %c-2_i32 = arith.constant -2 : i32
    %7 = vector.broadcast %c-2_i32 : i32 to vector<1x512xi32>
    %8 = arith.addi %1, %7 : vector<1x512xi32>
    %c0_i32 = arith.constant 0 : i32
    %9 = vector.broadcast %c0_i32 : i32 to vector<1x512xi32>
    %10 = arith.cmpi sge, %8, %9 : vector<1x512xi32>
    %c-2_i32_9 = arith.constant -2 : i32
    %11 = vector.broadcast %c-2_i32_9 : i32 to vector<1x512xi32>
    %12 = arith.addi %1, %11 : vector<1x512xi32>
    %c16_i32 = arith.constant 16 : i32
    %13 = vector.broadcast %c16_i32 : i32 to vector<1x512xi32>
    %14 = arith.cmpi slt, %12, %13 : vector<1x512xi32>
    %15 = arith.andi %10, %14 : vector<1x512xi1>
    %c-2_i32_10 = arith.constant -2 : i32
    %16 = vector.broadcast %c-2_i32_10 : i32 to vector<1x512xi32>
    %17 = arith.addi %2, %16 : vector<1x512xi32>
    %c0_i32_11 = arith.constant 0 : i32
    %18 = vector.broadcast %c0_i32_11 : i32 to vector<1x512xi32>
    %19 = arith.cmpi sge, %17, %18 : vector<1x512xi32>
    %20 = arith.andi %15, %19 : vector<1x512xi1>
    %c-2_i32_12 = arith.constant -2 : i32
    %21 = vector.broadcast %c-2_i32_12 : i32 to vector<1x512xi32>
    %22 = arith.addi %2, %21 : vector<1x512xi32>
    %c16_i32_13 = arith.constant 16 : i32
    %23 = vector.broadcast %c16_i32_13 : i32 to vector<1x512xi32>
    %24 = arith.cmpi slt, %22, %23 : vector<1x512xi32>
    %25 = arith.andi %20, %24 : vector<1x512xi1>
    %cst_14 = arith.constant 1.000000e+00 : f32
    %cst_15 = arith.constant 0.000000e+00 : f32
    %26 = vector.broadcast %cst_14 : f32 to vector<1x512xf32>
    %27 = vector.broadcast %cst_15 : f32 to vector<1x512xf32>
    %28 = arith.select %25, %26, %27 : vector<1x512xi1>, vector<1x512xf32>
    %29 = vector.extract_strided_slice %3 {offsets = [0, 0], sizes = [4, 1], strides = [1, 1]} : vector<4x25xf32> to vector<4x1xf32>
    %30 = vector.broadcast %29 : vector<4x1xf32> to vector<4x512xf32>
    %31 = vector.broadcast %28 : vector<1x512xf32> to vector<4x512xf32>
    %32 = arith.mulf %30, %31 : vector<4x512xf32>
    %33 = arith.mulf %6, %32 : vector<4x512xf32>
    %34 = arith.addf %5, %33 : vector<4x512xf32>
    %c33_i32 = arith.constant 33 : i32
    %35 = tpu.dynamic_rotate %0 by %c33_i32 dim 1 : vector<4x512xf32>, i32 -> vector<4x512xf32>
    %c-2_i32_16 = arith.constant -2 : i32
    %36 = vector.broadcast %c-2_i32_16 : i32 to vector<1x512xi32>
    %37 = arith.addi %1, %36 : vector<1x512xi32>
    %c0_i32_17 = arith.constant 0 : i32
    %38 = vector.broadcast %c0_i32_17 : i32 to vector<1x512xi32>
    %39 = arith.cmpi sge, %37, %38 : vector<1x512xi32>
    %c-2_i32_18 = arith.constant -2 : i32
    %40 = vector.broadcast %c-2_i32_18 : i32 to vector<1x512xi32>
    %41 = arith.addi %1, %40 : vector<1x512xi32>
    %c16_i32_19 = arith.constant 16 : i32
    %42 = vector.broadcast %c16_i32_19 : i32 to vector<1x512xi32>
    %43 = arith.cmpi slt, %41, %42 : vector<1x512xi32>
    %44 = arith.andi %39, %43 : vector<1x512xi1>
    %c-1_i32 = arith.constant -1 : i32
    %45 = vector.broadcast %c-1_i32 : i32 to vector<1x512xi32>
    %46 = arith.addi %2, %45 : vector<1x512xi32>
    %c0_i32_20 = arith.constant 0 : i32
    %47 = vector.broadcast %c0_i32_20 : i32 to vector<1x512xi32>
    %48 = arith.cmpi sge, %46, %47 : vector<1x512xi32>
    %49 = arith.andi %44, %48 : vector<1x512xi1>
    %c-1_i32_21 = arith.constant -1 : i32
    %50 = vector.broadcast %c-1_i32_21 : i32 to vector<1x512xi32>
    %51 = arith.addi %2, %50 : vector<1x512xi32>
    %c16_i32_22 = arith.constant 16 : i32
    %52 = vector.broadcast %c16_i32_22 : i32 to vector<1x512xi32>
    %53 = arith.cmpi slt, %51, %52 : vector<1x512xi32>
    %54 = arith.andi %49, %53 : vector<1x512xi1>
    %cst_23 = arith.constant 1.000000e+00 : f32
    %cst_24 = arith.constant 0.000000e+00 : f32
    %55 = vector.broadcast %cst_23 : f32 to vector<1x512xf32>
    %56 = vector.broadcast %cst_24 : f32 to vector<1x512xf32>
    %57 = arith.select %54, %55, %56 : vector<1x512xi1>, vector<1x512xf32>
    %58 = vector.extract_strided_slice %3 {offsets = [0, 1], sizes = [4, 1], strides = [1, 1]} : vector<4x25xf32> to vector<4x1xf32>
    %59 = vector.broadcast %58 : vector<4x1xf32> to vector<4x512xf32>
    %60 = vector.broadcast %57 : vector<1x512xf32> to vector<4x512xf32>
    %61 = arith.mulf %59, %60 : vector<4x512xf32>
    %62 = arith.mulf %35, %61 : vector<4x512xf32>
    %63 = arith.addf %34, %62 : vector<4x512xf32>
    %c32_i32 = arith.constant 32 : i32
    %64 = tpu.dynamic_rotate %0 by %c32_i32 dim 1 : vector<4x512xf32>, i32 -> vector<4x512xf32>
    %c-2_i32_25 = arith.constant -2 : i32
    %65 = vector.broadcast %c-2_i32_25 : i32 to vector<1x512xi32>
    %66 = arith.addi %1, %65 : vector<1x512xi32>
    %c0_i32_26 = arith.constant 0 : i32
    %67 = vector.broadcast %c0_i32_26 : i32 to vector<1x512xi32>
    %68 = arith.cmpi sge, %66, %67 : vector<1x512xi32>
    %c-2_i32_27 = arith.constant -2 : i32
    %69 = vector.broadcast %c-2_i32_27 : i32 to vector<1x512xi32>
    %70 = arith.addi %1, %69 : vector<1x512xi32>
    %c16_i32_28 = arith.constant 16 : i32
    %71 = vector.broadcast %c16_i32_28 : i32 to vector<1x512xi32>
    %72 = arith.cmpi slt, %70, %71 : vector<1x512xi32>
    %73 = arith.andi %68, %72 : vector<1x512xi1>
    %c0_i32_29 = arith.constant 0 : i32
    %74 = vector.broadcast %c0_i32_29 : i32 to vector<1x512xi32>
    %75 = arith.addi %2, %74 : vector<1x512xi32>
    %c0_i32_30 = arith.constant 0 : i32
    %76 = vector.broadcast %c0_i32_30 : i32 to vector<1x512xi32>
    %77 = arith.cmpi sge, %75, %76 : vector<1x512xi32>
    %78 = arith.andi %73, %77 : vector<1x512xi1>
    %c0_i32_31 = arith.constant 0 : i32
    %79 = vector.broadcast %c0_i32_31 : i32 to vector<1x512xi32>
    %80 = arith.addi %2, %79 : vector<1x512xi32>
    %c16_i32_32 = arith.constant 16 : i32
    %81 = vector.broadcast %c16_i32_32 : i32 to vector<1x512xi32>
    %82 = arith.cmpi slt, %80, %81 : vector<1x512xi32>
    %83 = arith.andi %78, %82 : vector<1x512xi1>
    %cst_33 = arith.constant 1.000000e+00 : f32
    %cst_34 = arith.constant 0.000000e+00 : f32
    %84 = vector.broadcast %cst_33 : f32 to vector<1x512xf32>
    %85 = vector.broadcast %cst_34 : f32 to vector<1x512xf32>
    %86 = arith.select %83, %84, %85 : vector<1x512xi1>, vector<1x512xf32>
    %87 = vector.extract_strided_slice %3 {offsets = [0, 2], sizes = [4, 1], strides = [1, 1]} : vector<4x25xf32> to vector<4x1xf32>
    %88 = vector.broadcast %87 : vector<4x1xf32> to vector<4x512xf32>
    %89 = vector.broadcast %86 : vector<1x512xf32> to vector<4x512xf32>
    %90 = arith.mulf %88, %89 : vector<4x512xf32>
    %91 = arith.mulf %64, %90 : vector<4x512xf32>
    %92 = arith.addf %63, %91 : vector<4x512xf32>
    %c31_i32 = arith.constant 31 : i32
    %93 = tpu.dynamic_rotate %0 by %c31_i32 dim 1 : vector<4x512xf32>, i32 -> vector<4x512xf32>
    %c-2_i32_35 = arith.constant -2 : i32
    %94 = vector.broadcast %c-2_i32_35 : i32 to vector<1x512xi32>
    %95 = arith.addi %1, %94 : vector<1x512xi32>
    %c0_i32_36 = arith.constant 0 : i32
    %96 = vector.broadcast %c0_i32_36 : i32 to vector<1x512xi32>
    %97 = arith.cmpi sge, %95, %96 : vector<1x512xi32>
    %c-2_i32_37 = arith.constant -2 : i32
    %98 = vector.broadcast %c-2_i32_37 : i32 to vector<1x512xi32>
    %99 = arith.addi %1, %98 : vector<1x512xi32>
    %c16_i32_38 = arith.constant 16 : i32
    %100 = vector.broadcast %c16_i32_38 : i32 to vector<1x512xi32>
    %101 = arith.cmpi slt, %99, %100 : vector<1x512xi32>
    %102 = arith.andi %97, %101 : vector<1x512xi1>
    %c1_i32 = arith.constant 1 : i32
    %103 = vector.broadcast %c1_i32 : i32 to vector<1x512xi32>
    %104 = arith.addi %2, %103 : vector<1x512xi32>
    %c0_i32_39 = arith.constant 0 : i32
    %105 = vector.broadcast %c0_i32_39 : i32 to vector<1x512xi32>
    %106 = arith.cmpi sge, %104, %105 : vector<1x512xi32>
    %107 = arith.andi %102, %106 : vector<1x512xi1>
    %c1_i32_40 = arith.constant 1 : i32
    %108 = vector.broadcast %c1_i32_40 : i32 to vector<1x512xi32>
    %109 = arith.addi %2, %108 : vector<1x512xi32>
    %c16_i32_41 = arith.constant 16 : i32
    %110 = vector.broadcast %c16_i32_41 : i32 to vector<1x512xi32>
    %111 = arith.cmpi slt, %109, %110 : vector<1x512xi32>
    %112 = arith.andi %107, %111 : vector<1x512xi1>
    %cst_42 = arith.constant 1.000000e+00 : f32
    %cst_43 = arith.constant 0.000000e+00 : f32
    %113 = vector.broadcast %cst_42 : f32 to vector<1x512xf32>
    %114 = vector.broadcast %cst_43 : f32 to vector<1x512xf32>
    %115 = arith.select %112, %113, %114 : vector<1x512xi1>, vector<1x512xf32>
    %116 = vector.extract_strided_slice %3 {offsets = [0, 3], sizes = [4, 1], strides = [1, 1]} : vector<4x25xf32> to vector<4x1xf32>
    %117 = vector.broadcast %116 : vector<4x1xf32> to vector<4x512xf32>
    %118 = vector.broadcast %115 : vector<1x512xf32> to vector<4x512xf32>
    %119 = arith.mulf %117, %118 : vector<4x512xf32>
    %120 = arith.mulf %93, %119 : vector<4x512xf32>
    %121 = arith.addf %92, %120 : vector<4x512xf32>
    %c30_i32 = arith.constant 30 : i32
    %122 = tpu.dynamic_rotate %0 by %c30_i32 dim 1 : vector<4x512xf32>, i32 -> vector<4x512xf32>
    %c-2_i32_44 = arith.constant -2 : i32
    %123 = vector.broadcast %c-2_i32_44 : i32 to vector<1x512xi32>
    %124 = arith.addi %1, %123 : vector<1x512xi32>
    %c0_i32_45 = arith.constant 0 : i32
    %125 = vector.broadcast %c0_i32_45 : i32 to vector<1x512xi32>
    %126 = arith.cmpi sge, %124, %125 : vector<1x512xi32>
    %c-2_i32_46 = arith.constant -2 : i32
    %127 = vector.broadcast %c-2_i32_46 : i32 to vector<1x512xi32>
    %128 = arith.addi %1, %127 : vector<1x512xi32>
    %c16_i32_47 = arith.constant 16 : i32
    %129 = vector.broadcast %c16_i32_47 : i32 to vector<1x512xi32>
    %130 = arith.cmpi slt, %128, %129 : vector<1x512xi32>
    %131 = arith.andi %126, %130 : vector<1x512xi1>
    %c2_i32 = arith.constant 2 : i32
    %132 = vector.broadcast %c2_i32 : i32 to vector<1x512xi32>
    %133 = arith.addi %2, %132 : vector<1x512xi32>
    %c0_i32_48 = arith.constant 0 : i32
    %134 = vector.broadcast %c0_i32_48 : i32 to vector<1x512xi32>
    %135 = arith.cmpi sge, %133, %134 : vector<1x512xi32>
    %136 = arith.andi %131, %135 : vector<1x512xi1>
    %c2_i32_49 = arith.constant 2 : i32
    %137 = vector.broadcast %c2_i32_49 : i32 to vector<1x512xi32>
    %138 = arith.addi %2, %137 : vector<1x512xi32>
    %c16_i32_50 = arith.constant 16 : i32
    %139 = vector.broadcast %c16_i32_50 : i32 to vector<1x512xi32>
    %140 = arith.cmpi slt, %138, %139 : vector<1x512xi32>
    %141 = arith.andi %136, %140 : vector<1x512xi1>
    %cst_51 = arith.constant 1.000000e+00 : f32
    %cst_52 = arith.constant 0.000000e+00 : f32
    %142 = vector.broadcast %cst_51 : f32 to vector<1x512xf32>
    %143 = vector.broadcast %cst_52 : f32 to vector<1x512xf32>
    %144 = arith.select %141, %142, %143 : vector<1x512xi1>, vector<1x512xf32>
    %145 = vector.extract_strided_slice %3 {offsets = [0, 4], sizes = [4, 1], strides = [1, 1]} : vector<4x25xf32> to vector<4x1xf32>
    %146 = vector.broadcast %145 : vector<4x1xf32> to vector<4x512xf32>
    %147 = vector.broadcast %144 : vector<1x512xf32> to vector<4x512xf32>
    %148 = arith.mulf %146, %147 : vector<4x512xf32>
    %149 = arith.mulf %122, %148 : vector<4x512xf32>
    %150 = arith.addf %121, %149 : vector<4x512xf32>
    %c18_i32 = arith.constant 18 : i32
    %151 = tpu.dynamic_rotate %0 by %c18_i32 dim 1 : vector<4x512xf32>, i32 -> vector<4x512xf32>
    %c-1_i32_53 = arith.constant -1 : i32
    %152 = vector.broadcast %c-1_i32_53 : i32 to vector<1x512xi32>
    %153 = arith.addi %1, %152 : vector<1x512xi32>
    %c0_i32_54 = arith.constant 0 : i32
    %154 = vector.broadcast %c0_i32_54 : i32 to vector<1x512xi32>
    %155 = arith.cmpi sge, %153, %154 : vector<1x512xi32>
    %c-1_i32_55 = arith.constant -1 : i32
    %156 = vector.broadcast %c-1_i32_55 : i32 to vector<1x512xi32>
    %157 = arith.addi %1, %156 : vector<1x512xi32>
    %c16_i32_56 = arith.constant 16 : i32
    %158 = vector.broadcast %c16_i32_56 : i32 to vector<1x512xi32>
    %159 = arith.cmpi slt, %157, %158 : vector<1x512xi32>
    %160 = arith.andi %155, %159 : vector<1x512xi1>
    %c-2_i32_57 = arith.constant -2 : i32
    %161 = vector.broadcast %c-2_i32_57 : i32 to vector<1x512xi32>
    %162 = arith.addi %2, %161 : vector<1x512xi32>
    %c0_i32_58 = arith.constant 0 : i32
    %163 = vector.broadcast %c0_i32_58 : i32 to vector<1x512xi32>
    %164 = arith.cmpi sge, %162, %163 : vector<1x512xi32>
    %165 = arith.andi %160, %164 : vector<1x512xi1>
    %c-2_i32_59 = arith.constant -2 : i32
    %166 = vector.broadcast %c-2_i32_59 : i32 to vector<1x512xi32>
    %167 = arith.addi %2, %166 : vector<1x512xi32>
    %c16_i32_60 = arith.constant 16 : i32
    %168 = vector.broadcast %c16_i32_60 : i32 to vector<1x512xi32>
    %169 = arith.cmpi slt, %167, %168 : vector<1x512xi32>
    %170 = arith.andi %165, %169 : vector<1x512xi1>
    %cst_61 = arith.constant 1.000000e+00 : f32
    %cst_62 = arith.constant 0.000000e+00 : f32
    %171 = vector.broadcast %cst_61 : f32 to vector<1x512xf32>
    %172 = vector.broadcast %cst_62 : f32 to vector<1x512xf32>
    %173 = arith.select %170, %171, %172 : vector<1x512xi1>, vector<1x512xf32>
    %174 = vector.extract_strided_slice %3 {offsets = [0, 5], sizes = [4, 1], strides = [1, 1]} : vector<4x25xf32> to vector<4x1xf32>
    %175 = vector.broadcast %174 : vector<4x1xf32> to vector<4x512xf32>
    %176 = vector.broadcast %173 : vector<1x512xf32> to vector<4x512xf32>
    %177 = arith.mulf %175, %176 : vector<4x512xf32>
    %178 = arith.mulf %151, %177 : vector<4x512xf32>
    %179 = arith.addf %150, %178 : vector<4x512xf32>
    %c17_i32 = arith.constant 17 : i32
    %180 = tpu.dynamic_rotate %0 by %c17_i32 dim 1 : vector<4x512xf32>, i32 -> vector<4x512xf32>
    %c-1_i32_63 = arith.constant -1 : i32
    %181 = vector.broadcast %c-1_i32_63 : i32 to vector<1x512xi32>
    %182 = arith.addi %1, %181 : vector<1x512xi32>
    %c0_i32_64 = arith.constant 0 : i32
    %183 = vector.broadcast %c0_i32_64 : i32 to vector<1x512xi32>
    %184 = arith.cmpi sge, %182, %183 : vector<1x512xi32>
    %c-1_i32_65 = arith.constant -1 : i32
    %185 = vector.broadcast %c-1_i32_65 : i32 to vector<1x512xi32>
    %186 = arith.addi %1, %185 : vector<1x512xi32>
    %c16_i32_66 = arith.constant 16 : i32
    %187 = vector.broadcast %c16_i32_66 : i32 to vector<1x512xi32>
    %188 = arith.cmpi slt, %186, %187 : vector<1x512xi32>
    %189 = arith.andi %184, %188 : vector<1x512xi1>
    %c-1_i32_67 = arith.constant -1 : i32
    %190 = vector.broadcast %c-1_i32_67 : i32 to vector<1x512xi32>
    %191 = arith.addi %2, %190 : vector<1x512xi32>
    %c0_i32_68 = arith.constant 0 : i32
    %192 = vector.broadcast %c0_i32_68 : i32 to vector<1x512xi32>
    %193 = arith.cmpi sge, %191, %192 : vector<1x512xi32>
    %194 = arith.andi %189, %193 : vector<1x512xi1>
    %c-1_i32_69 = arith.constant -1 : i32
    %195 = vector.broadcast %c-1_i32_69 : i32 to vector<1x512xi32>
    %196 = arith.addi %2, %195 : vector<1x512xi32>
    %c16_i32_70 = arith.constant 16 : i32
    %197 = vector.broadcast %c16_i32_70 : i32 to vector<1x512xi32>
    %198 = arith.cmpi slt, %196, %197 : vector<1x512xi32>
    %199 = arith.andi %194, %198 : vector<1x512xi1>
    %cst_71 = arith.constant 1.000000e+00 : f32
    %cst_72 = arith.constant 0.000000e+00 : f32
    %200 = vector.broadcast %cst_71 : f32 to vector<1x512xf32>
    %201 = vector.broadcast %cst_72 : f32 to vector<1x512xf32>
    %202 = arith.select %199, %200, %201 : vector<1x512xi1>, vector<1x512xf32>
    %203 = vector.extract_strided_slice %3 {offsets = [0, 6], sizes = [4, 1], strides = [1, 1]} : vector<4x25xf32> to vector<4x1xf32>
    %204 = vector.broadcast %203 : vector<4x1xf32> to vector<4x512xf32>
    %205 = vector.broadcast %202 : vector<1x512xf32> to vector<4x512xf32>
    %206 = arith.mulf %204, %205 : vector<4x512xf32>
    %207 = arith.mulf %180, %206 : vector<4x512xf32>
    %208 = arith.addf %179, %207 : vector<4x512xf32>
    %c16_i32_73 = arith.constant 16 : i32
    %209 = tpu.dynamic_rotate %0 by %c16_i32_73 dim 1 : vector<4x512xf32>, i32 -> vector<4x512xf32>
    %c-1_i32_74 = arith.constant -1 : i32
    %210 = vector.broadcast %c-1_i32_74 : i32 to vector<1x512xi32>
    %211 = arith.addi %1, %210 : vector<1x512xi32>
    %c0_i32_75 = arith.constant 0 : i32
    %212 = vector.broadcast %c0_i32_75 : i32 to vector<1x512xi32>
    %213 = arith.cmpi sge, %211, %212 : vector<1x512xi32>
    %c-1_i32_76 = arith.constant -1 : i32
    %214 = vector.broadcast %c-1_i32_76 : i32 to vector<1x512xi32>
    %215 = arith.addi %1, %214 : vector<1x512xi32>
    %c16_i32_77 = arith.constant 16 : i32
    %216 = vector.broadcast %c16_i32_77 : i32 to vector<1x512xi32>
    %217 = arith.cmpi slt, %215, %216 : vector<1x512xi32>
    %218 = arith.andi %213, %217 : vector<1x512xi1>
    %c0_i32_78 = arith.constant 0 : i32
    %219 = vector.broadcast %c0_i32_78 : i32 to vector<1x512xi32>
    %220 = arith.addi %2, %219 : vector<1x512xi32>
    %c0_i32_79 = arith.constant 0 : i32
    %221 = vector.broadcast %c0_i32_79 : i32 to vector<1x512xi32>
    %222 = arith.cmpi sge, %220, %221 : vector<1x512xi32>
    %223 = arith.andi %218, %222 : vector<1x512xi1>
    %c0_i32_80 = arith.constant 0 : i32
    %224 = vector.broadcast %c0_i32_80 : i32 to vector<1x512xi32>
    %225 = arith.addi %2, %224 : vector<1x512xi32>
    %c16_i32_81 = arith.constant 16 : i32
    %226 = vector.broadcast %c16_i32_81 : i32 to vector<1x512xi32>
    %227 = arith.cmpi slt, %225, %226 : vector<1x512xi32>
    %228 = arith.andi %223, %227 : vector<1x512xi1>
    %cst_82 = arith.constant 1.000000e+00 : f32
    %cst_83 = arith.constant 0.000000e+00 : f32
    %229 = vector.broadcast %cst_82 : f32 to vector<1x512xf32>
    %230 = vector.broadcast %cst_83 : f32 to vector<1x512xf32>
    %231 = arith.select %228, %229, %230 : vector<1x512xi1>, vector<1x512xf32>
    %232 = vector.extract_strided_slice %3 {offsets = [0, 7], sizes = [4, 1], strides = [1, 1]} : vector<4x25xf32> to vector<4x1xf32>
    %233 = vector.broadcast %232 : vector<4x1xf32> to vector<4x512xf32>
    %234 = vector.broadcast %231 : vector<1x512xf32> to vector<4x512xf32>
    %235 = arith.mulf %233, %234 : vector<4x512xf32>
    %236 = arith.mulf %209, %235 : vector<4x512xf32>
    %237 = arith.addf %208, %236 : vector<4x512xf32>
    %c15_i32 = arith.constant 15 : i32
    %238 = tpu.dynamic_rotate %0 by %c15_i32 dim 1 : vector<4x512xf32>, i32 -> vector<4x512xf32>
    %c-1_i32_84 = arith.constant -1 : i32
    %239 = vector.broadcast %c-1_i32_84 : i32 to vector<1x512xi32>
    %240 = arith.addi %1, %239 : vector<1x512xi32>
    %c0_i32_85 = arith.constant 0 : i32
    %241 = vector.broadcast %c0_i32_85 : i32 to vector<1x512xi32>
    %242 = arith.cmpi sge, %240, %241 : vector<1x512xi32>
    %c-1_i32_86 = arith.constant -1 : i32
    %243 = vector.broadcast %c-1_i32_86 : i32 to vector<1x512xi32>
    %244 = arith.addi %1, %243 : vector<1x512xi32>
    %c16_i32_87 = arith.constant 16 : i32
    %245 = vector.broadcast %c16_i32_87 : i32 to vector<1x512xi32>
    %246 = arith.cmpi slt, %244, %245 : vector<1x512xi32>
    %247 = arith.andi %242, %246 : vector<1x512xi1>
    %c1_i32_88 = arith.constant 1 : i32
    %248 = vector.broadcast %c1_i32_88 : i32 to vector<1x512xi32>
    %249 = arith.addi %2, %248 : vector<1x512xi32>
    %c0_i32_89 = arith.constant 0 : i32
    %250 = vector.broadcast %c0_i32_89 : i32 to vector<1x512xi32>
    %251 = arith.cmpi sge, %249, %250 : vector<1x512xi32>
    %252 = arith.andi %247, %251 : vector<1x512xi1>
    %c1_i32_90 = arith.constant 1 : i32
    %253 = vector.broadcast %c1_i32_90 : i32 to vector<1x512xi32>
    %254 = arith.addi %2, %253 : vector<1x512xi32>
    %c16_i32_91 = arith.constant 16 : i32
    %255 = vector.broadcast %c16_i32_91 : i32 to vector<1x512xi32>
    %256 = arith.cmpi slt, %254, %255 : vector<1x512xi32>
    %257 = arith.andi %252, %256 : vector<1x512xi1>
    %cst_92 = arith.constant 1.000000e+00 : f32
    %cst_93 = arith.constant 0.000000e+00 : f32
    %258 = vector.broadcast %cst_92 : f32 to vector<1x512xf32>
    %259 = vector.broadcast %cst_93 : f32 to vector<1x512xf32>
    %260 = arith.select %257, %258, %259 : vector<1x512xi1>, vector<1x512xf32>
    %261 = vector.extract_strided_slice %3 {offsets = [0, 8], sizes = [4, 1], strides = [1, 1]} : vector<4x25xf32> to vector<4x1xf32>
    %262 = vector.broadcast %261 : vector<4x1xf32> to vector<4x512xf32>
    %263 = vector.broadcast %260 : vector<1x512xf32> to vector<4x512xf32>
    %264 = arith.mulf %262, %263 : vector<4x512xf32>
    %265 = arith.mulf %238, %264 : vector<4x512xf32>
    %266 = arith.addf %237, %265 : vector<4x512xf32>
    %c14_i32 = arith.constant 14 : i32
    %267 = tpu.dynamic_rotate %0 by %c14_i32 dim 1 : vector<4x512xf32>, i32 -> vector<4x512xf32>
    %c-1_i32_94 = arith.constant -1 : i32
    %268 = vector.broadcast %c-1_i32_94 : i32 to vector<1x512xi32>
    %269 = arith.addi %1, %268 : vector<1x512xi32>
    %c0_i32_95 = arith.constant 0 : i32
    %270 = vector.broadcast %c0_i32_95 : i32 to vector<1x512xi32>
    %271 = arith.cmpi sge, %269, %270 : vector<1x512xi32>
    %c-1_i32_96 = arith.constant -1 : i32
    %272 = vector.broadcast %c-1_i32_96 : i32 to vector<1x512xi32>
    %273 = arith.addi %1, %272 : vector<1x512xi32>
    %c16_i32_97 = arith.constant 16 : i32
    %274 = vector.broadcast %c16_i32_97 : i32 to vector<1x512xi32>
    %275 = arith.cmpi slt, %273, %274 : vector<1x512xi32>
    %276 = arith.andi %271, %275 : vector<1x512xi1>
    %c2_i32_98 = arith.constant 2 : i32
    %277 = vector.broadcast %c2_i32_98 : i32 to vector<1x512xi32>
    %278 = arith.addi %2, %277 : vector<1x512xi32>
    %c0_i32_99 = arith.constant 0 : i32
    %279 = vector.broadcast %c0_i32_99 : i32 to vector<1x512xi32>
    %280 = arith.cmpi sge, %278, %279 : vector<1x512xi32>
    %281 = arith.andi %276, %280 : vector<1x512xi1>
    %c2_i32_100 = arith.constant 2 : i32
    %282 = vector.broadcast %c2_i32_100 : i32 to vector<1x512xi32>
    %283 = arith.addi %2, %282 : vector<1x512xi32>
    %c16_i32_101 = arith.constant 16 : i32
    %284 = vector.broadcast %c16_i32_101 : i32 to vector<1x512xi32>
    %285 = arith.cmpi slt, %283, %284 : vector<1x512xi32>
    %286 = arith.andi %281, %285 : vector<1x512xi1>
    %cst_102 = arith.constant 1.000000e+00 : f32
    %cst_103 = arith.constant 0.000000e+00 : f32
    %287 = vector.broadcast %cst_102 : f32 to vector<1x512xf32>
    %288 = vector.broadcast %cst_103 : f32 to vector<1x512xf32>
    %289 = arith.select %286, %287, %288 : vector<1x512xi1>, vector<1x512xf32>
    %290 = vector.extract_strided_slice %3 {offsets = [0, 9], sizes = [4, 1], strides = [1, 1]} : vector<4x25xf32> to vector<4x1xf32>
    %291 = vector.broadcast %290 : vector<4x1xf32> to vector<4x512xf32>
    %292 = vector.broadcast %289 : vector<1x512xf32> to vector<4x512xf32>
    %293 = arith.mulf %291, %292 : vector<4x512xf32>
    %294 = arith.mulf %267, %293 : vector<4x512xf32>
    %295 = arith.addf %266, %294 : vector<4x512xf32>
    %c2_i32_104 = arith.constant 2 : i32
    %296 = tpu.dynamic_rotate %0 by %c2_i32_104 dim 1 : vector<4x512xf32>, i32 -> vector<4x512xf32>
    %c0_i32_105 = arith.constant 0 : i32
    %297 = vector.broadcast %c0_i32_105 : i32 to vector<1x512xi32>
    %298 = arith.addi %1, %297 : vector<1x512xi32>
    %c0_i32_106 = arith.constant 0 : i32
    %299 = vector.broadcast %c0_i32_106 : i32 to vector<1x512xi32>
    %300 = arith.cmpi sge, %298, %299 : vector<1x512xi32>
    %c0_i32_107 = arith.constant 0 : i32
    %301 = vector.broadcast %c0_i32_107 : i32 to vector<1x512xi32>
    %302 = arith.addi %1, %301 : vector<1x512xi32>
    %c16_i32_108 = arith.constant 16 : i32
    %303 = vector.broadcast %c16_i32_108 : i32 to vector<1x512xi32>
    %304 = arith.cmpi slt, %302, %303 : vector<1x512xi32>
    %305 = arith.andi %300, %304 : vector<1x512xi1>
    %c-2_i32_109 = arith.constant -2 : i32
    %306 = vector.broadcast %c-2_i32_109 : i32 to vector<1x512xi32>
    %307 = arith.addi %2, %306 : vector<1x512xi32>
    %c0_i32_110 = arith.constant 0 : i32
    %308 = vector.broadcast %c0_i32_110 : i32 to vector<1x512xi32>
    %309 = arith.cmpi sge, %307, %308 : vector<1x512xi32>
    %310 = arith.andi %305, %309 : vector<1x512xi1>
    %c-2_i32_111 = arith.constant -2 : i32
    %311 = vector.broadcast %c-2_i32_111 : i32 to vector<1x512xi32>
    %312 = arith.addi %2, %311 : vector<1x512xi32>
    %c16_i32_112 = arith.constant 16 : i32
    %313 = vector.broadcast %c16_i32_112 : i32 to vector<1x512xi32>
    %314 = arith.cmpi slt, %312, %313 : vector<1x512xi32>
    %315 = arith.andi %310, %314 : vector<1x512xi1>
    %cst_113 = arith.constant 1.000000e+00 : f32
    %cst_114 = arith.constant 0.000000e+00 : f32
    %316 = vector.broadcast %cst_113 : f32 to vector<1x512xf32>
    %317 = vector.broadcast %cst_114 : f32 to vector<1x512xf32>
    %318 = arith.select %315, %316, %317 : vector<1x512xi1>, vector<1x512xf32>
    %319 = vector.extract_strided_slice %3 {offsets = [0, 10], sizes = [4, 1], strides = [1, 1]} : vector<4x25xf32> to vector<4x1xf32>
    %320 = vector.broadcast %319 : vector<4x1xf32> to vector<4x512xf32>
    %321 = vector.broadcast %318 : vector<1x512xf32> to vector<4x512xf32>
    %322 = arith.mulf %320, %321 : vector<4x512xf32>
    %323 = arith.mulf %296, %322 : vector<4x512xf32>
    %324 = arith.addf %295, %323 : vector<4x512xf32>
    %c1_i32_115 = arith.constant 1 : i32
    %325 = tpu.dynamic_rotate %0 by %c1_i32_115 dim 1 : vector<4x512xf32>, i32 -> vector<4x512xf32>
    %c0_i32_116 = arith.constant 0 : i32
    %326 = vector.broadcast %c0_i32_116 : i32 to vector<1x512xi32>
    %327 = arith.addi %1, %326 : vector<1x512xi32>
    %c0_i32_117 = arith.constant 0 : i32
    %328 = vector.broadcast %c0_i32_117 : i32 to vector<1x512xi32>
    %329 = arith.cmpi sge, %327, %328 : vector<1x512xi32>
    %c0_i32_118 = arith.constant 0 : i32
    %330 = vector.broadcast %c0_i32_118 : i32 to vector<1x512xi32>
    %331 = arith.addi %1, %330 : vector<1x512xi32>
    %c16_i32_119 = arith.constant 16 : i32
    %332 = vector.broadcast %c16_i32_119 : i32 to vector<1x512xi32>
    %333 = arith.cmpi slt, %331, %332 : vector<1x512xi32>
    %334 = arith.andi %329, %333 : vector<1x512xi1>
    %c-1_i32_120 = arith.constant -1 : i32
    %335 = vector.broadcast %c-1_i32_120 : i32 to vector<1x512xi32>
    %336 = arith.addi %2, %335 : vector<1x512xi32>
    %c0_i32_121 = arith.constant 0 : i32
    %337 = vector.broadcast %c0_i32_121 : i32 to vector<1x512xi32>
    %338 = arith.cmpi sge, %336, %337 : vector<1x512xi32>
    %339 = arith.andi %334, %338 : vector<1x512xi1>
    %c-1_i32_122 = arith.constant -1 : i32
    %340 = vector.broadcast %c-1_i32_122 : i32 to vector<1x512xi32>
    %341 = arith.addi %2, %340 : vector<1x512xi32>
    %c16_i32_123 = arith.constant 16 : i32
    %342 = vector.broadcast %c16_i32_123 : i32 to vector<1x512xi32>
    %343 = arith.cmpi slt, %341, %342 : vector<1x512xi32>
    %344 = arith.andi %339, %343 : vector<1x512xi1>
    %cst_124 = arith.constant 1.000000e+00 : f32
    %cst_125 = arith.constant 0.000000e+00 : f32
    %345 = vector.broadcast %cst_124 : f32 to vector<1x512xf32>
    %346 = vector.broadcast %cst_125 : f32 to vector<1x512xf32>
    %347 = arith.select %344, %345, %346 : vector<1x512xi1>, vector<1x512xf32>
    %348 = vector.extract_strided_slice %3 {offsets = [0, 11], sizes = [4, 1], strides = [1, 1]} : vector<4x25xf32> to vector<4x1xf32>
    %349 = vector.broadcast %348 : vector<4x1xf32> to vector<4x512xf32>
    %350 = vector.broadcast %347 : vector<1x512xf32> to vector<4x512xf32>
    %351 = arith.mulf %349, %350 : vector<4x512xf32>
    %352 = arith.mulf %325, %351 : vector<4x512xf32>
    %353 = arith.addf %324, %352 : vector<4x512xf32>
    %c0_i32_126 = arith.constant 0 : i32
    %354 = vector.broadcast %c0_i32_126 : i32 to vector<1x512xi32>
    %355 = arith.addi %1, %354 : vector<1x512xi32>
    %c0_i32_127 = arith.constant 0 : i32
    %356 = vector.broadcast %c0_i32_127 : i32 to vector<1x512xi32>
    %357 = arith.cmpi sge, %355, %356 : vector<1x512xi32>
    %c0_i32_128 = arith.constant 0 : i32
    %358 = vector.broadcast %c0_i32_128 : i32 to vector<1x512xi32>
    %359 = arith.addi %1, %358 : vector<1x512xi32>
    %c16_i32_129 = arith.constant 16 : i32
    %360 = vector.broadcast %c16_i32_129 : i32 to vector<1x512xi32>
    %361 = arith.cmpi slt, %359, %360 : vector<1x512xi32>
    %362 = arith.andi %357, %361 : vector<1x512xi1>
    %c0_i32_130 = arith.constant 0 : i32
    %363 = vector.broadcast %c0_i32_130 : i32 to vector<1x512xi32>
    %364 = arith.addi %2, %363 : vector<1x512xi32>
    %c0_i32_131 = arith.constant 0 : i32
    %365 = vector.broadcast %c0_i32_131 : i32 to vector<1x512xi32>
    %366 = arith.cmpi sge, %364, %365 : vector<1x512xi32>
    %367 = arith.andi %362, %366 : vector<1x512xi1>
    %c0_i32_132 = arith.constant 0 : i32
    %368 = vector.broadcast %c0_i32_132 : i32 to vector<1x512xi32>
    %369 = arith.addi %2, %368 : vector<1x512xi32>
    %c16_i32_133 = arith.constant 16 : i32
    %370 = vector.broadcast %c16_i32_133 : i32 to vector<1x512xi32>
    %371 = arith.cmpi slt, %369, %370 : vector<1x512xi32>
    %372 = arith.andi %367, %371 : vector<1x512xi1>
    %cst_134 = arith.constant 1.000000e+00 : f32
    %cst_135 = arith.constant 0.000000e+00 : f32
    %373 = vector.broadcast %cst_134 : f32 to vector<1x512xf32>
    %374 = vector.broadcast %cst_135 : f32 to vector<1x512xf32>
    %375 = arith.select %372, %373, %374 : vector<1x512xi1>, vector<1x512xf32>
    %376 = vector.extract_strided_slice %3 {offsets = [0, 12], sizes = [4, 1], strides = [1, 1]} : vector<4x25xf32> to vector<4x1xf32>
    %377 = vector.broadcast %376 : vector<4x1xf32> to vector<4x512xf32>
    %378 = vector.broadcast %375 : vector<1x512xf32> to vector<4x512xf32>
    %379 = arith.mulf %377, %378 : vector<4x512xf32>
    %380 = arith.mulf %0, %379 : vector<4x512xf32>
    %381 = arith.addf %353, %380 : vector<4x512xf32>
    %c511_i32 = arith.constant 511 : i32
    %382 = tpu.dynamic_rotate %0 by %c511_i32 dim 1 : vector<4x512xf32>, i32 -> vector<4x512xf32>
    %c0_i32_136 = arith.constant 0 : i32
    %383 = vector.broadcast %c0_i32_136 : i32 to vector<1x512xi32>
    %384 = arith.addi %1, %383 : vector<1x512xi32>
    %c0_i32_137 = arith.constant 0 : i32
    %385 = vector.broadcast %c0_i32_137 : i32 to vector<1x512xi32>
    %386 = arith.cmpi sge, %384, %385 : vector<1x512xi32>
    %c0_i32_138 = arith.constant 0 : i32
    %387 = vector.broadcast %c0_i32_138 : i32 to vector<1x512xi32>
    %388 = arith.addi %1, %387 : vector<1x512xi32>
    %c16_i32_139 = arith.constant 16 : i32
    %389 = vector.broadcast %c16_i32_139 : i32 to vector<1x512xi32>
    %390 = arith.cmpi slt, %388, %389 : vector<1x512xi32>
    %391 = arith.andi %386, %390 : vector<1x512xi1>
    %c1_i32_140 = arith.constant 1 : i32
    %392 = vector.broadcast %c1_i32_140 : i32 to vector<1x512xi32>
    %393 = arith.addi %2, %392 : vector<1x512xi32>
    %c0_i32_141 = arith.constant 0 : i32
    %394 = vector.broadcast %c0_i32_141 : i32 to vector<1x512xi32>
    %395 = arith.cmpi sge, %393, %394 : vector<1x512xi32>
    %396 = arith.andi %391, %395 : vector<1x512xi1>
    %c1_i32_142 = arith.constant 1 : i32
    %397 = vector.broadcast %c1_i32_142 : i32 to vector<1x512xi32>
    %398 = arith.addi %2, %397 : vector<1x512xi32>
    %c16_i32_143 = arith.constant 16 : i32
    %399 = vector.broadcast %c16_i32_143 : i32 to vector<1x512xi32>
    %400 = arith.cmpi slt, %398, %399 : vector<1x512xi32>
    %401 = arith.andi %396, %400 : vector<1x512xi1>
    %cst_144 = arith.constant 1.000000e+00 : f32
    %cst_145 = arith.constant 0.000000e+00 : f32
    %402 = vector.broadcast %cst_144 : f32 to vector<1x512xf32>
    %403 = vector.broadcast %cst_145 : f32 to vector<1x512xf32>
    %404 = arith.select %401, %402, %403 : vector<1x512xi1>, vector<1x512xf32>
    %405 = vector.extract_strided_slice %3 {offsets = [0, 13], sizes = [4, 1], strides = [1, 1]} : vector<4x25xf32> to vector<4x1xf32>
    %406 = vector.broadcast %405 : vector<4x1xf32> to vector<4x512xf32>
    %407 = vector.broadcast %404 : vector<1x512xf32> to vector<4x512xf32>
    %408 = arith.mulf %406, %407 : vector<4x512xf32>
    %409 = arith.mulf %382, %408 : vector<4x512xf32>
    %410 = arith.addf %381, %409 : vector<4x512xf32>
    %c510_i32 = arith.constant 510 : i32
    %411 = tpu.dynamic_rotate %0 by %c510_i32 dim 1 : vector<4x512xf32>, i32 -> vector<4x512xf32>
    %c0_i32_146 = arith.constant 0 : i32
    %412 = vector.broadcast %c0_i32_146 : i32 to vector<1x512xi32>
    %413 = arith.addi %1, %412 : vector<1x512xi32>
    %c0_i32_147 = arith.constant 0 : i32
    %414 = vector.broadcast %c0_i32_147 : i32 to vector<1x512xi32>
    %415 = arith.cmpi sge, %413, %414 : vector<1x512xi32>
    %c0_i32_148 = arith.constant 0 : i32
    %416 = vector.broadcast %c0_i32_148 : i32 to vector<1x512xi32>
    %417 = arith.addi %1, %416 : vector<1x512xi32>
    %c16_i32_149 = arith.constant 16 : i32
    %418 = vector.broadcast %c16_i32_149 : i32 to vector<1x512xi32>
    %419 = arith.cmpi slt, %417, %418 : vector<1x512xi32>
    %420 = arith.andi %415, %419 : vector<1x512xi1>
    %c2_i32_150 = arith.constant 2 : i32
    %421 = vector.broadcast %c2_i32_150 : i32 to vector<1x512xi32>
    %422 = arith.addi %2, %421 : vector<1x512xi32>
    %c0_i32_151 = arith.constant 0 : i32
    %423 = vector.broadcast %c0_i32_151 : i32 to vector<1x512xi32>
    %424 = arith.cmpi sge, %422, %423 : vector<1x512xi32>
    %425 = arith.andi %420, %424 : vector<1x512xi1>
    %c2_i32_152 = arith.constant 2 : i32
    %426 = vector.broadcast %c2_i32_152 : i32 to vector<1x512xi32>
    %427 = arith.addi %2, %426 : vector<1x512xi32>
    %c16_i32_153 = arith.constant 16 : i32
    %428 = vector.broadcast %c16_i32_153 : i32 to vector<1x512xi32>
    %429 = arith.cmpi slt, %427, %428 : vector<1x512xi32>
    %430 = arith.andi %425, %429 : vector<1x512xi1>
    %cst_154 = arith.constant 1.000000e+00 : f32
    %cst_155 = arith.constant 0.000000e+00 : f32
    %431 = vector.broadcast %cst_154 : f32 to vector<1x512xf32>
    %432 = vector.broadcast %cst_155 : f32 to vector<1x512xf32>
    %433 = arith.select %430, %431, %432 : vector<1x512xi1>, vector<1x512xf32>
    %434 = vector.extract_strided_slice %3 {offsets = [0, 14], sizes = [4, 1], strides = [1, 1]} : vector<4x25xf32> to vector<4x1xf32>
    %435 = vector.broadcast %434 : vector<4x1xf32> to vector<4x512xf32>
    %436 = vector.broadcast %433 : vector<1x512xf32> to vector<4x512xf32>
    %437 = arith.mulf %435, %436 : vector<4x512xf32>
    %438 = arith.mulf %411, %437 : vector<4x512xf32>
    %439 = arith.addf %410, %438 : vector<4x512xf32>
    %c498_i32 = arith.constant 498 : i32
    %440 = tpu.dynamic_rotate %0 by %c498_i32 dim 1 : vector<4x512xf32>, i32 -> vector<4x512xf32>
    %c1_i32_156 = arith.constant 1 : i32
    %441 = vector.broadcast %c1_i32_156 : i32 to vector<1x512xi32>
    %442 = arith.addi %1, %441 : vector<1x512xi32>
    %c0_i32_157 = arith.constant 0 : i32
    %443 = vector.broadcast %c0_i32_157 : i32 to vector<1x512xi32>
    %444 = arith.cmpi sge, %442, %443 : vector<1x512xi32>
    %c1_i32_158 = arith.constant 1 : i32
    %445 = vector.broadcast %c1_i32_158 : i32 to vector<1x512xi32>
    %446 = arith.addi %1, %445 : vector<1x512xi32>
    %c16_i32_159 = arith.constant 16 : i32
    %447 = vector.broadcast %c16_i32_159 : i32 to vector<1x512xi32>
    %448 = arith.cmpi slt, %446, %447 : vector<1x512xi32>
    %449 = arith.andi %444, %448 : vector<1x512xi1>
    %c-2_i32_160 = arith.constant -2 : i32
    %450 = vector.broadcast %c-2_i32_160 : i32 to vector<1x512xi32>
    %451 = arith.addi %2, %450 : vector<1x512xi32>
    %c0_i32_161 = arith.constant 0 : i32
    %452 = vector.broadcast %c0_i32_161 : i32 to vector<1x512xi32>
    %453 = arith.cmpi sge, %451, %452 : vector<1x512xi32>
    %454 = arith.andi %449, %453 : vector<1x512xi1>
    %c-2_i32_162 = arith.constant -2 : i32
    %455 = vector.broadcast %c-2_i32_162 : i32 to vector<1x512xi32>
    %456 = arith.addi %2, %455 : vector<1x512xi32>
    %c16_i32_163 = arith.constant 16 : i32
    %457 = vector.broadcast %c16_i32_163 : i32 to vector<1x512xi32>
    %458 = arith.cmpi slt, %456, %457 : vector<1x512xi32>
    %459 = arith.andi %454, %458 : vector<1x512xi1>
    %cst_164 = arith.constant 1.000000e+00 : f32
    %cst_165 = arith.constant 0.000000e+00 : f32
    %460 = vector.broadcast %cst_164 : f32 to vector<1x512xf32>
    %461 = vector.broadcast %cst_165 : f32 to vector<1x512xf32>
    %462 = arith.select %459, %460, %461 : vector<1x512xi1>, vector<1x512xf32>
    %463 = vector.extract_strided_slice %3 {offsets = [0, 15], sizes = [4, 1], strides = [1, 1]} : vector<4x25xf32> to vector<4x1xf32>
    %464 = vector.broadcast %463 : vector<4x1xf32> to vector<4x512xf32>
    %465 = vector.broadcast %462 : vector<1x512xf32> to vector<4x512xf32>
    %466 = arith.mulf %464, %465 : vector<4x512xf32>
    %467 = arith.mulf %440, %466 : vector<4x512xf32>
    %468 = arith.addf %439, %467 : vector<4x512xf32>
    %c497_i32 = arith.constant 497 : i32
    %469 = tpu.dynamic_rotate %0 by %c497_i32 dim 1 : vector<4x512xf32>, i32 -> vector<4x512xf32>
    %c1_i32_166 = arith.constant 1 : i32
    %470 = vector.broadcast %c1_i32_166 : i32 to vector<1x512xi32>
    %471 = arith.addi %1, %470 : vector<1x512xi32>
    %c0_i32_167 = arith.constant 0 : i32
    %472 = vector.broadcast %c0_i32_167 : i32 to vector<1x512xi32>
    %473 = arith.cmpi sge, %471, %472 : vector<1x512xi32>
    %c1_i32_168 = arith.constant 1 : i32
    %474 = vector.broadcast %c1_i32_168 : i32 to vector<1x512xi32>
    %475 = arith.addi %1, %474 : vector<1x512xi32>
    %c16_i32_169 = arith.constant 16 : i32
    %476 = vector.broadcast %c16_i32_169 : i32 to vector<1x512xi32>
    %477 = arith.cmpi slt, %475, %476 : vector<1x512xi32>
    %478 = arith.andi %473, %477 : vector<1x512xi1>
    %c-1_i32_170 = arith.constant -1 : i32
    %479 = vector.broadcast %c-1_i32_170 : i32 to vector<1x512xi32>
    %480 = arith.addi %2, %479 : vector<1x512xi32>
    %c0_i32_171 = arith.constant 0 : i32
    %481 = vector.broadcast %c0_i32_171 : i32 to vector<1x512xi32>
    %482 = arith.cmpi sge, %480, %481 : vector<1x512xi32>
    %483 = arith.andi %478, %482 : vector<1x512xi1>
    %c-1_i32_172 = arith.constant -1 : i32
    %484 = vector.broadcast %c-1_i32_172 : i32 to vector<1x512xi32>
    %485 = arith.addi %2, %484 : vector<1x512xi32>
    %c16_i32_173 = arith.constant 16 : i32
    %486 = vector.broadcast %c16_i32_173 : i32 to vector<1x512xi32>
    %487 = arith.cmpi slt, %485, %486 : vector<1x512xi32>
    %488 = arith.andi %483, %487 : vector<1x512xi1>
    %cst_174 = arith.constant 1.000000e+00 : f32
    %cst_175 = arith.constant 0.000000e+00 : f32
    %489 = vector.broadcast %cst_174 : f32 to vector<1x512xf32>
    %490 = vector.broadcast %cst_175 : f32 to vector<1x512xf32>
    %491 = arith.select %488, %489, %490 : vector<1x512xi1>, vector<1x512xf32>
    %492 = vector.extract_strided_slice %3 {offsets = [0, 16], sizes = [4, 1], strides = [1, 1]} : vector<4x25xf32> to vector<4x1xf32>
    %493 = vector.broadcast %492 : vector<4x1xf32> to vector<4x512xf32>
    %494 = vector.broadcast %491 : vector<1x512xf32> to vector<4x512xf32>
    %495 = arith.mulf %493, %494 : vector<4x512xf32>
    %496 = arith.mulf %469, %495 : vector<4x512xf32>
    %497 = arith.addf %468, %496 : vector<4x512xf32>
    %c496_i32 = arith.constant 496 : i32
    %498 = tpu.dynamic_rotate %0 by %c496_i32 dim 1 : vector<4x512xf32>, i32 -> vector<4x512xf32>
    %c1_i32_176 = arith.constant 1 : i32
    %499 = vector.broadcast %c1_i32_176 : i32 to vector<1x512xi32>
    %500 = arith.addi %1, %499 : vector<1x512xi32>
    %c0_i32_177 = arith.constant 0 : i32
    %501 = vector.broadcast %c0_i32_177 : i32 to vector<1x512xi32>
    %502 = arith.cmpi sge, %500, %501 : vector<1x512xi32>
    %c1_i32_178 = arith.constant 1 : i32
    %503 = vector.broadcast %c1_i32_178 : i32 to vector<1x512xi32>
    %504 = arith.addi %1, %503 : vector<1x512xi32>
    %c16_i32_179 = arith.constant 16 : i32
    %505 = vector.broadcast %c16_i32_179 : i32 to vector<1x512xi32>
    %506 = arith.cmpi slt, %504, %505 : vector<1x512xi32>
    %507 = arith.andi %502, %506 : vector<1x512xi1>
    %c0_i32_180 = arith.constant 0 : i32
    %508 = vector.broadcast %c0_i32_180 : i32 to vector<1x512xi32>
    %509 = arith.addi %2, %508 : vector<1x512xi32>
    %c0_i32_181 = arith.constant 0 : i32
    %510 = vector.broadcast %c0_i32_181 : i32 to vector<1x512xi32>
    %511 = arith.cmpi sge, %509, %510 : vector<1x512xi32>
    %512 = arith.andi %507, %511 : vector<1x512xi1>
    %c0_i32_182 = arith.constant 0 : i32
    %513 = vector.broadcast %c0_i32_182 : i32 to vector<1x512xi32>
    %514 = arith.addi %2, %513 : vector<1x512xi32>
    %c16_i32_183 = arith.constant 16 : i32
    %515 = vector.broadcast %c16_i32_183 : i32 to vector<1x512xi32>
    %516 = arith.cmpi slt, %514, %515 : vector<1x512xi32>
    %517 = arith.andi %512, %516 : vector<1x512xi1>
    %cst_184 = arith.constant 1.000000e+00 : f32
    %cst_185 = arith.constant 0.000000e+00 : f32
    %518 = vector.broadcast %cst_184 : f32 to vector<1x512xf32>
    %519 = vector.broadcast %cst_185 : f32 to vector<1x512xf32>
    %520 = arith.select %517, %518, %519 : vector<1x512xi1>, vector<1x512xf32>
    %521 = vector.extract_strided_slice %3 {offsets = [0, 17], sizes = [4, 1], strides = [1, 1]} : vector<4x25xf32> to vector<4x1xf32>
    %522 = vector.broadcast %521 : vector<4x1xf32> to vector<4x512xf32>
    %523 = vector.broadcast %520 : vector<1x512xf32> to vector<4x512xf32>
    %524 = arith.mulf %522, %523 : vector<4x512xf32>
    %525 = arith.mulf %498, %524 : vector<4x512xf32>
    %526 = arith.addf %497, %525 : vector<4x512xf32>
    %c495_i32 = arith.constant 495 : i32
    %527 = tpu.dynamic_rotate %0 by %c495_i32 dim 1 : vector<4x512xf32>, i32 -> vector<4x512xf32>
    %c1_i32_186 = arith.constant 1 : i32
    %528 = vector.broadcast %c1_i32_186 : i32 to vector<1x512xi32>
    %529 = arith.addi %1, %528 : vector<1x512xi32>
    %c0_i32_187 = arith.constant 0 : i32
    %530 = vector.broadcast %c0_i32_187 : i32 to vector<1x512xi32>
    %531 = arith.cmpi sge, %529, %530 : vector<1x512xi32>
    %c1_i32_188 = arith.constant 1 : i32
    %532 = vector.broadcast %c1_i32_188 : i32 to vector<1x512xi32>
    %533 = arith.addi %1, %532 : vector<1x512xi32>
    %c16_i32_189 = arith.constant 16 : i32
    %534 = vector.broadcast %c16_i32_189 : i32 to vector<1x512xi32>
    %535 = arith.cmpi slt, %533, %534 : vector<1x512xi32>
    %536 = arith.andi %531, %535 : vector<1x512xi1>
    %c1_i32_190 = arith.constant 1 : i32
    %537 = vector.broadcast %c1_i32_190 : i32 to vector<1x512xi32>
    %538 = arith.addi %2, %537 : vector<1x512xi32>
    %c0_i32_191 = arith.constant 0 : i32
    %539 = vector.broadcast %c0_i32_191 : i32 to vector<1x512xi32>
    %540 = arith.cmpi sge, %538, %539 : vector<1x512xi32>
    %541 = arith.andi %536, %540 : vector<1x512xi1>
    %c1_i32_192 = arith.constant 1 : i32
    %542 = vector.broadcast %c1_i32_192 : i32 to vector<1x512xi32>
    %543 = arith.addi %2, %542 : vector<1x512xi32>
    %c16_i32_193 = arith.constant 16 : i32
    %544 = vector.broadcast %c16_i32_193 : i32 to vector<1x512xi32>
    %545 = arith.cmpi slt, %543, %544 : vector<1x512xi32>
    %546 = arith.andi %541, %545 : vector<1x512xi1>
    %cst_194 = arith.constant 1.000000e+00 : f32
    %cst_195 = arith.constant 0.000000e+00 : f32
    %547 = vector.broadcast %cst_194 : f32 to vector<1x512xf32>
    %548 = vector.broadcast %cst_195 : f32 to vector<1x512xf32>
    %549 = arith.select %546, %547, %548 : vector<1x512xi1>, vector<1x512xf32>
    %550 = vector.extract_strided_slice %3 {offsets = [0, 18], sizes = [4, 1], strides = [1, 1]} : vector<4x25xf32> to vector<4x1xf32>
    %551 = vector.broadcast %550 : vector<4x1xf32> to vector<4x512xf32>
    %552 = vector.broadcast %549 : vector<1x512xf32> to vector<4x512xf32>
    %553 = arith.mulf %551, %552 : vector<4x512xf32>
    %554 = arith.mulf %527, %553 : vector<4x512xf32>
    %555 = arith.addf %526, %554 : vector<4x512xf32>
    %c494_i32 = arith.constant 494 : i32
    %556 = tpu.dynamic_rotate %0 by %c494_i32 dim 1 : vector<4x512xf32>, i32 -> vector<4x512xf32>
    %c1_i32_196 = arith.constant 1 : i32
    %557 = vector.broadcast %c1_i32_196 : i32 to vector<1x512xi32>
    %558 = arith.addi %1, %557 : vector<1x512xi32>
    %c0_i32_197 = arith.constant 0 : i32
    %559 = vector.broadcast %c0_i32_197 : i32 to vector<1x512xi32>
    %560 = arith.cmpi sge, %558, %559 : vector<1x512xi32>
    %c1_i32_198 = arith.constant 1 : i32
    %561 = vector.broadcast %c1_i32_198 : i32 to vector<1x512xi32>
    %562 = arith.addi %1, %561 : vector<1x512xi32>
    %c16_i32_199 = arith.constant 16 : i32
    %563 = vector.broadcast %c16_i32_199 : i32 to vector<1x512xi32>
    %564 = arith.cmpi slt, %562, %563 : vector<1x512xi32>
    %565 = arith.andi %560, %564 : vector<1x512xi1>
    %c2_i32_200 = arith.constant 2 : i32
    %566 = vector.broadcast %c2_i32_200 : i32 to vector<1x512xi32>
    %567 = arith.addi %2, %566 : vector<1x512xi32>
    %c0_i32_201 = arith.constant 0 : i32
    %568 = vector.broadcast %c0_i32_201 : i32 to vector<1x512xi32>
    %569 = arith.cmpi sge, %567, %568 : vector<1x512xi32>
    %570 = arith.andi %565, %569 : vector<1x512xi1>
    %c2_i32_202 = arith.constant 2 : i32
    %571 = vector.broadcast %c2_i32_202 : i32 to vector<1x512xi32>
    %572 = arith.addi %2, %571 : vector<1x512xi32>
    %c16_i32_203 = arith.constant 16 : i32
    %573 = vector.broadcast %c16_i32_203 : i32 to vector<1x512xi32>
    %574 = arith.cmpi slt, %572, %573 : vector<1x512xi32>
    %575 = arith.andi %570, %574 : vector<1x512xi1>
    %cst_204 = arith.constant 1.000000e+00 : f32
    %cst_205 = arith.constant 0.000000e+00 : f32
    %576 = vector.broadcast %cst_204 : f32 to vector<1x512xf32>
    %577 = vector.broadcast %cst_205 : f32 to vector<1x512xf32>
    %578 = arith.select %575, %576, %577 : vector<1x512xi1>, vector<1x512xf32>
    %579 = vector.extract_strided_slice %3 {offsets = [0, 19], sizes = [4, 1], strides = [1, 1]} : vector<4x25xf32> to vector<4x1xf32>
    %580 = vector.broadcast %579 : vector<4x1xf32> to vector<4x512xf32>
    %581 = vector.broadcast %578 : vector<1x512xf32> to vector<4x512xf32>
    %582 = arith.mulf %580, %581 : vector<4x512xf32>
    %583 = arith.mulf %556, %582 : vector<4x512xf32>
    %584 = arith.addf %555, %583 : vector<4x512xf32>
    %c482_i32 = arith.constant 482 : i32
    %585 = tpu.dynamic_rotate %0 by %c482_i32 dim 1 : vector<4x512xf32>, i32 -> vector<4x512xf32>
    %c2_i32_206 = arith.constant 2 : i32
    %586 = vector.broadcast %c2_i32_206 : i32 to vector<1x512xi32>
    %587 = arith.addi %1, %586 : vector<1x512xi32>
    %c0_i32_207 = arith.constant 0 : i32
    %588 = vector.broadcast %c0_i32_207 : i32 to vector<1x512xi32>
    %589 = arith.cmpi sge, %587, %588 : vector<1x512xi32>
    %c2_i32_208 = arith.constant 2 : i32
    %590 = vector.broadcast %c2_i32_208 : i32 to vector<1x512xi32>
    %591 = arith.addi %1, %590 : vector<1x512xi32>
    %c16_i32_209 = arith.constant 16 : i32
    %592 = vector.broadcast %c16_i32_209 : i32 to vector<1x512xi32>
    %593 = arith.cmpi slt, %591, %592 : vector<1x512xi32>
    %594 = arith.andi %589, %593 : vector<1x512xi1>
    %c-2_i32_210 = arith.constant -2 : i32
    %595 = vector.broadcast %c-2_i32_210 : i32 to vector<1x512xi32>
    %596 = arith.addi %2, %595 : vector<1x512xi32>
    %c0_i32_211 = arith.constant 0 : i32
    %597 = vector.broadcast %c0_i32_211 : i32 to vector<1x512xi32>
    %598 = arith.cmpi sge, %596, %597 : vector<1x512xi32>
    %599 = arith.andi %594, %598 : vector<1x512xi1>
    %c-2_i32_212 = arith.constant -2 : i32
    %600 = vector.broadcast %c-2_i32_212 : i32 to vector<1x512xi32>
    %601 = arith.addi %2, %600 : vector<1x512xi32>
    %c16_i32_213 = arith.constant 16 : i32
    %602 = vector.broadcast %c16_i32_213 : i32 to vector<1x512xi32>
    %603 = arith.cmpi slt, %601, %602 : vector<1x512xi32>
    %604 = arith.andi %599, %603 : vector<1x512xi1>
    %cst_214 = arith.constant 1.000000e+00 : f32
    %cst_215 = arith.constant 0.000000e+00 : f32
    %605 = vector.broadcast %cst_214 : f32 to vector<1x512xf32>
    %606 = vector.broadcast %cst_215 : f32 to vector<1x512xf32>
    %607 = arith.select %604, %605, %606 : vector<1x512xi1>, vector<1x512xf32>
    %608 = vector.extract_strided_slice %3 {offsets = [0, 20], sizes = [4, 1], strides = [1, 1]} : vector<4x25xf32> to vector<4x1xf32>
    %609 = vector.broadcast %608 : vector<4x1xf32> to vector<4x512xf32>
    %610 = vector.broadcast %607 : vector<1x512xf32> to vector<4x512xf32>
    %611 = arith.mulf %609, %610 : vector<4x512xf32>
    %612 = arith.mulf %585, %611 : vector<4x512xf32>
    %613 = arith.addf %584, %612 : vector<4x512xf32>
    %c481_i32 = arith.constant 481 : i32
    %614 = tpu.dynamic_rotate %0 by %c481_i32 dim 1 : vector<4x512xf32>, i32 -> vector<4x512xf32>
    %c2_i32_216 = arith.constant 2 : i32
    %615 = vector.broadcast %c2_i32_216 : i32 to vector<1x512xi32>
    %616 = arith.addi %1, %615 : vector<1x512xi32>
    %c0_i32_217 = arith.constant 0 : i32
    %617 = vector.broadcast %c0_i32_217 : i32 to vector<1x512xi32>
    %618 = arith.cmpi sge, %616, %617 : vector<1x512xi32>
    %c2_i32_218 = arith.constant 2 : i32
    %619 = vector.broadcast %c2_i32_218 : i32 to vector<1x512xi32>
    %620 = arith.addi %1, %619 : vector<1x512xi32>
    %c16_i32_219 = arith.constant 16 : i32
    %621 = vector.broadcast %c16_i32_219 : i32 to vector<1x512xi32>
    %622 = arith.cmpi slt, %620, %621 : vector<1x512xi32>
    %623 = arith.andi %618, %622 : vector<1x512xi1>
    %c-1_i32_220 = arith.constant -1 : i32
    %624 = vector.broadcast %c-1_i32_220 : i32 to vector<1x512xi32>
    %625 = arith.addi %2, %624 : vector<1x512xi32>
    %c0_i32_221 = arith.constant 0 : i32
    %626 = vector.broadcast %c0_i32_221 : i32 to vector<1x512xi32>
    %627 = arith.cmpi sge, %625, %626 : vector<1x512xi32>
    %628 = arith.andi %623, %627 : vector<1x512xi1>
    %c-1_i32_222 = arith.constant -1 : i32
    %629 = vector.broadcast %c-1_i32_222 : i32 to vector<1x512xi32>
    %630 = arith.addi %2, %629 : vector<1x512xi32>
    %c16_i32_223 = arith.constant 16 : i32
    %631 = vector.broadcast %c16_i32_223 : i32 to vector<1x512xi32>
    %632 = arith.cmpi slt, %630, %631 : vector<1x512xi32>
    %633 = arith.andi %628, %632 : vector<1x512xi1>
    %cst_224 = arith.constant 1.000000e+00 : f32
    %cst_225 = arith.constant 0.000000e+00 : f32
    %634 = vector.broadcast %cst_224 : f32 to vector<1x512xf32>
    %635 = vector.broadcast %cst_225 : f32 to vector<1x512xf32>
    %636 = arith.select %633, %634, %635 : vector<1x512xi1>, vector<1x512xf32>
    %637 = vector.extract_strided_slice %3 {offsets = [0, 21], sizes = [4, 1], strides = [1, 1]} : vector<4x25xf32> to vector<4x1xf32>
    %638 = vector.broadcast %637 : vector<4x1xf32> to vector<4x512xf32>
    %639 = vector.broadcast %636 : vector<1x512xf32> to vector<4x512xf32>
    %640 = arith.mulf %638, %639 : vector<4x512xf32>
    %641 = arith.mulf %614, %640 : vector<4x512xf32>
    %642 = arith.addf %613, %641 : vector<4x512xf32>
    %c480_i32 = arith.constant 480 : i32
    %643 = tpu.dynamic_rotate %0 by %c480_i32 dim 1 : vector<4x512xf32>, i32 -> vector<4x512xf32>
    %c2_i32_226 = arith.constant 2 : i32
    %644 = vector.broadcast %c2_i32_226 : i32 to vector<1x512xi32>
    %645 = arith.addi %1, %644 : vector<1x512xi32>
    %c0_i32_227 = arith.constant 0 : i32
    %646 = vector.broadcast %c0_i32_227 : i32 to vector<1x512xi32>
    %647 = arith.cmpi sge, %645, %646 : vector<1x512xi32>
    %c2_i32_228 = arith.constant 2 : i32
    %648 = vector.broadcast %c2_i32_228 : i32 to vector<1x512xi32>
    %649 = arith.addi %1, %648 : vector<1x512xi32>
    %c16_i32_229 = arith.constant 16 : i32
    %650 = vector.broadcast %c16_i32_229 : i32 to vector<1x512xi32>
    %651 = arith.cmpi slt, %649, %650 : vector<1x512xi32>
    %652 = arith.andi %647, %651 : vector<1x512xi1>
    %c0_i32_230 = arith.constant 0 : i32
    %653 = vector.broadcast %c0_i32_230 : i32 to vector<1x512xi32>
    %654 = arith.addi %2, %653 : vector<1x512xi32>
    %c0_i32_231 = arith.constant 0 : i32
    %655 = vector.broadcast %c0_i32_231 : i32 to vector<1x512xi32>
    %656 = arith.cmpi sge, %654, %655 : vector<1x512xi32>
    %657 = arith.andi %652, %656 : vector<1x512xi1>
    %c0_i32_232 = arith.constant 0 : i32
    %658 = vector.broadcast %c0_i32_232 : i32 to vector<1x512xi32>
    %659 = arith.addi %2, %658 : vector<1x512xi32>
    %c16_i32_233 = arith.constant 16 : i32
    %660 = vector.broadcast %c16_i32_233 : i32 to vector<1x512xi32>
    %661 = arith.cmpi slt, %659, %660 : vector<1x512xi32>
    %662 = arith.andi %657, %661 : vector<1x512xi1>
    %cst_234 = arith.constant 1.000000e+00 : f32
    %cst_235 = arith.constant 0.000000e+00 : f32
    %663 = vector.broadcast %cst_234 : f32 to vector<1x512xf32>
    %664 = vector.broadcast %cst_235 : f32 to vector<1x512xf32>
    %665 = arith.select %662, %663, %664 : vector<1x512xi1>, vector<1x512xf32>
    %666 = vector.extract_strided_slice %3 {offsets = [0, 22], sizes = [4, 1], strides = [1, 1]} : vector<4x25xf32> to vector<4x1xf32>
    %667 = vector.broadcast %666 : vector<4x1xf32> to vector<4x512xf32>
    %668 = vector.broadcast %665 : vector<1x512xf32> to vector<4x512xf32>
    %669 = arith.mulf %667, %668 : vector<4x512xf32>
    %670 = arith.mulf %643, %669 : vector<4x512xf32>
    %671 = arith.addf %642, %670 : vector<4x512xf32>
    %c479_i32 = arith.constant 479 : i32
    %672 = tpu.dynamic_rotate %0 by %c479_i32 dim 1 : vector<4x512xf32>, i32 -> vector<4x512xf32>
    %c2_i32_236 = arith.constant 2 : i32
    %673 = vector.broadcast %c2_i32_236 : i32 to vector<1x512xi32>
    %674 = arith.addi %1, %673 : vector<1x512xi32>
    %c0_i32_237 = arith.constant 0 : i32
    %675 = vector.broadcast %c0_i32_237 : i32 to vector<1x512xi32>
    %676 = arith.cmpi sge, %674, %675 : vector<1x512xi32>
    %c2_i32_238 = arith.constant 2 : i32
    %677 = vector.broadcast %c2_i32_238 : i32 to vector<1x512xi32>
    %678 = arith.addi %1, %677 : vector<1x512xi32>
    %c16_i32_239 = arith.constant 16 : i32
    %679 = vector.broadcast %c16_i32_239 : i32 to vector<1x512xi32>
    %680 = arith.cmpi slt, %678, %679 : vector<1x512xi32>
    %681 = arith.andi %676, %680 : vector<1x512xi1>
    %c1_i32_240 = arith.constant 1 : i32
    %682 = vector.broadcast %c1_i32_240 : i32 to vector<1x512xi32>
    %683 = arith.addi %2, %682 : vector<1x512xi32>
    %c0_i32_241 = arith.constant 0 : i32
    %684 = vector.broadcast %c0_i32_241 : i32 to vector<1x512xi32>
    %685 = arith.cmpi sge, %683, %684 : vector<1x512xi32>
    %686 = arith.andi %681, %685 : vector<1x512xi1>
    %c1_i32_242 = arith.constant 1 : i32
    %687 = vector.broadcast %c1_i32_242 : i32 to vector<1x512xi32>
    %688 = arith.addi %2, %687 : vector<1x512xi32>
    %c16_i32_243 = arith.constant 16 : i32
    %689 = vector.broadcast %c16_i32_243 : i32 to vector<1x512xi32>
    %690 = arith.cmpi slt, %688, %689 : vector<1x512xi32>
    %691 = arith.andi %686, %690 : vector<1x512xi1>
    %cst_244 = arith.constant 1.000000e+00 : f32
    %cst_245 = arith.constant 0.000000e+00 : f32
    %692 = vector.broadcast %cst_244 : f32 to vector<1x512xf32>
    %693 = vector.broadcast %cst_245 : f32 to vector<1x512xf32>
    %694 = arith.select %691, %692, %693 : vector<1x512xi1>, vector<1x512xf32>
    %695 = vector.extract_strided_slice %3 {offsets = [0, 23], sizes = [4, 1], strides = [1, 1]} : vector<4x25xf32> to vector<4x1xf32>
    %696 = vector.broadcast %695 : vector<4x1xf32> to vector<4x512xf32>
    %697 = vector.broadcast %694 : vector<1x512xf32> to vector<4x512xf32>
    %698 = arith.mulf %696, %697 : vector<4x512xf32>
    %699 = arith.mulf %672, %698 : vector<4x512xf32>
    %700 = arith.addf %671, %699 : vector<4x512xf32>
    %c478_i32 = arith.constant 478 : i32
    %701 = tpu.dynamic_rotate %0 by %c478_i32 dim 1 : vector<4x512xf32>, i32 -> vector<4x512xf32>
    %c2_i32_246 = arith.constant 2 : i32
    %702 = vector.broadcast %c2_i32_246 : i32 to vector<1x512xi32>
    %703 = arith.addi %1, %702 : vector<1x512xi32>
    %c0_i32_247 = arith.constant 0 : i32
    %704 = vector.broadcast %c0_i32_247 : i32 to vector<1x512xi32>
    %705 = arith.cmpi sge, %703, %704 : vector<1x512xi32>
    %c2_i32_248 = arith.constant 2 : i32
    %706 = vector.broadcast %c2_i32_248 : i32 to vector<1x512xi32>
    %707 = arith.addi %1, %706 : vector<1x512xi32>
    %c16_i32_249 = arith.constant 16 : i32
    %708 = vector.broadcast %c16_i32_249 : i32 to vector<1x512xi32>
    %709 = arith.cmpi slt, %707, %708 : vector<1x512xi32>
    %710 = arith.andi %705, %709 : vector<1x512xi1>
    %c2_i32_250 = arith.constant 2 : i32
    %711 = vector.broadcast %c2_i32_250 : i32 to vector<1x512xi32>
    %712 = arith.addi %2, %711 : vector<1x512xi32>
    %c0_i32_251 = arith.constant 0 : i32
    %713 = vector.broadcast %c0_i32_251 : i32 to vector<1x512xi32>
    %714 = arith.cmpi sge, %712, %713 : vector<1x512xi32>
    %715 = arith.andi %710, %714 : vector<1x512xi1>
    %c2_i32_252 = arith.constant 2 : i32
    %716 = vector.broadcast %c2_i32_252 : i32 to vector<1x512xi32>
    %717 = arith.addi %2, %716 : vector<1x512xi32>
    %c16_i32_253 = arith.constant 16 : i32
    %718 = vector.broadcast %c16_i32_253 : i32 to vector<1x512xi32>
    %719 = arith.cmpi slt, %717, %718 : vector<1x512xi32>
    %720 = arith.andi %715, %719 : vector<1x512xi1>
    %cst_254 = arith.constant 1.000000e+00 : f32
    %cst_255 = arith.constant 0.000000e+00 : f32
    %721 = vector.broadcast %cst_254 : f32 to vector<1x512xf32>
    %722 = vector.broadcast %cst_255 : f32 to vector<1x512xf32>
    %723 = arith.select %720, %721, %722 : vector<1x512xi1>, vector<1x512xf32>
    %724 = vector.extract_strided_slice %3 {offsets = [0, 24], sizes = [4, 1], strides = [1, 1]} : vector<4x25xf32> to vector<4x1xf32>
    %725 = vector.broadcast %724 : vector<4x1xf32> to vector<4x512xf32>
    %726 = vector.broadcast %723 : vector<1x512xf32> to vector<4x512xf32>
    %727 = arith.mulf %725, %726 : vector<4x512xf32>
    %728 = arith.mulf %701, %727 : vector<4x512xf32>
    %729 = arith.addf %700, %728 : vector<4x512xf32>
    %730 = vector.broadcast %4 : vector<4x1xf32> to vector<4x512xf32>
    %731 = arith.addf %729, %730 : vector<4x512xf32>
    %c0_256 = arith.constant 0 : index
    %c0_257 = arith.constant 0 : index
    %732 = vector.load %arg5[%c0_256, %c0_257] : memref<4x1xf32, #tpu.memory_space<vmem>>, vector<4x1xf32>
    %c0_258 = arith.constant 0 : index
    %c0_259 = arith.constant 0 : index
    %733 = vector.load %arg6[%c0_258, %c0_259] : memref<4x1xf32, #tpu.memory_space<vmem>>, vector<4x1xf32>
    %cst_260 = arith.constant dense<0.000000e+00> : vector<4xf32>
    %734 = vector.multi_reduction <add>, %731, %cst_260 [1] : vector<4x512xf32> to vector<4xf32>
    %735 = vector.shape_cast %734 : vector<4xf32> to vector<4x1xf32>
    %736 = arith.mulf %731, %731 : vector<4x512xf32>
    %cst_261 = arith.constant dense<0.000000e+00> : vector<4xf32>
    %737 = vector.multi_reduction <add>, %736, %cst_261 [1] : vector<4x512xf32> to vector<4xf32>
    %738 = vector.shape_cast %737 : vector<4xf32> to vector<4x1xf32>
    %cst_262 = arith.constant 0.001953125 : f32
    %739 = vector.broadcast %cst_262 : f32 to vector<4x1xf32>
    %740 = arith.mulf %735, %739 : vector<4x1xf32>
    %cst_263 = arith.constant 0.001953125 : f32
    %741 = vector.broadcast %cst_263 : f32 to vector<4x1xf32>
    %742 = arith.mulf %738, %741 : vector<4x1xf32>
    %743 = arith.mulf %740, %740 : vector<4x1xf32>
    %744 = arith.subf %742, %743 : vector<4x1xf32>
    %cst_264 = arith.constant 9.99999974E-6 : f32
    %745 = vector.broadcast %cst_264 : f32 to vector<4x1xf32>
    %746 = arith.addf %744, %745 : vector<4x1xf32>
    %747 = math.rsqrt %746 : vector<4x1xf32>
    %748 = arith.mulf %732, %747 : vector<4x1xf32>
    %749 = vector.broadcast %748 : vector<4x1xf32> to vector<4x512xf32>
    %750 = arith.mulf %731, %749 : vector<4x512xf32>
    %751 = arith.mulf %740, %748 : vector<4x1xf32>
    %752 = arith.subf %733, %751 : vector<4x1xf32>
    %753 = vector.broadcast %752 : vector<4x1xf32> to vector<4x512xf32>
    %754 = arith.addf %750, %753 : vector<4x512xf32>
    %c0_265 = arith.constant 0 : index
    %c0_266 = arith.constant 0 : index
    %755 = vector.load %arg7[%c0_265, %c0_266] : memref<8x4xf32, #tpu.memory_space<vmem>>, vector<8x4xf32>
    %c0_267 = arith.constant 0 : index
    %c0_268 = arith.constant 0 : index
    %756 = vector.load %arg8[%c0_267, %c0_268] : memref<8x1xf32, #tpu.memory_space<vmem>>, vector<8x1xf32>
    %cst_269 = arith.constant 0.000000e+00 : f32
    %757 = vector.broadcast %cst_269 : f32 to vector<8x512xf32>
    %758 = vector.extract_strided_slice %754 {offsets = [0, 0], sizes = [1, 512], strides = [1, 1]} : vector<4x512xf32> to vector<1x512xf32>
    %759 = vector.extract_strided_slice %755 {offsets = [0, 0], sizes = [8, 1], strides = [1, 1]} : vector<8x4xf32> to vector<8x1xf32>
    %760 = vector.broadcast %758 : vector<1x512xf32> to vector<8x512xf32>
    %761 = vector.broadcast %759 : vector<8x1xf32> to vector<8x512xf32>
    %762 = arith.mulf %760, %761 : vector<8x512xf32>
    %763 = arith.addf %757, %762 : vector<8x512xf32>
    %764 = vector.extract_strided_slice %754 {offsets = [1, 0], sizes = [1, 512], strides = [1, 1]} : vector<4x512xf32> to vector<1x512xf32>
    %765 = vector.extract_strided_slice %755 {offsets = [0, 1], sizes = [8, 1], strides = [1, 1]} : vector<8x4xf32> to vector<8x1xf32>
    %766 = vector.broadcast %764 : vector<1x512xf32> to vector<8x512xf32>
    %767 = vector.broadcast %765 : vector<8x1xf32> to vector<8x512xf32>
    %768 = arith.mulf %766, %767 : vector<8x512xf32>
    %769 = arith.addf %763, %768 : vector<8x512xf32>
    %770 = vector.extract_strided_slice %754 {offsets = [2, 0], sizes = [1, 512], strides = [1, 1]} : vector<4x512xf32> to vector<1x512xf32>
    %771 = vector.extract_strided_slice %755 {offsets = [0, 2], sizes = [8, 1], strides = [1, 1]} : vector<8x4xf32> to vector<8x1xf32>
    %772 = vector.broadcast %770 : vector<1x512xf32> to vector<8x512xf32>
    %773 = vector.broadcast %771 : vector<8x1xf32> to vector<8x512xf32>
    %774 = arith.mulf %772, %773 : vector<8x512xf32>
    %775 = arith.addf %769, %774 : vector<8x512xf32>
    %776 = vector.extract_strided_slice %754 {offsets = [3, 0], sizes = [1, 512], strides = [1, 1]} : vector<4x512xf32> to vector<1x512xf32>
    %777 = vector.extract_strided_slice %755 {offsets = [0, 3], sizes = [8, 1], strides = [1, 1]} : vector<8x4xf32> to vector<8x1xf32>
    %778 = vector.broadcast %776 : vector<1x512xf32> to vector<8x512xf32>
    %779 = vector.broadcast %777 : vector<8x1xf32> to vector<8x512xf32>
    %780 = arith.mulf %778, %779 : vector<8x512xf32>
    %781 = arith.addf %775, %780 : vector<8x512xf32>
    %782 = vector.broadcast %756 : vector<8x1xf32> to vector<8x512xf32>
    %783 = arith.addf %781, %782 : vector<8x512xf32>
    %c0_270 = arith.constant 0 : index
    %c0_271 = arith.constant 0 : index
    %784 = vector.load %arg9[%c0_270, %c0_271] : memref<8x1xf32, #tpu.memory_space<vmem>>, vector<8x1xf32>
    %c0_272 = arith.constant 0 : index
    %c0_273 = arith.constant 0 : index
    %785 = vector.load %arg10[%c0_272, %c0_273] : memref<8x1xf32, #tpu.memory_space<vmem>>, vector<8x1xf32>
    %cst_274 = arith.constant dense<0.000000e+00> : vector<8xf32>
    %786 = vector.multi_reduction <add>, %783, %cst_274 [1] : vector<8x512xf32> to vector<8xf32>
    %787 = vector.shape_cast %786 : vector<8xf32> to vector<8x1xf32>
    %788 = arith.mulf %783, %783 : vector<8x512xf32>
    %cst_275 = arith.constant dense<0.000000e+00> : vector<8xf32>
    %789 = vector.multi_reduction <add>, %788, %cst_275 [1] : vector<8x512xf32> to vector<8xf32>
    %790 = vector.shape_cast %789 : vector<8xf32> to vector<8x1xf32>
    %cst_276 = arith.constant 0.001953125 : f32
    %791 = vector.broadcast %cst_276 : f32 to vector<8x1xf32>
    %792 = arith.mulf %787, %791 : vector<8x1xf32>
    %cst_277 = arith.constant 0.001953125 : f32
    %793 = vector.broadcast %cst_277 : f32 to vector<8x1xf32>
    %794 = arith.mulf %790, %793 : vector<8x1xf32>
    %795 = arith.mulf %792, %792 : vector<8x1xf32>
    %796 = arith.subf %794, %795 : vector<8x1xf32>
    %cst_278 = arith.constant 9.99999974E-6 : f32
    %797 = vector.broadcast %cst_278 : f32 to vector<8x1xf32>
    %798 = arith.addf %796, %797 : vector<8x1xf32>
    %799 = math.rsqrt %798 : vector<8x1xf32>
    %800 = arith.mulf %784, %799 : vector<8x1xf32>
    %801 = vector.broadcast %800 : vector<8x1xf32> to vector<8x512xf32>
    %802 = arith.mulf %783, %801 : vector<8x512xf32>
    %803 = arith.mulf %792, %800 : vector<8x1xf32>
    %804 = arith.subf %785, %803 : vector<8x1xf32>
    %805 = vector.broadcast %804 : vector<8x1xf32> to vector<8x512xf32>
    %806 = arith.addf %802, %805 : vector<8x512xf32>
    %cst_279 = arith.constant 0.000000e+00 : f32
    %807 = vector.broadcast %cst_279 : f32 to vector<8x512xf32>
    %808 = arith.maximumf %806, %807 : vector<8x512xf32>
    %c0_280 = arith.constant 0 : index
    %c0_281 = arith.constant 0 : index
    %809 = vector.load %arg11[%c0_280, %c0_281] : memref<8x25xf32, #tpu.memory_space<vmem>>, vector<8x25xf32>
    %c0_282 = arith.constant 0 : index
    %c0_283 = arith.constant 0 : index
    %810 = vector.load %arg12[%c0_282, %c0_283] : memref<8x1xf32, #tpu.memory_space<vmem>>, vector<8x1xf32>
    %cst_284 = arith.constant 0.000000e+00 : f32
    %811 = vector.broadcast %cst_284 : f32 to vector<8x512xf32>
    %c34_i32_285 = arith.constant 34 : i32
    %812 = tpu.dynamic_rotate %808 by %c34_i32_285 dim 1 : vector<8x512xf32>, i32 -> vector<8x512xf32>
    %c-2_i32_286 = arith.constant -2 : i32
    %813 = vector.broadcast %c-2_i32_286 : i32 to vector<1x512xi32>
    %814 = arith.addi %1, %813 : vector<1x512xi32>
    %c0_i32_287 = arith.constant 0 : i32
    %815 = vector.broadcast %c0_i32_287 : i32 to vector<1x512xi32>
    %816 = arith.cmpi sge, %814, %815 : vector<1x512xi32>
    %c-2_i32_288 = arith.constant -2 : i32
    %817 = vector.broadcast %c-2_i32_288 : i32 to vector<1x512xi32>
    %818 = arith.addi %1, %817 : vector<1x512xi32>
    %c16_i32_289 = arith.constant 16 : i32
    %819 = vector.broadcast %c16_i32_289 : i32 to vector<1x512xi32>
    %820 = arith.cmpi slt, %818, %819 : vector<1x512xi32>
    %821 = arith.andi %816, %820 : vector<1x512xi1>
    %c-2_i32_290 = arith.constant -2 : i32
    %822 = vector.broadcast %c-2_i32_290 : i32 to vector<1x512xi32>
    %823 = arith.addi %2, %822 : vector<1x512xi32>
    %c0_i32_291 = arith.constant 0 : i32
    %824 = vector.broadcast %c0_i32_291 : i32 to vector<1x512xi32>
    %825 = arith.cmpi sge, %823, %824 : vector<1x512xi32>
    %826 = arith.andi %821, %825 : vector<1x512xi1>
    %c-2_i32_292 = arith.constant -2 : i32
    %827 = vector.broadcast %c-2_i32_292 : i32 to vector<1x512xi32>
    %828 = arith.addi %2, %827 : vector<1x512xi32>
    %c16_i32_293 = arith.constant 16 : i32
    %829 = vector.broadcast %c16_i32_293 : i32 to vector<1x512xi32>
    %830 = arith.cmpi slt, %828, %829 : vector<1x512xi32>
    %831 = arith.andi %826, %830 : vector<1x512xi1>
    %cst_294 = arith.constant 1.000000e+00 : f32
    %cst_295 = arith.constant 0.000000e+00 : f32
    %832 = vector.broadcast %cst_294 : f32 to vector<1x512xf32>
    %833 = vector.broadcast %cst_295 : f32 to vector<1x512xf32>
    %834 = arith.select %831, %832, %833 : vector<1x512xi1>, vector<1x512xf32>
    %835 = vector.extract_strided_slice %809 {offsets = [0, 0], sizes = [8, 1], strides = [1, 1]} : vector<8x25xf32> to vector<8x1xf32>
    %836 = vector.broadcast %835 : vector<8x1xf32> to vector<8x512xf32>
    %837 = vector.broadcast %834 : vector<1x512xf32> to vector<8x512xf32>
    %838 = arith.mulf %836, %837 : vector<8x512xf32>
    %839 = arith.mulf %812, %838 : vector<8x512xf32>
    %840 = arith.addf %811, %839 : vector<8x512xf32>
    %c33_i32_296 = arith.constant 33 : i32
    %841 = tpu.dynamic_rotate %808 by %c33_i32_296 dim 1 : vector<8x512xf32>, i32 -> vector<8x512xf32>
    %c-2_i32_297 = arith.constant -2 : i32
    %842 = vector.broadcast %c-2_i32_297 : i32 to vector<1x512xi32>
    %843 = arith.addi %1, %842 : vector<1x512xi32>
    %c0_i32_298 = arith.constant 0 : i32
    %844 = vector.broadcast %c0_i32_298 : i32 to vector<1x512xi32>
    %845 = arith.cmpi sge, %843, %844 : vector<1x512xi32>
    %c-2_i32_299 = arith.constant -2 : i32
    %846 = vector.broadcast %c-2_i32_299 : i32 to vector<1x512xi32>
    %847 = arith.addi %1, %846 : vector<1x512xi32>
    %c16_i32_300 = arith.constant 16 : i32
    %848 = vector.broadcast %c16_i32_300 : i32 to vector<1x512xi32>
    %849 = arith.cmpi slt, %847, %848 : vector<1x512xi32>
    %850 = arith.andi %845, %849 : vector<1x512xi1>
    %c-1_i32_301 = arith.constant -1 : i32
    %851 = vector.broadcast %c-1_i32_301 : i32 to vector<1x512xi32>
    %852 = arith.addi %2, %851 : vector<1x512xi32>
    %c0_i32_302 = arith.constant 0 : i32
    %853 = vector.broadcast %c0_i32_302 : i32 to vector<1x512xi32>
    %854 = arith.cmpi sge, %852, %853 : vector<1x512xi32>
    %855 = arith.andi %850, %854 : vector<1x512xi1>
    %c-1_i32_303 = arith.constant -1 : i32
    %856 = vector.broadcast %c-1_i32_303 : i32 to vector<1x512xi32>
    %857 = arith.addi %2, %856 : vector<1x512xi32>
    %c16_i32_304 = arith.constant 16 : i32
    %858 = vector.broadcast %c16_i32_304 : i32 to vector<1x512xi32>
    %859 = arith.cmpi slt, %857, %858 : vector<1x512xi32>
    %860 = arith.andi %855, %859 : vector<1x512xi1>
    %cst_305 = arith.constant 1.000000e+00 : f32
    %cst_306 = arith.constant 0.000000e+00 : f32
    %861 = vector.broadcast %cst_305 : f32 to vector<1x512xf32>
    %862 = vector.broadcast %cst_306 : f32 to vector<1x512xf32>
    %863 = arith.select %860, %861, %862 : vector<1x512xi1>, vector<1x512xf32>
    %864 = vector.extract_strided_slice %809 {offsets = [0, 1], sizes = [8, 1], strides = [1, 1]} : vector<8x25xf32> to vector<8x1xf32>
    %865 = vector.broadcast %864 : vector<8x1xf32> to vector<8x512xf32>
    %866 = vector.broadcast %863 : vector<1x512xf32> to vector<8x512xf32>
    %867 = arith.mulf %865, %866 : vector<8x512xf32>
    %868 = arith.mulf %841, %867 : vector<8x512xf32>
    %869 = arith.addf %840, %868 : vector<8x512xf32>
    %c32_i32_307 = arith.constant 32 : i32
    %870 = tpu.dynamic_rotate %808 by %c32_i32_307 dim 1 : vector<8x512xf32>, i32 -> vector<8x512xf32>
    %c-2_i32_308 = arith.constant -2 : i32
    %871 = vector.broadcast %c-2_i32_308 : i32 to vector<1x512xi32>
    %872 = arith.addi %1, %871 : vector<1x512xi32>
    %c0_i32_309 = arith.constant 0 : i32
    %873 = vector.broadcast %c0_i32_309 : i32 to vector<1x512xi32>
    %874 = arith.cmpi sge, %872, %873 : vector<1x512xi32>
    %c-2_i32_310 = arith.constant -2 : i32
    %875 = vector.broadcast %c-2_i32_310 : i32 to vector<1x512xi32>
    %876 = arith.addi %1, %875 : vector<1x512xi32>
    %c16_i32_311 = arith.constant 16 : i32
    %877 = vector.broadcast %c16_i32_311 : i32 to vector<1x512xi32>
    %878 = arith.cmpi slt, %876, %877 : vector<1x512xi32>
    %879 = arith.andi %874, %878 : vector<1x512xi1>
    %c0_i32_312 = arith.constant 0 : i32
    %880 = vector.broadcast %c0_i32_312 : i32 to vector<1x512xi32>
    %881 = arith.addi %2, %880 : vector<1x512xi32>
    %c0_i32_313 = arith.constant 0 : i32
    %882 = vector.broadcast %c0_i32_313 : i32 to vector<1x512xi32>
    %883 = arith.cmpi sge, %881, %882 : vector<1x512xi32>
    %884 = arith.andi %879, %883 : vector<1x512xi1>
    %c0_i32_314 = arith.constant 0 : i32
    %885 = vector.broadcast %c0_i32_314 : i32 to vector<1x512xi32>
    %886 = arith.addi %2, %885 : vector<1x512xi32>
    %c16_i32_315 = arith.constant 16 : i32
    %887 = vector.broadcast %c16_i32_315 : i32 to vector<1x512xi32>
    %888 = arith.cmpi slt, %886, %887 : vector<1x512xi32>
    %889 = arith.andi %884, %888 : vector<1x512xi1>
    %cst_316 = arith.constant 1.000000e+00 : f32
    %cst_317 = arith.constant 0.000000e+00 : f32
    %890 = vector.broadcast %cst_316 : f32 to vector<1x512xf32>
    %891 = vector.broadcast %cst_317 : f32 to vector<1x512xf32>
    %892 = arith.select %889, %890, %891 : vector<1x512xi1>, vector<1x512xf32>
    %893 = vector.extract_strided_slice %809 {offsets = [0, 2], sizes = [8, 1], strides = [1, 1]} : vector<8x25xf32> to vector<8x1xf32>
    %894 = vector.broadcast %893 : vector<8x1xf32> to vector<8x512xf32>
    %895 = vector.broadcast %892 : vector<1x512xf32> to vector<8x512xf32>
    %896 = arith.mulf %894, %895 : vector<8x512xf32>
    %897 = arith.mulf %870, %896 : vector<8x512xf32>
    %898 = arith.addf %869, %897 : vector<8x512xf32>
    %c31_i32_318 = arith.constant 31 : i32
    %899 = tpu.dynamic_rotate %808 by %c31_i32_318 dim 1 : vector<8x512xf32>, i32 -> vector<8x512xf32>
    %c-2_i32_319 = arith.constant -2 : i32
    %900 = vector.broadcast %c-2_i32_319 : i32 to vector<1x512xi32>
    %901 = arith.addi %1, %900 : vector<1x512xi32>
    %c0_i32_320 = arith.constant 0 : i32
    %902 = vector.broadcast %c0_i32_320 : i32 to vector<1x512xi32>
    %903 = arith.cmpi sge, %901, %902 : vector<1x512xi32>
    %c-2_i32_321 = arith.constant -2 : i32
    %904 = vector.broadcast %c-2_i32_321 : i32 to vector<1x512xi32>
    %905 = arith.addi %1, %904 : vector<1x512xi32>
    %c16_i32_322 = arith.constant 16 : i32
    %906 = vector.broadcast %c16_i32_322 : i32 to vector<1x512xi32>
    %907 = arith.cmpi slt, %905, %906 : vector<1x512xi32>
    %908 = arith.andi %903, %907 : vector<1x512xi1>
    %c1_i32_323 = arith.constant 1 : i32
    %909 = vector.broadcast %c1_i32_323 : i32 to vector<1x512xi32>
    %910 = arith.addi %2, %909 : vector<1x512xi32>
    %c0_i32_324 = arith.constant 0 : i32
    %911 = vector.broadcast %c0_i32_324 : i32 to vector<1x512xi32>
    %912 = arith.cmpi sge, %910, %911 : vector<1x512xi32>
    %913 = arith.andi %908, %912 : vector<1x512xi1>
    %c1_i32_325 = arith.constant 1 : i32
    %914 = vector.broadcast %c1_i32_325 : i32 to vector<1x512xi32>
    %915 = arith.addi %2, %914 : vector<1x512xi32>
    %c16_i32_326 = arith.constant 16 : i32
    %916 = vector.broadcast %c16_i32_326 : i32 to vector<1x512xi32>
    %917 = arith.cmpi slt, %915, %916 : vector<1x512xi32>
    %918 = arith.andi %913, %917 : vector<1x512xi1>
    %cst_327 = arith.constant 1.000000e+00 : f32
    %cst_328 = arith.constant 0.000000e+00 : f32
    %919 = vector.broadcast %cst_327 : f32 to vector<1x512xf32>
    %920 = vector.broadcast %cst_328 : f32 to vector<1x512xf32>
    %921 = arith.select %918, %919, %920 : vector<1x512xi1>, vector<1x512xf32>
    %922 = vector.extract_strided_slice %809 {offsets = [0, 3], sizes = [8, 1], strides = [1, 1]} : vector<8x25xf32> to vector<8x1xf32>
    %923 = vector.broadcast %922 : vector<8x1xf32> to vector<8x512xf32>
    %924 = vector.broadcast %921 : vector<1x512xf32> to vector<8x512xf32>
    %925 = arith.mulf %923, %924 : vector<8x512xf32>
    %926 = arith.mulf %899, %925 : vector<8x512xf32>
    %927 = arith.addf %898, %926 : vector<8x512xf32>
    %c30_i32_329 = arith.constant 30 : i32
    %928 = tpu.dynamic_rotate %808 by %c30_i32_329 dim 1 : vector<8x512xf32>, i32 -> vector<8x512xf32>
    %c-2_i32_330 = arith.constant -2 : i32
    %929 = vector.broadcast %c-2_i32_330 : i32 to vector<1x512xi32>
    %930 = arith.addi %1, %929 : vector<1x512xi32>
    %c0_i32_331 = arith.constant 0 : i32
    %931 = vector.broadcast %c0_i32_331 : i32 to vector<1x512xi32>
    %932 = arith.cmpi sge, %930, %931 : vector<1x512xi32>
    %c-2_i32_332 = arith.constant -2 : i32
    %933 = vector.broadcast %c-2_i32_332 : i32 to vector<1x512xi32>
    %934 = arith.addi %1, %933 : vector<1x512xi32>
    %c16_i32_333 = arith.constant 16 : i32
    %935 = vector.broadcast %c16_i32_333 : i32 to vector<1x512xi32>
    %936 = arith.cmpi slt, %934, %935 : vector<1x512xi32>
    %937 = arith.andi %932, %936 : vector<1x512xi1>
    %c2_i32_334 = arith.constant 2 : i32
    %938 = vector.broadcast %c2_i32_334 : i32 to vector<1x512xi32>
    %939 = arith.addi %2, %938 : vector<1x512xi32>
    %c0_i32_335 = arith.constant 0 : i32
    %940 = vector.broadcast %c0_i32_335 : i32 to vector<1x512xi32>
    %941 = arith.cmpi sge, %939, %940 : vector<1x512xi32>
    %942 = arith.andi %937, %941 : vector<1x512xi1>
    %c2_i32_336 = arith.constant 2 : i32
    %943 = vector.broadcast %c2_i32_336 : i32 to vector<1x512xi32>
    %944 = arith.addi %2, %943 : vector<1x512xi32>
    %c16_i32_337 = arith.constant 16 : i32
    %945 = vector.broadcast %c16_i32_337 : i32 to vector<1x512xi32>
    %946 = arith.cmpi slt, %944, %945 : vector<1x512xi32>
    %947 = arith.andi %942, %946 : vector<1x512xi1>
    %cst_338 = arith.constant 1.000000e+00 : f32
    %cst_339 = arith.constant 0.000000e+00 : f32
    %948 = vector.broadcast %cst_338 : f32 to vector<1x512xf32>
    %949 = vector.broadcast %cst_339 : f32 to vector<1x512xf32>
    %950 = arith.select %947, %948, %949 : vector<1x512xi1>, vector<1x512xf32>
    %951 = vector.extract_strided_slice %809 {offsets = [0, 4], sizes = [8, 1], strides = [1, 1]} : vector<8x25xf32> to vector<8x1xf32>
    %952 = vector.broadcast %951 : vector<8x1xf32> to vector<8x512xf32>
    %953 = vector.broadcast %950 : vector<1x512xf32> to vector<8x512xf32>
    %954 = arith.mulf %952, %953 : vector<8x512xf32>
    %955 = arith.mulf %928, %954 : vector<8x512xf32>
    %956 = arith.addf %927, %955 : vector<8x512xf32>
    %c18_i32_340 = arith.constant 18 : i32
    %957 = tpu.dynamic_rotate %808 by %c18_i32_340 dim 1 : vector<8x512xf32>, i32 -> vector<8x512xf32>
    %c-1_i32_341 = arith.constant -1 : i32
    %958 = vector.broadcast %c-1_i32_341 : i32 to vector<1x512xi32>
    %959 = arith.addi %1, %958 : vector<1x512xi32>
    %c0_i32_342 = arith.constant 0 : i32
    %960 = vector.broadcast %c0_i32_342 : i32 to vector<1x512xi32>
    %961 = arith.cmpi sge, %959, %960 : vector<1x512xi32>
    %c-1_i32_343 = arith.constant -1 : i32
    %962 = vector.broadcast %c-1_i32_343 : i32 to vector<1x512xi32>
    %963 = arith.addi %1, %962 : vector<1x512xi32>
    %c16_i32_344 = arith.constant 16 : i32
    %964 = vector.broadcast %c16_i32_344 : i32 to vector<1x512xi32>
    %965 = arith.cmpi slt, %963, %964 : vector<1x512xi32>
    %966 = arith.andi %961, %965 : vector<1x512xi1>
    %c-2_i32_345 = arith.constant -2 : i32
    %967 = vector.broadcast %c-2_i32_345 : i32 to vector<1x512xi32>
    %968 = arith.addi %2, %967 : vector<1x512xi32>
    %c0_i32_346 = arith.constant 0 : i32
    %969 = vector.broadcast %c0_i32_346 : i32 to vector<1x512xi32>
    %970 = arith.cmpi sge, %968, %969 : vector<1x512xi32>
    %971 = arith.andi %966, %970 : vector<1x512xi1>
    %c-2_i32_347 = arith.constant -2 : i32
    %972 = vector.broadcast %c-2_i32_347 : i32 to vector<1x512xi32>
    %973 = arith.addi %2, %972 : vector<1x512xi32>
    %c16_i32_348 = arith.constant 16 : i32
    %974 = vector.broadcast %c16_i32_348 : i32 to vector<1x512xi32>
    %975 = arith.cmpi slt, %973, %974 : vector<1x512xi32>
    %976 = arith.andi %971, %975 : vector<1x512xi1>
    %cst_349 = arith.constant 1.000000e+00 : f32
    %cst_350 = arith.constant 0.000000e+00 : f32
    %977 = vector.broadcast %cst_349 : f32 to vector<1x512xf32>
    %978 = vector.broadcast %cst_350 : f32 to vector<1x512xf32>
    %979 = arith.select %976, %977, %978 : vector<1x512xi1>, vector<1x512xf32>
    %980 = vector.extract_strided_slice %809 {offsets = [0, 5], sizes = [8, 1], strides = [1, 1]} : vector<8x25xf32> to vector<8x1xf32>
    %981 = vector.broadcast %980 : vector<8x1xf32> to vector<8x512xf32>
    %982 = vector.broadcast %979 : vector<1x512xf32> to vector<8x512xf32>
    %983 = arith.mulf %981, %982 : vector<8x512xf32>
    %984 = arith.mulf %957, %983 : vector<8x512xf32>
    %985 = arith.addf %956, %984 : vector<8x512xf32>
    %c17_i32_351 = arith.constant 17 : i32
    %986 = tpu.dynamic_rotate %808 by %c17_i32_351 dim 1 : vector<8x512xf32>, i32 -> vector<8x512xf32>
    %c-1_i32_352 = arith.constant -1 : i32
    %987 = vector.broadcast %c-1_i32_352 : i32 to vector<1x512xi32>
    %988 = arith.addi %1, %987 : vector<1x512xi32>
    %c0_i32_353 = arith.constant 0 : i32
    %989 = vector.broadcast %c0_i32_353 : i32 to vector<1x512xi32>
    %990 = arith.cmpi sge, %988, %989 : vector<1x512xi32>
    %c-1_i32_354 = arith.constant -1 : i32
    %991 = vector.broadcast %c-1_i32_354 : i32 to vector<1x512xi32>
    %992 = arith.addi %1, %991 : vector<1x512xi32>
    %c16_i32_355 = arith.constant 16 : i32
    %993 = vector.broadcast %c16_i32_355 : i32 to vector<1x512xi32>
    %994 = arith.cmpi slt, %992, %993 : vector<1x512xi32>
    %995 = arith.andi %990, %994 : vector<1x512xi1>
    %c-1_i32_356 = arith.constant -1 : i32
    %996 = vector.broadcast %c-1_i32_356 : i32 to vector<1x512xi32>
    %997 = arith.addi %2, %996 : vector<1x512xi32>
    %c0_i32_357 = arith.constant 0 : i32
    %998 = vector.broadcast %c0_i32_357 : i32 to vector<1x512xi32>
    %999 = arith.cmpi sge, %997, %998 : vector<1x512xi32>
    %1000 = arith.andi %995, %999 : vector<1x512xi1>
    %c-1_i32_358 = arith.constant -1 : i32
    %1001 = vector.broadcast %c-1_i32_358 : i32 to vector<1x512xi32>
    %1002 = arith.addi %2, %1001 : vector<1x512xi32>
    %c16_i32_359 = arith.constant 16 : i32
    %1003 = vector.broadcast %c16_i32_359 : i32 to vector<1x512xi32>
    %1004 = arith.cmpi slt, %1002, %1003 : vector<1x512xi32>
    %1005 = arith.andi %1000, %1004 : vector<1x512xi1>
    %cst_360 = arith.constant 1.000000e+00 : f32
    %cst_361 = arith.constant 0.000000e+00 : f32
    %1006 = vector.broadcast %cst_360 : f32 to vector<1x512xf32>
    %1007 = vector.broadcast %cst_361 : f32 to vector<1x512xf32>
    %1008 = arith.select %1005, %1006, %1007 : vector<1x512xi1>, vector<1x512xf32>
    %1009 = vector.extract_strided_slice %809 {offsets = [0, 6], sizes = [8, 1], strides = [1, 1]} : vector<8x25xf32> to vector<8x1xf32>
    %1010 = vector.broadcast %1009 : vector<8x1xf32> to vector<8x512xf32>
    %1011 = vector.broadcast %1008 : vector<1x512xf32> to vector<8x512xf32>
    %1012 = arith.mulf %1010, %1011 : vector<8x512xf32>
    %1013 = arith.mulf %986, %1012 : vector<8x512xf32>
    %1014 = arith.addf %985, %1013 : vector<8x512xf32>
    %c16_i32_362 = arith.constant 16 : i32
    %1015 = tpu.dynamic_rotate %808 by %c16_i32_362 dim 1 : vector<8x512xf32>, i32 -> vector<8x512xf32>
    %c-1_i32_363 = arith.constant -1 : i32
    %1016 = vector.broadcast %c-1_i32_363 : i32 to vector<1x512xi32>
    %1017 = arith.addi %1, %1016 : vector<1x512xi32>
    %c0_i32_364 = arith.constant 0 : i32
    %1018 = vector.broadcast %c0_i32_364 : i32 to vector<1x512xi32>
    %1019 = arith.cmpi sge, %1017, %1018 : vector<1x512xi32>
    %c-1_i32_365 = arith.constant -1 : i32
    %1020 = vector.broadcast %c-1_i32_365 : i32 to vector<1x512xi32>
    %1021 = arith.addi %1, %1020 : vector<1x512xi32>
    %c16_i32_366 = arith.constant 16 : i32
    %1022 = vector.broadcast %c16_i32_366 : i32 to vector<1x512xi32>
    %1023 = arith.cmpi slt, %1021, %1022 : vector<1x512xi32>
    %1024 = arith.andi %1019, %1023 : vector<1x512xi1>
    %c0_i32_367 = arith.constant 0 : i32
    %1025 = vector.broadcast %c0_i32_367 : i32 to vector<1x512xi32>
    %1026 = arith.addi %2, %1025 : vector<1x512xi32>
    %c0_i32_368 = arith.constant 0 : i32
    %1027 = vector.broadcast %c0_i32_368 : i32 to vector<1x512xi32>
    %1028 = arith.cmpi sge, %1026, %1027 : vector<1x512xi32>
    %1029 = arith.andi %1024, %1028 : vector<1x512xi1>
    %c0_i32_369 = arith.constant 0 : i32
    %1030 = vector.broadcast %c0_i32_369 : i32 to vector<1x512xi32>
    %1031 = arith.addi %2, %1030 : vector<1x512xi32>
    %c16_i32_370 = arith.constant 16 : i32
    %1032 = vector.broadcast %c16_i32_370 : i32 to vector<1x512xi32>
    %1033 = arith.cmpi slt, %1031, %1032 : vector<1x512xi32>
    %1034 = arith.andi %1029, %1033 : vector<1x512xi1>
    %cst_371 = arith.constant 1.000000e+00 : f32
    %cst_372 = arith.constant 0.000000e+00 : f32
    %1035 = vector.broadcast %cst_371 : f32 to vector<1x512xf32>
    %1036 = vector.broadcast %cst_372 : f32 to vector<1x512xf32>
    %1037 = arith.select %1034, %1035, %1036 : vector<1x512xi1>, vector<1x512xf32>
    %1038 = vector.extract_strided_slice %809 {offsets = [0, 7], sizes = [8, 1], strides = [1, 1]} : vector<8x25xf32> to vector<8x1xf32>
    %1039 = vector.broadcast %1038 : vector<8x1xf32> to vector<8x512xf32>
    %1040 = vector.broadcast %1037 : vector<1x512xf32> to vector<8x512xf32>
    %1041 = arith.mulf %1039, %1040 : vector<8x512xf32>
    %1042 = arith.mulf %1015, %1041 : vector<8x512xf32>
    %1043 = arith.addf %1014, %1042 : vector<8x512xf32>
    %c15_i32_373 = arith.constant 15 : i32
    %1044 = tpu.dynamic_rotate %808 by %c15_i32_373 dim 1 : vector<8x512xf32>, i32 -> vector<8x512xf32>
    %c-1_i32_374 = arith.constant -1 : i32
    %1045 = vector.broadcast %c-1_i32_374 : i32 to vector<1x512xi32>
    %1046 = arith.addi %1, %1045 : vector<1x512xi32>
    %c0_i32_375 = arith.constant 0 : i32
    %1047 = vector.broadcast %c0_i32_375 : i32 to vector<1x512xi32>
    %1048 = arith.cmpi sge, %1046, %1047 : vector<1x512xi32>
    %c-1_i32_376 = arith.constant -1 : i32
    %1049 = vector.broadcast %c-1_i32_376 : i32 to vector<1x512xi32>
    %1050 = arith.addi %1, %1049 : vector<1x512xi32>
    %c16_i32_377 = arith.constant 16 : i32
    %1051 = vector.broadcast %c16_i32_377 : i32 to vector<1x512xi32>
    %1052 = arith.cmpi slt, %1050, %1051 : vector<1x512xi32>
    %1053 = arith.andi %1048, %1052 : vector<1x512xi1>
    %c1_i32_378 = arith.constant 1 : i32
    %1054 = vector.broadcast %c1_i32_378 : i32 to vector<1x512xi32>
    %1055 = arith.addi %2, %1054 : vector<1x512xi32>
    %c0_i32_379 = arith.constant 0 : i32
    %1056 = vector.broadcast %c0_i32_379 : i32 to vector<1x512xi32>
    %1057 = arith.cmpi sge, %1055, %1056 : vector<1x512xi32>
    %1058 = arith.andi %1053, %1057 : vector<1x512xi1>
    %c1_i32_380 = arith.constant 1 : i32
    %1059 = vector.broadcast %c1_i32_380 : i32 to vector<1x512xi32>
    %1060 = arith.addi %2, %1059 : vector<1x512xi32>
    %c16_i32_381 = arith.constant 16 : i32
    %1061 = vector.broadcast %c16_i32_381 : i32 to vector<1x512xi32>
    %1062 = arith.cmpi slt, %1060, %1061 : vector<1x512xi32>
    %1063 = arith.andi %1058, %1062 : vector<1x512xi1>
    %cst_382 = arith.constant 1.000000e+00 : f32
    %cst_383 = arith.constant 0.000000e+00 : f32
    %1064 = vector.broadcast %cst_382 : f32 to vector<1x512xf32>
    %1065 = vector.broadcast %cst_383 : f32 to vector<1x512xf32>
    %1066 = arith.select %1063, %1064, %1065 : vector<1x512xi1>, vector<1x512xf32>
    %1067 = vector.extract_strided_slice %809 {offsets = [0, 8], sizes = [8, 1], strides = [1, 1]} : vector<8x25xf32> to vector<8x1xf32>
    %1068 = vector.broadcast %1067 : vector<8x1xf32> to vector<8x512xf32>
    %1069 = vector.broadcast %1066 : vector<1x512xf32> to vector<8x512xf32>
    %1070 = arith.mulf %1068, %1069 : vector<8x512xf32>
    %1071 = arith.mulf %1044, %1070 : vector<8x512xf32>
    %1072 = arith.addf %1043, %1071 : vector<8x512xf32>
    %c14_i32_384 = arith.constant 14 : i32
    %1073 = tpu.dynamic_rotate %808 by %c14_i32_384 dim 1 : vector<8x512xf32>, i32 -> vector<8x512xf32>
    %c-1_i32_385 = arith.constant -1 : i32
    %1074 = vector.broadcast %c-1_i32_385 : i32 to vector<1x512xi32>
    %1075 = arith.addi %1, %1074 : vector<1x512xi32>
    %c0_i32_386 = arith.constant 0 : i32
    %1076 = vector.broadcast %c0_i32_386 : i32 to vector<1x512xi32>
    %1077 = arith.cmpi sge, %1075, %1076 : vector<1x512xi32>
    %c-1_i32_387 = arith.constant -1 : i32
    %1078 = vector.broadcast %c-1_i32_387 : i32 to vector<1x512xi32>
    %1079 = arith.addi %1, %1078 : vector<1x512xi32>
    %c16_i32_388 = arith.constant 16 : i32
    %1080 = vector.broadcast %c16_i32_388 : i32 to vector<1x512xi32>
    %1081 = arith.cmpi slt, %1079, %1080 : vector<1x512xi32>
    %1082 = arith.andi %1077, %1081 : vector<1x512xi1>
    %c2_i32_389 = arith.constant 2 : i32
    %1083 = vector.broadcast %c2_i32_389 : i32 to vector<1x512xi32>
    %1084 = arith.addi %2, %1083 : vector<1x512xi32>
    %c0_i32_390 = arith.constant 0 : i32
    %1085 = vector.broadcast %c0_i32_390 : i32 to vector<1x512xi32>
    %1086 = arith.cmpi sge, %1084, %1085 : vector<1x512xi32>
    %1087 = arith.andi %1082, %1086 : vector<1x512xi1>
    %c2_i32_391 = arith.constant 2 : i32
    %1088 = vector.broadcast %c2_i32_391 : i32 to vector<1x512xi32>
    %1089 = arith.addi %2, %1088 : vector<1x512xi32>
    %c16_i32_392 = arith.constant 16 : i32
    %1090 = vector.broadcast %c16_i32_392 : i32 to vector<1x512xi32>
    %1091 = arith.cmpi slt, %1089, %1090 : vector<1x512xi32>
    %1092 = arith.andi %1087, %1091 : vector<1x512xi1>
    %cst_393 = arith.constant 1.000000e+00 : f32
    %cst_394 = arith.constant 0.000000e+00 : f32
    %1093 = vector.broadcast %cst_393 : f32 to vector<1x512xf32>
    %1094 = vector.broadcast %cst_394 : f32 to vector<1x512xf32>
    %1095 = arith.select %1092, %1093, %1094 : vector<1x512xi1>, vector<1x512xf32>
    %1096 = vector.extract_strided_slice %809 {offsets = [0, 9], sizes = [8, 1], strides = [1, 1]} : vector<8x25xf32> to vector<8x1xf32>
    %1097 = vector.broadcast %1096 : vector<8x1xf32> to vector<8x512xf32>
    %1098 = vector.broadcast %1095 : vector<1x512xf32> to vector<8x512xf32>
    %1099 = arith.mulf %1097, %1098 : vector<8x512xf32>
    %1100 = arith.mulf %1073, %1099 : vector<8x512xf32>
    %1101 = arith.addf %1072, %1100 : vector<8x512xf32>
    %c2_i32_395 = arith.constant 2 : i32
    %1102 = tpu.dynamic_rotate %808 by %c2_i32_395 dim 1 : vector<8x512xf32>, i32 -> vector<8x512xf32>
    %c0_i32_396 = arith.constant 0 : i32
    %1103 = vector.broadcast %c0_i32_396 : i32 to vector<1x512xi32>
    %1104 = arith.addi %1, %1103 : vector<1x512xi32>
    %c0_i32_397 = arith.constant 0 : i32
    %1105 = vector.broadcast %c0_i32_397 : i32 to vector<1x512xi32>
    %1106 = arith.cmpi sge, %1104, %1105 : vector<1x512xi32>
    %c0_i32_398 = arith.constant 0 : i32
    %1107 = vector.broadcast %c0_i32_398 : i32 to vector<1x512xi32>
    %1108 = arith.addi %1, %1107 : vector<1x512xi32>
    %c16_i32_399 = arith.constant 16 : i32
    %1109 = vector.broadcast %c16_i32_399 : i32 to vector<1x512xi32>
    %1110 = arith.cmpi slt, %1108, %1109 : vector<1x512xi32>
    %1111 = arith.andi %1106, %1110 : vector<1x512xi1>
    %c-2_i32_400 = arith.constant -2 : i32
    %1112 = vector.broadcast %c-2_i32_400 : i32 to vector<1x512xi32>
    %1113 = arith.addi %2, %1112 : vector<1x512xi32>
    %c0_i32_401 = arith.constant 0 : i32
    %1114 = vector.broadcast %c0_i32_401 : i32 to vector<1x512xi32>
    %1115 = arith.cmpi sge, %1113, %1114 : vector<1x512xi32>
    %1116 = arith.andi %1111, %1115 : vector<1x512xi1>
    %c-2_i32_402 = arith.constant -2 : i32
    %1117 = vector.broadcast %c-2_i32_402 : i32 to vector<1x512xi32>
    %1118 = arith.addi %2, %1117 : vector<1x512xi32>
    %c16_i32_403 = arith.constant 16 : i32
    %1119 = vector.broadcast %c16_i32_403 : i32 to vector<1x512xi32>
    %1120 = arith.cmpi slt, %1118, %1119 : vector<1x512xi32>
    %1121 = arith.andi %1116, %1120 : vector<1x512xi1>
    %cst_404 = arith.constant 1.000000e+00 : f32
    %cst_405 = arith.constant 0.000000e+00 : f32
    %1122 = vector.broadcast %cst_404 : f32 to vector<1x512xf32>
    %1123 = vector.broadcast %cst_405 : f32 to vector<1x512xf32>
    %1124 = arith.select %1121, %1122, %1123 : vector<1x512xi1>, vector<1x512xf32>
    %1125 = vector.extract_strided_slice %809 {offsets = [0, 10], sizes = [8, 1], strides = [1, 1]} : vector<8x25xf32> to vector<8x1xf32>
    %1126 = vector.broadcast %1125 : vector<8x1xf32> to vector<8x512xf32>
    %1127 = vector.broadcast %1124 : vector<1x512xf32> to vector<8x512xf32>
    %1128 = arith.mulf %1126, %1127 : vector<8x512xf32>
    %1129 = arith.mulf %1102, %1128 : vector<8x512xf32>
    %1130 = arith.addf %1101, %1129 : vector<8x512xf32>
    %c1_i32_406 = arith.constant 1 : i32
    %1131 = tpu.dynamic_rotate %808 by %c1_i32_406 dim 1 : vector<8x512xf32>, i32 -> vector<8x512xf32>
    %c0_i32_407 = arith.constant 0 : i32
    %1132 = vector.broadcast %c0_i32_407 : i32 to vector<1x512xi32>
    %1133 = arith.addi %1, %1132 : vector<1x512xi32>
    %c0_i32_408 = arith.constant 0 : i32
    %1134 = vector.broadcast %c0_i32_408 : i32 to vector<1x512xi32>
    %1135 = arith.cmpi sge, %1133, %1134 : vector<1x512xi32>
    %c0_i32_409 = arith.constant 0 : i32
    %1136 = vector.broadcast %c0_i32_409 : i32 to vector<1x512xi32>
    %1137 = arith.addi %1, %1136 : vector<1x512xi32>
    %c16_i32_410 = arith.constant 16 : i32
    %1138 = vector.broadcast %c16_i32_410 : i32 to vector<1x512xi32>
    %1139 = arith.cmpi slt, %1137, %1138 : vector<1x512xi32>
    %1140 = arith.andi %1135, %1139 : vector<1x512xi1>
    %c-1_i32_411 = arith.constant -1 : i32
    %1141 = vector.broadcast %c-1_i32_411 : i32 to vector<1x512xi32>
    %1142 = arith.addi %2, %1141 : vector<1x512xi32>
    %c0_i32_412 = arith.constant 0 : i32
    %1143 = vector.broadcast %c0_i32_412 : i32 to vector<1x512xi32>
    %1144 = arith.cmpi sge, %1142, %1143 : vector<1x512xi32>
    %1145 = arith.andi %1140, %1144 : vector<1x512xi1>
    %c-1_i32_413 = arith.constant -1 : i32
    %1146 = vector.broadcast %c-1_i32_413 : i32 to vector<1x512xi32>
    %1147 = arith.addi %2, %1146 : vector<1x512xi32>
    %c16_i32_414 = arith.constant 16 : i32
    %1148 = vector.broadcast %c16_i32_414 : i32 to vector<1x512xi32>
    %1149 = arith.cmpi slt, %1147, %1148 : vector<1x512xi32>
    %1150 = arith.andi %1145, %1149 : vector<1x512xi1>
    %cst_415 = arith.constant 1.000000e+00 : f32
    %cst_416 = arith.constant 0.000000e+00 : f32
    %1151 = vector.broadcast %cst_415 : f32 to vector<1x512xf32>
    %1152 = vector.broadcast %cst_416 : f32 to vector<1x512xf32>
    %1153 = arith.select %1150, %1151, %1152 : vector<1x512xi1>, vector<1x512xf32>
    %1154 = vector.extract_strided_slice %809 {offsets = [0, 11], sizes = [8, 1], strides = [1, 1]} : vector<8x25xf32> to vector<8x1xf32>
    %1155 = vector.broadcast %1154 : vector<8x1xf32> to vector<8x512xf32>
    %1156 = vector.broadcast %1153 : vector<1x512xf32> to vector<8x512xf32>
    %1157 = arith.mulf %1155, %1156 : vector<8x512xf32>
    %1158 = arith.mulf %1131, %1157 : vector<8x512xf32>
    %1159 = arith.addf %1130, %1158 : vector<8x512xf32>
    %c0_i32_417 = arith.constant 0 : i32
    %1160 = vector.broadcast %c0_i32_417 : i32 to vector<1x512xi32>
    %1161 = arith.addi %1, %1160 : vector<1x512xi32>
    %c0_i32_418 = arith.constant 0 : i32
    %1162 = vector.broadcast %c0_i32_418 : i32 to vector<1x512xi32>
    %1163 = arith.cmpi sge, %1161, %1162 : vector<1x512xi32>
    %c0_i32_419 = arith.constant 0 : i32
    %1164 = vector.broadcast %c0_i32_419 : i32 to vector<1x512xi32>
    %1165 = arith.addi %1, %1164 : vector<1x512xi32>
    %c16_i32_420 = arith.constant 16 : i32
    %1166 = vector.broadcast %c16_i32_420 : i32 to vector<1x512xi32>
    %1167 = arith.cmpi slt, %1165, %1166 : vector<1x512xi32>
    %1168 = arith.andi %1163, %1167 : vector<1x512xi1>
    %c0_i32_421 = arith.constant 0 : i32
    %1169 = vector.broadcast %c0_i32_421 : i32 to vector<1x512xi32>
    %1170 = arith.addi %2, %1169 : vector<1x512xi32>
    %c0_i32_422 = arith.constant 0 : i32
    %1171 = vector.broadcast %c0_i32_422 : i32 to vector<1x512xi32>
    %1172 = arith.cmpi sge, %1170, %1171 : vector<1x512xi32>
    %1173 = arith.andi %1168, %1172 : vector<1x512xi1>
    %c0_i32_423 = arith.constant 0 : i32
    %1174 = vector.broadcast %c0_i32_423 : i32 to vector<1x512xi32>
    %1175 = arith.addi %2, %1174 : vector<1x512xi32>
    %c16_i32_424 = arith.constant 16 : i32
    %1176 = vector.broadcast %c16_i32_424 : i32 to vector<1x512xi32>
    %1177 = arith.cmpi slt, %1175, %1176 : vector<1x512xi32>
    %1178 = arith.andi %1173, %1177 : vector<1x512xi1>
    %cst_425 = arith.constant 1.000000e+00 : f32
    %cst_426 = arith.constant 0.000000e+00 : f32
    %1179 = vector.broadcast %cst_425 : f32 to vector<1x512xf32>
    %1180 = vector.broadcast %cst_426 : f32 to vector<1x512xf32>
    %1181 = arith.select %1178, %1179, %1180 : vector<1x512xi1>, vector<1x512xf32>
    %1182 = vector.extract_strided_slice %809 {offsets = [0, 12], sizes = [8, 1], strides = [1, 1]} : vector<8x25xf32> to vector<8x1xf32>
    %1183 = vector.broadcast %1182 : vector<8x1xf32> to vector<8x512xf32>
    %1184 = vector.broadcast %1181 : vector<1x512xf32> to vector<8x512xf32>
    %1185 = arith.mulf %1183, %1184 : vector<8x512xf32>
    %1186 = arith.mulf %808, %1185 : vector<8x512xf32>
    %1187 = arith.addf %1159, %1186 : vector<8x512xf32>
    %c511_i32_427 = arith.constant 511 : i32
    %1188 = tpu.dynamic_rotate %808 by %c511_i32_427 dim 1 : vector<8x512xf32>, i32 -> vector<8x512xf32>
    %c0_i32_428 = arith.constant 0 : i32
    %1189 = vector.broadcast %c0_i32_428 : i32 to vector<1x512xi32>
    %1190 = arith.addi %1, %1189 : vector<1x512xi32>
    %c0_i32_429 = arith.constant 0 : i32
    %1191 = vector.broadcast %c0_i32_429 : i32 to vector<1x512xi32>
    %1192 = arith.cmpi sge, %1190, %1191 : vector<1x512xi32>
    %c0_i32_430 = arith.constant 0 : i32
    %1193 = vector.broadcast %c0_i32_430 : i32 to vector<1x512xi32>
    %1194 = arith.addi %1, %1193 : vector<1x512xi32>
    %c16_i32_431 = arith.constant 16 : i32
    %1195 = vector.broadcast %c16_i32_431 : i32 to vector<1x512xi32>
    %1196 = arith.cmpi slt, %1194, %1195 : vector<1x512xi32>
    %1197 = arith.andi %1192, %1196 : vector<1x512xi1>
    %c1_i32_432 = arith.constant 1 : i32
    %1198 = vector.broadcast %c1_i32_432 : i32 to vector<1x512xi32>
    %1199 = arith.addi %2, %1198 : vector<1x512xi32>
    %c0_i32_433 = arith.constant 0 : i32
    %1200 = vector.broadcast %c0_i32_433 : i32 to vector<1x512xi32>
    %1201 = arith.cmpi sge, %1199, %1200 : vector<1x512xi32>
    %1202 = arith.andi %1197, %1201 : vector<1x512xi1>
    %c1_i32_434 = arith.constant 1 : i32
    %1203 = vector.broadcast %c1_i32_434 : i32 to vector<1x512xi32>
    %1204 = arith.addi %2, %1203 : vector<1x512xi32>
    %c16_i32_435 = arith.constant 16 : i32
    %1205 = vector.broadcast %c16_i32_435 : i32 to vector<1x512xi32>
    %1206 = arith.cmpi slt, %1204, %1205 : vector<1x512xi32>
    %1207 = arith.andi %1202, %1206 : vector<1x512xi1>
    %cst_436 = arith.constant 1.000000e+00 : f32
    %cst_437 = arith.constant 0.000000e+00 : f32
    %1208 = vector.broadcast %cst_436 : f32 to vector<1x512xf32>
    %1209 = vector.broadcast %cst_437 : f32 to vector<1x512xf32>
    %1210 = arith.select %1207, %1208, %1209 : vector<1x512xi1>, vector<1x512xf32>
    %1211 = vector.extract_strided_slice %809 {offsets = [0, 13], sizes = [8, 1], strides = [1, 1]} : vector<8x25xf32> to vector<8x1xf32>
    %1212 = vector.broadcast %1211 : vector<8x1xf32> to vector<8x512xf32>
    %1213 = vector.broadcast %1210 : vector<1x512xf32> to vector<8x512xf32>
    %1214 = arith.mulf %1212, %1213 : vector<8x512xf32>
    %1215 = arith.mulf %1188, %1214 : vector<8x512xf32>
    %1216 = arith.addf %1187, %1215 : vector<8x512xf32>
    %c510_i32_438 = arith.constant 510 : i32
    %1217 = tpu.dynamic_rotate %808 by %c510_i32_438 dim 1 : vector<8x512xf32>, i32 -> vector<8x512xf32>
    %c0_i32_439 = arith.constant 0 : i32
    %1218 = vector.broadcast %c0_i32_439 : i32 to vector<1x512xi32>
    %1219 = arith.addi %1, %1218 : vector<1x512xi32>
    %c0_i32_440 = arith.constant 0 : i32
    %1220 = vector.broadcast %c0_i32_440 : i32 to vector<1x512xi32>
    %1221 = arith.cmpi sge, %1219, %1220 : vector<1x512xi32>
    %c0_i32_441 = arith.constant 0 : i32
    %1222 = vector.broadcast %c0_i32_441 : i32 to vector<1x512xi32>
    %1223 = arith.addi %1, %1222 : vector<1x512xi32>
    %c16_i32_442 = arith.constant 16 : i32
    %1224 = vector.broadcast %c16_i32_442 : i32 to vector<1x512xi32>
    %1225 = arith.cmpi slt, %1223, %1224 : vector<1x512xi32>
    %1226 = arith.andi %1221, %1225 : vector<1x512xi1>
    %c2_i32_443 = arith.constant 2 : i32
    %1227 = vector.broadcast %c2_i32_443 : i32 to vector<1x512xi32>
    %1228 = arith.addi %2, %1227 : vector<1x512xi32>
    %c0_i32_444 = arith.constant 0 : i32
    %1229 = vector.broadcast %c0_i32_444 : i32 to vector<1x512xi32>
    %1230 = arith.cmpi sge, %1228, %1229 : vector<1x512xi32>
    %1231 = arith.andi %1226, %1230 : vector<1x512xi1>
    %c2_i32_445 = arith.constant 2 : i32
    %1232 = vector.broadcast %c2_i32_445 : i32 to vector<1x512xi32>
    %1233 = arith.addi %2, %1232 : vector<1x512xi32>
    %c16_i32_446 = arith.constant 16 : i32
    %1234 = vector.broadcast %c16_i32_446 : i32 to vector<1x512xi32>
    %1235 = arith.cmpi slt, %1233, %1234 : vector<1x512xi32>
    %1236 = arith.andi %1231, %1235 : vector<1x512xi1>
    %cst_447 = arith.constant 1.000000e+00 : f32
    %cst_448 = arith.constant 0.000000e+00 : f32
    %1237 = vector.broadcast %cst_447 : f32 to vector<1x512xf32>
    %1238 = vector.broadcast %cst_448 : f32 to vector<1x512xf32>
    %1239 = arith.select %1236, %1237, %1238 : vector<1x512xi1>, vector<1x512xf32>
    %1240 = vector.extract_strided_slice %809 {offsets = [0, 14], sizes = [8, 1], strides = [1, 1]} : vector<8x25xf32> to vector<8x1xf32>
    %1241 = vector.broadcast %1240 : vector<8x1xf32> to vector<8x512xf32>
    %1242 = vector.broadcast %1239 : vector<1x512xf32> to vector<8x512xf32>
    %1243 = arith.mulf %1241, %1242 : vector<8x512xf32>
    %1244 = arith.mulf %1217, %1243 : vector<8x512xf32>
    %1245 = arith.addf %1216, %1244 : vector<8x512xf32>
    %c498_i32_449 = arith.constant 498 : i32
    %1246 = tpu.dynamic_rotate %808 by %c498_i32_449 dim 1 : vector<8x512xf32>, i32 -> vector<8x512xf32>
    %c1_i32_450 = arith.constant 1 : i32
    %1247 = vector.broadcast %c1_i32_450 : i32 to vector<1x512xi32>
    %1248 = arith.addi %1, %1247 : vector<1x512xi32>
    %c0_i32_451 = arith.constant 0 : i32
    %1249 = vector.broadcast %c0_i32_451 : i32 to vector<1x512xi32>
    %1250 = arith.cmpi sge, %1248, %1249 : vector<1x512xi32>
    %c1_i32_452 = arith.constant 1 : i32
    %1251 = vector.broadcast %c1_i32_452 : i32 to vector<1x512xi32>
    %1252 = arith.addi %1, %1251 : vector<1x512xi32>
    %c16_i32_453 = arith.constant 16 : i32
    %1253 = vector.broadcast %c16_i32_453 : i32 to vector<1x512xi32>
    %1254 = arith.cmpi slt, %1252, %1253 : vector<1x512xi32>
    %1255 = arith.andi %1250, %1254 : vector<1x512xi1>
    %c-2_i32_454 = arith.constant -2 : i32
    %1256 = vector.broadcast %c-2_i32_454 : i32 to vector<1x512xi32>
    %1257 = arith.addi %2, %1256 : vector<1x512xi32>
    %c0_i32_455 = arith.constant 0 : i32
    %1258 = vector.broadcast %c0_i32_455 : i32 to vector<1x512xi32>
    %1259 = arith.cmpi sge, %1257, %1258 : vector<1x512xi32>
    %1260 = arith.andi %1255, %1259 : vector<1x512xi1>
    %c-2_i32_456 = arith.constant -2 : i32
    %1261 = vector.broadcast %c-2_i32_456 : i32 to vector<1x512xi32>
    %1262 = arith.addi %2, %1261 : vector<1x512xi32>
    %c16_i32_457 = arith.constant 16 : i32
    %1263 = vector.broadcast %c16_i32_457 : i32 to vector<1x512xi32>
    %1264 = arith.cmpi slt, %1262, %1263 : vector<1x512xi32>
    %1265 = arith.andi %1260, %1264 : vector<1x512xi1>
    %cst_458 = arith.constant 1.000000e+00 : f32
    %cst_459 = arith.constant 0.000000e+00 : f32
    %1266 = vector.broadcast %cst_458 : f32 to vector<1x512xf32>
    %1267 = vector.broadcast %cst_459 : f32 to vector<1x512xf32>
    %1268 = arith.select %1265, %1266, %1267 : vector<1x512xi1>, vector<1x512xf32>
    %1269 = vector.extract_strided_slice %809 {offsets = [0, 15], sizes = [8, 1], strides = [1, 1]} : vector<8x25xf32> to vector<8x1xf32>
    %1270 = vector.broadcast %1269 : vector<8x1xf32> to vector<8x512xf32>
    %1271 = vector.broadcast %1268 : vector<1x512xf32> to vector<8x512xf32>
    %1272 = arith.mulf %1270, %1271 : vector<8x512xf32>
    %1273 = arith.mulf %1246, %1272 : vector<8x512xf32>
    %1274 = arith.addf %1245, %1273 : vector<8x512xf32>
    %c497_i32_460 = arith.constant 497 : i32
    %1275 = tpu.dynamic_rotate %808 by %c497_i32_460 dim 1 : vector<8x512xf32>, i32 -> vector<8x512xf32>
    %c1_i32_461 = arith.constant 1 : i32
    %1276 = vector.broadcast %c1_i32_461 : i32 to vector<1x512xi32>
    %1277 = arith.addi %1, %1276 : vector<1x512xi32>
    %c0_i32_462 = arith.constant 0 : i32
    %1278 = vector.broadcast %c0_i32_462 : i32 to vector<1x512xi32>
    %1279 = arith.cmpi sge, %1277, %1278 : vector<1x512xi32>
    %c1_i32_463 = arith.constant 1 : i32
    %1280 = vector.broadcast %c1_i32_463 : i32 to vector<1x512xi32>
    %1281 = arith.addi %1, %1280 : vector<1x512xi32>
    %c16_i32_464 = arith.constant 16 : i32
    %1282 = vector.broadcast %c16_i32_464 : i32 to vector<1x512xi32>
    %1283 = arith.cmpi slt, %1281, %1282 : vector<1x512xi32>
    %1284 = arith.andi %1279, %1283 : vector<1x512xi1>
    %c-1_i32_465 = arith.constant -1 : i32
    %1285 = vector.broadcast %c-1_i32_465 : i32 to vector<1x512xi32>
    %1286 = arith.addi %2, %1285 : vector<1x512xi32>
    %c0_i32_466 = arith.constant 0 : i32
    %1287 = vector.broadcast %c0_i32_466 : i32 to vector<1x512xi32>
    %1288 = arith.cmpi sge, %1286, %1287 : vector<1x512xi32>
    %1289 = arith.andi %1284, %1288 : vector<1x512xi1>
    %c-1_i32_467 = arith.constant -1 : i32
    %1290 = vector.broadcast %c-1_i32_467 : i32 to vector<1x512xi32>
    %1291 = arith.addi %2, %1290 : vector<1x512xi32>
    %c16_i32_468 = arith.constant 16 : i32
    %1292 = vector.broadcast %c16_i32_468 : i32 to vector<1x512xi32>
    %1293 = arith.cmpi slt, %1291, %1292 : vector<1x512xi32>
    %1294 = arith.andi %1289, %1293 : vector<1x512xi1>
    %cst_469 = arith.constant 1.000000e+00 : f32
    %cst_470 = arith.constant 0.000000e+00 : f32
    %1295 = vector.broadcast %cst_469 : f32 to vector<1x512xf32>
    %1296 = vector.broadcast %cst_470 : f32 to vector<1x512xf32>
    %1297 = arith.select %1294, %1295, %1296 : vector<1x512xi1>, vector<1x512xf32>
    %1298 = vector.extract_strided_slice %809 {offsets = [0, 16], sizes = [8, 1], strides = [1, 1]} : vector<8x25xf32> to vector<8x1xf32>
    %1299 = vector.broadcast %1298 : vector<8x1xf32> to vector<8x512xf32>
    %1300 = vector.broadcast %1297 : vector<1x512xf32> to vector<8x512xf32>
    %1301 = arith.mulf %1299, %1300 : vector<8x512xf32>
    %1302 = arith.mulf %1275, %1301 : vector<8x512xf32>
    %1303 = arith.addf %1274, %1302 : vector<8x512xf32>
    %c496_i32_471 = arith.constant 496 : i32
    %1304 = tpu.dynamic_rotate %808 by %c496_i32_471 dim 1 : vector<8x512xf32>, i32 -> vector<8x512xf32>
    %c1_i32_472 = arith.constant 1 : i32
    %1305 = vector.broadcast %c1_i32_472 : i32 to vector<1x512xi32>
    %1306 = arith.addi %1, %1305 : vector<1x512xi32>
    %c0_i32_473 = arith.constant 0 : i32
    %1307 = vector.broadcast %c0_i32_473 : i32 to vector<1x512xi32>
    %1308 = arith.cmpi sge, %1306, %1307 : vector<1x512xi32>
    %c1_i32_474 = arith.constant 1 : i32
    %1309 = vector.broadcast %c1_i32_474 : i32 to vector<1x512xi32>
    %1310 = arith.addi %1, %1309 : vector<1x512xi32>
    %c16_i32_475 = arith.constant 16 : i32
    %1311 = vector.broadcast %c16_i32_475 : i32 to vector<1x512xi32>
    %1312 = arith.cmpi slt, %1310, %1311 : vector<1x512xi32>
    %1313 = arith.andi %1308, %1312 : vector<1x512xi1>
    %c0_i32_476 = arith.constant 0 : i32
    %1314 = vector.broadcast %c0_i32_476 : i32 to vector<1x512xi32>
    %1315 = arith.addi %2, %1314 : vector<1x512xi32>
    %c0_i32_477 = arith.constant 0 : i32
    %1316 = vector.broadcast %c0_i32_477 : i32 to vector<1x512xi32>
    %1317 = arith.cmpi sge, %1315, %1316 : vector<1x512xi32>
    %1318 = arith.andi %1313, %1317 : vector<1x512xi1>
    %c0_i32_478 = arith.constant 0 : i32
    %1319 = vector.broadcast %c0_i32_478 : i32 to vector<1x512xi32>
    %1320 = arith.addi %2, %1319 : vector<1x512xi32>
    %c16_i32_479 = arith.constant 16 : i32
    %1321 = vector.broadcast %c16_i32_479 : i32 to vector<1x512xi32>
    %1322 = arith.cmpi slt, %1320, %1321 : vector<1x512xi32>
    %1323 = arith.andi %1318, %1322 : vector<1x512xi1>
    %cst_480 = arith.constant 1.000000e+00 : f32
    %cst_481 = arith.constant 0.000000e+00 : f32
    %1324 = vector.broadcast %cst_480 : f32 to vector<1x512xf32>
    %1325 = vector.broadcast %cst_481 : f32 to vector<1x512xf32>
    %1326 = arith.select %1323, %1324, %1325 : vector<1x512xi1>, vector<1x512xf32>
    %1327 = vector.extract_strided_slice %809 {offsets = [0, 17], sizes = [8, 1], strides = [1, 1]} : vector<8x25xf32> to vector<8x1xf32>
    %1328 = vector.broadcast %1327 : vector<8x1xf32> to vector<8x512xf32>
    %1329 = vector.broadcast %1326 : vector<1x512xf32> to vector<8x512xf32>
    %1330 = arith.mulf %1328, %1329 : vector<8x512xf32>
    %1331 = arith.mulf %1304, %1330 : vector<8x512xf32>
    %1332 = arith.addf %1303, %1331 : vector<8x512xf32>
    %c495_i32_482 = arith.constant 495 : i32
    %1333 = tpu.dynamic_rotate %808 by %c495_i32_482 dim 1 : vector<8x512xf32>, i32 -> vector<8x512xf32>
    %c1_i32_483 = arith.constant 1 : i32
    %1334 = vector.broadcast %c1_i32_483 : i32 to vector<1x512xi32>
    %1335 = arith.addi %1, %1334 : vector<1x512xi32>
    %c0_i32_484 = arith.constant 0 : i32
    %1336 = vector.broadcast %c0_i32_484 : i32 to vector<1x512xi32>
    %1337 = arith.cmpi sge, %1335, %1336 : vector<1x512xi32>
    %c1_i32_485 = arith.constant 1 : i32
    %1338 = vector.broadcast %c1_i32_485 : i32 to vector<1x512xi32>
    %1339 = arith.addi %1, %1338 : vector<1x512xi32>
    %c16_i32_486 = arith.constant 16 : i32
    %1340 = vector.broadcast %c16_i32_486 : i32 to vector<1x512xi32>
    %1341 = arith.cmpi slt, %1339, %1340 : vector<1x512xi32>
    %1342 = arith.andi %1337, %1341 : vector<1x512xi1>
    %c1_i32_487 = arith.constant 1 : i32
    %1343 = vector.broadcast %c1_i32_487 : i32 to vector<1x512xi32>
    %1344 = arith.addi %2, %1343 : vector<1x512xi32>
    %c0_i32_488 = arith.constant 0 : i32
    %1345 = vector.broadcast %c0_i32_488 : i32 to vector<1x512xi32>
    %1346 = arith.cmpi sge, %1344, %1345 : vector<1x512xi32>
    %1347 = arith.andi %1342, %1346 : vector<1x512xi1>
    %c1_i32_489 = arith.constant 1 : i32
    %1348 = vector.broadcast %c1_i32_489 : i32 to vector<1x512xi32>
    %1349 = arith.addi %2, %1348 : vector<1x512xi32>
    %c16_i32_490 = arith.constant 16 : i32
    %1350 = vector.broadcast %c16_i32_490 : i32 to vector<1x512xi32>
    %1351 = arith.cmpi slt, %1349, %1350 : vector<1x512xi32>
    %1352 = arith.andi %1347, %1351 : vector<1x512xi1>
    %cst_491 = arith.constant 1.000000e+00 : f32
    %cst_492 = arith.constant 0.000000e+00 : f32
    %1353 = vector.broadcast %cst_491 : f32 to vector<1x512xf32>
    %1354 = vector.broadcast %cst_492 : f32 to vector<1x512xf32>
    %1355 = arith.select %1352, %1353, %1354 : vector<1x512xi1>, vector<1x512xf32>
    %1356 = vector.extract_strided_slice %809 {offsets = [0, 18], sizes = [8, 1], strides = [1, 1]} : vector<8x25xf32> to vector<8x1xf32>
    %1357 = vector.broadcast %1356 : vector<8x1xf32> to vector<8x512xf32>
    %1358 = vector.broadcast %1355 : vector<1x512xf32> to vector<8x512xf32>
    %1359 = arith.mulf %1357, %1358 : vector<8x512xf32>
    %1360 = arith.mulf %1333, %1359 : vector<8x512xf32>
    %1361 = arith.addf %1332, %1360 : vector<8x512xf32>
    %c494_i32_493 = arith.constant 494 : i32
    %1362 = tpu.dynamic_rotate %808 by %c494_i32_493 dim 1 : vector<8x512xf32>, i32 -> vector<8x512xf32>
    %c1_i32_494 = arith.constant 1 : i32
    %1363 = vector.broadcast %c1_i32_494 : i32 to vector<1x512xi32>
    %1364 = arith.addi %1, %1363 : vector<1x512xi32>
    %c0_i32_495 = arith.constant 0 : i32
    %1365 = vector.broadcast %c0_i32_495 : i32 to vector<1x512xi32>
    %1366 = arith.cmpi sge, %1364, %1365 : vector<1x512xi32>
    %c1_i32_496 = arith.constant 1 : i32
    %1367 = vector.broadcast %c1_i32_496 : i32 to vector<1x512xi32>
    %1368 = arith.addi %1, %1367 : vector<1x512xi32>
    %c16_i32_497 = arith.constant 16 : i32
    %1369 = vector.broadcast %c16_i32_497 : i32 to vector<1x512xi32>
    %1370 = arith.cmpi slt, %1368, %1369 : vector<1x512xi32>
    %1371 = arith.andi %1366, %1370 : vector<1x512xi1>
    %c2_i32_498 = arith.constant 2 : i32
    %1372 = vector.broadcast %c2_i32_498 : i32 to vector<1x512xi32>
    %1373 = arith.addi %2, %1372 : vector<1x512xi32>
    %c0_i32_499 = arith.constant 0 : i32
    %1374 = vector.broadcast %c0_i32_499 : i32 to vector<1x512xi32>
    %1375 = arith.cmpi sge, %1373, %1374 : vector<1x512xi32>
    %1376 = arith.andi %1371, %1375 : vector<1x512xi1>
    %c2_i32_500 = arith.constant 2 : i32
    %1377 = vector.broadcast %c2_i32_500 : i32 to vector<1x512xi32>
    %1378 = arith.addi %2, %1377 : vector<1x512xi32>
    %c16_i32_501 = arith.constant 16 : i32
    %1379 = vector.broadcast %c16_i32_501 : i32 to vector<1x512xi32>
    %1380 = arith.cmpi slt, %1378, %1379 : vector<1x512xi32>
    %1381 = arith.andi %1376, %1380 : vector<1x512xi1>
    %cst_502 = arith.constant 1.000000e+00 : f32
    %cst_503 = arith.constant 0.000000e+00 : f32
    %1382 = vector.broadcast %cst_502 : f32 to vector<1x512xf32>
    %1383 = vector.broadcast %cst_503 : f32 to vector<1x512xf32>
    %1384 = arith.select %1381, %1382, %1383 : vector<1x512xi1>, vector<1x512xf32>
    %1385 = vector.extract_strided_slice %809 {offsets = [0, 19], sizes = [8, 1], strides = [1, 1]} : vector<8x25xf32> to vector<8x1xf32>
    %1386 = vector.broadcast %1385 : vector<8x1xf32> to vector<8x512xf32>
    %1387 = vector.broadcast %1384 : vector<1x512xf32> to vector<8x512xf32>
    %1388 = arith.mulf %1386, %1387 : vector<8x512xf32>
    %1389 = arith.mulf %1362, %1388 : vector<8x512xf32>
    %1390 = arith.addf %1361, %1389 : vector<8x512xf32>
    %c482_i32_504 = arith.constant 482 : i32
    %1391 = tpu.dynamic_rotate %808 by %c482_i32_504 dim 1 : vector<8x512xf32>, i32 -> vector<8x512xf32>
    %c2_i32_505 = arith.constant 2 : i32
    %1392 = vector.broadcast %c2_i32_505 : i32 to vector<1x512xi32>
    %1393 = arith.addi %1, %1392 : vector<1x512xi32>
    %c0_i32_506 = arith.constant 0 : i32
    %1394 = vector.broadcast %c0_i32_506 : i32 to vector<1x512xi32>
    %1395 = arith.cmpi sge, %1393, %1394 : vector<1x512xi32>
    %c2_i32_507 = arith.constant 2 : i32
    %1396 = vector.broadcast %c2_i32_507 : i32 to vector<1x512xi32>
    %1397 = arith.addi %1, %1396 : vector<1x512xi32>
    %c16_i32_508 = arith.constant 16 : i32
    %1398 = vector.broadcast %c16_i32_508 : i32 to vector<1x512xi32>
    %1399 = arith.cmpi slt, %1397, %1398 : vector<1x512xi32>
    %1400 = arith.andi %1395, %1399 : vector<1x512xi1>
    %c-2_i32_509 = arith.constant -2 : i32
    %1401 = vector.broadcast %c-2_i32_509 : i32 to vector<1x512xi32>
    %1402 = arith.addi %2, %1401 : vector<1x512xi32>
    %c0_i32_510 = arith.constant 0 : i32
    %1403 = vector.broadcast %c0_i32_510 : i32 to vector<1x512xi32>
    %1404 = arith.cmpi sge, %1402, %1403 : vector<1x512xi32>
    %1405 = arith.andi %1400, %1404 : vector<1x512xi1>
    %c-2_i32_511 = arith.constant -2 : i32
    %1406 = vector.broadcast %c-2_i32_511 : i32 to vector<1x512xi32>
    %1407 = arith.addi %2, %1406 : vector<1x512xi32>
    %c16_i32_512 = arith.constant 16 : i32
    %1408 = vector.broadcast %c16_i32_512 : i32 to vector<1x512xi32>
    %1409 = arith.cmpi slt, %1407, %1408 : vector<1x512xi32>
    %1410 = arith.andi %1405, %1409 : vector<1x512xi1>
    %cst_513 = arith.constant 1.000000e+00 : f32
    %cst_514 = arith.constant 0.000000e+00 : f32
    %1411 = vector.broadcast %cst_513 : f32 to vector<1x512xf32>
    %1412 = vector.broadcast %cst_514 : f32 to vector<1x512xf32>
    %1413 = arith.select %1410, %1411, %1412 : vector<1x512xi1>, vector<1x512xf32>
    %1414 = vector.extract_strided_slice %809 {offsets = [0, 20], sizes = [8, 1], strides = [1, 1]} : vector<8x25xf32> to vector<8x1xf32>
    %1415 = vector.broadcast %1414 : vector<8x1xf32> to vector<8x512xf32>
    %1416 = vector.broadcast %1413 : vector<1x512xf32> to vector<8x512xf32>
    %1417 = arith.mulf %1415, %1416 : vector<8x512xf32>
    %1418 = arith.mulf %1391, %1417 : vector<8x512xf32>
    %1419 = arith.addf %1390, %1418 : vector<8x512xf32>
    %c481_i32_515 = arith.constant 481 : i32
    %1420 = tpu.dynamic_rotate %808 by %c481_i32_515 dim 1 : vector<8x512xf32>, i32 -> vector<8x512xf32>
    %c2_i32_516 = arith.constant 2 : i32
    %1421 = vector.broadcast %c2_i32_516 : i32 to vector<1x512xi32>
    %1422 = arith.addi %1, %1421 : vector<1x512xi32>
    %c0_i32_517 = arith.constant 0 : i32
    %1423 = vector.broadcast %c0_i32_517 : i32 to vector<1x512xi32>
    %1424 = arith.cmpi sge, %1422, %1423 : vector<1x512xi32>
    %c2_i32_518 = arith.constant 2 : i32
    %1425 = vector.broadcast %c2_i32_518 : i32 to vector<1x512xi32>
    %1426 = arith.addi %1, %1425 : vector<1x512xi32>
    %c16_i32_519 = arith.constant 16 : i32
    %1427 = vector.broadcast %c16_i32_519 : i32 to vector<1x512xi32>
    %1428 = arith.cmpi slt, %1426, %1427 : vector<1x512xi32>
    %1429 = arith.andi %1424, %1428 : vector<1x512xi1>
    %c-1_i32_520 = arith.constant -1 : i32
    %1430 = vector.broadcast %c-1_i32_520 : i32 to vector<1x512xi32>
    %1431 = arith.addi %2, %1430 : vector<1x512xi32>
    %c0_i32_521 = arith.constant 0 : i32
    %1432 = vector.broadcast %c0_i32_521 : i32 to vector<1x512xi32>
    %1433 = arith.cmpi sge, %1431, %1432 : vector<1x512xi32>
    %1434 = arith.andi %1429, %1433 : vector<1x512xi1>
    %c-1_i32_522 = arith.constant -1 : i32
    %1435 = vector.broadcast %c-1_i32_522 : i32 to vector<1x512xi32>
    %1436 = arith.addi %2, %1435 : vector<1x512xi32>
    %c16_i32_523 = arith.constant 16 : i32
    %1437 = vector.broadcast %c16_i32_523 : i32 to vector<1x512xi32>
    %1438 = arith.cmpi slt, %1436, %1437 : vector<1x512xi32>
    %1439 = arith.andi %1434, %1438 : vector<1x512xi1>
    %cst_524 = arith.constant 1.000000e+00 : f32
    %cst_525 = arith.constant 0.000000e+00 : f32
    %1440 = vector.broadcast %cst_524 : f32 to vector<1x512xf32>
    %1441 = vector.broadcast %cst_525 : f32 to vector<1x512xf32>
    %1442 = arith.select %1439, %1440, %1441 : vector<1x512xi1>, vector<1x512xf32>
    %1443 = vector.extract_strided_slice %809 {offsets = [0, 21], sizes = [8, 1], strides = [1, 1]} : vector<8x25xf32> to vector<8x1xf32>
    %1444 = vector.broadcast %1443 : vector<8x1xf32> to vector<8x512xf32>
    %1445 = vector.broadcast %1442 : vector<1x512xf32> to vector<8x512xf32>
    %1446 = arith.mulf %1444, %1445 : vector<8x512xf32>
    %1447 = arith.mulf %1420, %1446 : vector<8x512xf32>
    %1448 = arith.addf %1419, %1447 : vector<8x512xf32>
    %c480_i32_526 = arith.constant 480 : i32
    %1449 = tpu.dynamic_rotate %808 by %c480_i32_526 dim 1 : vector<8x512xf32>, i32 -> vector<8x512xf32>
    %c2_i32_527 = arith.constant 2 : i32
    %1450 = vector.broadcast %c2_i32_527 : i32 to vector<1x512xi32>
    %1451 = arith.addi %1, %1450 : vector<1x512xi32>
    %c0_i32_528 = arith.constant 0 : i32
    %1452 = vector.broadcast %c0_i32_528 : i32 to vector<1x512xi32>
    %1453 = arith.cmpi sge, %1451, %1452 : vector<1x512xi32>
    %c2_i32_529 = arith.constant 2 : i32
    %1454 = vector.broadcast %c2_i32_529 : i32 to vector<1x512xi32>
    %1455 = arith.addi %1, %1454 : vector<1x512xi32>
    %c16_i32_530 = arith.constant 16 : i32
    %1456 = vector.broadcast %c16_i32_530 : i32 to vector<1x512xi32>
    %1457 = arith.cmpi slt, %1455, %1456 : vector<1x512xi32>
    %1458 = arith.andi %1453, %1457 : vector<1x512xi1>
    %c0_i32_531 = arith.constant 0 : i32
    %1459 = vector.broadcast %c0_i32_531 : i32 to vector<1x512xi32>
    %1460 = arith.addi %2, %1459 : vector<1x512xi32>
    %c0_i32_532 = arith.constant 0 : i32
    %1461 = vector.broadcast %c0_i32_532 : i32 to vector<1x512xi32>
    %1462 = arith.cmpi sge, %1460, %1461 : vector<1x512xi32>
    %1463 = arith.andi %1458, %1462 : vector<1x512xi1>
    %c0_i32_533 = arith.constant 0 : i32
    %1464 = vector.broadcast %c0_i32_533 : i32 to vector<1x512xi32>
    %1465 = arith.addi %2, %1464 : vector<1x512xi32>
    %c16_i32_534 = arith.constant 16 : i32
    %1466 = vector.broadcast %c16_i32_534 : i32 to vector<1x512xi32>
    %1467 = arith.cmpi slt, %1465, %1466 : vector<1x512xi32>
    %1468 = arith.andi %1463, %1467 : vector<1x512xi1>
    %cst_535 = arith.constant 1.000000e+00 : f32
    %cst_536 = arith.constant 0.000000e+00 : f32
    %1469 = vector.broadcast %cst_535 : f32 to vector<1x512xf32>
    %1470 = vector.broadcast %cst_536 : f32 to vector<1x512xf32>
    %1471 = arith.select %1468, %1469, %1470 : vector<1x512xi1>, vector<1x512xf32>
    %1472 = vector.extract_strided_slice %809 {offsets = [0, 22], sizes = [8, 1], strides = [1, 1]} : vector<8x25xf32> to vector<8x1xf32>
    %1473 = vector.broadcast %1472 : vector<8x1xf32> to vector<8x512xf32>
    %1474 = vector.broadcast %1471 : vector<1x512xf32> to vector<8x512xf32>
    %1475 = arith.mulf %1473, %1474 : vector<8x512xf32>
    %1476 = arith.mulf %1449, %1475 : vector<8x512xf32>
    %1477 = arith.addf %1448, %1476 : vector<8x512xf32>
    %c479_i32_537 = arith.constant 479 : i32
    %1478 = tpu.dynamic_rotate %808 by %c479_i32_537 dim 1 : vector<8x512xf32>, i32 -> vector<8x512xf32>
    %c2_i32_538 = arith.constant 2 : i32
    %1479 = vector.broadcast %c2_i32_538 : i32 to vector<1x512xi32>
    %1480 = arith.addi %1, %1479 : vector<1x512xi32>
    %c0_i32_539 = arith.constant 0 : i32
    %1481 = vector.broadcast %c0_i32_539 : i32 to vector<1x512xi32>
    %1482 = arith.cmpi sge, %1480, %1481 : vector<1x512xi32>
    %c2_i32_540 = arith.constant 2 : i32
    %1483 = vector.broadcast %c2_i32_540 : i32 to vector<1x512xi32>
    %1484 = arith.addi %1, %1483 : vector<1x512xi32>
    %c16_i32_541 = arith.constant 16 : i32
    %1485 = vector.broadcast %c16_i32_541 : i32 to vector<1x512xi32>
    %1486 = arith.cmpi slt, %1484, %1485 : vector<1x512xi32>
    %1487 = arith.andi %1482, %1486 : vector<1x512xi1>
    %c1_i32_542 = arith.constant 1 : i32
    %1488 = vector.broadcast %c1_i32_542 : i32 to vector<1x512xi32>
    %1489 = arith.addi %2, %1488 : vector<1x512xi32>
    %c0_i32_543 = arith.constant 0 : i32
    %1490 = vector.broadcast %c0_i32_543 : i32 to vector<1x512xi32>
    %1491 = arith.cmpi sge, %1489, %1490 : vector<1x512xi32>
    %1492 = arith.andi %1487, %1491 : vector<1x512xi1>
    %c1_i32_544 = arith.constant 1 : i32
    %1493 = vector.broadcast %c1_i32_544 : i32 to vector<1x512xi32>
    %1494 = arith.addi %2, %1493 : vector<1x512xi32>
    %c16_i32_545 = arith.constant 16 : i32
    %1495 = vector.broadcast %c16_i32_545 : i32 to vector<1x512xi32>
    %1496 = arith.cmpi slt, %1494, %1495 : vector<1x512xi32>
    %1497 = arith.andi %1492, %1496 : vector<1x512xi1>
    %cst_546 = arith.constant 1.000000e+00 : f32
    %cst_547 = arith.constant 0.000000e+00 : f32
    %1498 = vector.broadcast %cst_546 : f32 to vector<1x512xf32>
    %1499 = vector.broadcast %cst_547 : f32 to vector<1x512xf32>
    %1500 = arith.select %1497, %1498, %1499 : vector<1x512xi1>, vector<1x512xf32>
    %1501 = vector.extract_strided_slice %809 {offsets = [0, 23], sizes = [8, 1], strides = [1, 1]} : vector<8x25xf32> to vector<8x1xf32>
    %1502 = vector.broadcast %1501 : vector<8x1xf32> to vector<8x512xf32>
    %1503 = vector.broadcast %1500 : vector<1x512xf32> to vector<8x512xf32>
    %1504 = arith.mulf %1502, %1503 : vector<8x512xf32>
    %1505 = arith.mulf %1478, %1504 : vector<8x512xf32>
    %1506 = arith.addf %1477, %1505 : vector<8x512xf32>
    %c478_i32_548 = arith.constant 478 : i32
    %1507 = tpu.dynamic_rotate %808 by %c478_i32_548 dim 1 : vector<8x512xf32>, i32 -> vector<8x512xf32>
    %c2_i32_549 = arith.constant 2 : i32
    %1508 = vector.broadcast %c2_i32_549 : i32 to vector<1x512xi32>
    %1509 = arith.addi %1, %1508 : vector<1x512xi32>
    %c0_i32_550 = arith.constant 0 : i32
    %1510 = vector.broadcast %c0_i32_550 : i32 to vector<1x512xi32>
    %1511 = arith.cmpi sge, %1509, %1510 : vector<1x512xi32>
    %c2_i32_551 = arith.constant 2 : i32
    %1512 = vector.broadcast %c2_i32_551 : i32 to vector<1x512xi32>
    %1513 = arith.addi %1, %1512 : vector<1x512xi32>
    %c16_i32_552 = arith.constant 16 : i32
    %1514 = vector.broadcast %c16_i32_552 : i32 to vector<1x512xi32>
    %1515 = arith.cmpi slt, %1513, %1514 : vector<1x512xi32>
    %1516 = arith.andi %1511, %1515 : vector<1x512xi1>
    %c2_i32_553 = arith.constant 2 : i32
    %1517 = vector.broadcast %c2_i32_553 : i32 to vector<1x512xi32>
    %1518 = arith.addi %2, %1517 : vector<1x512xi32>
    %c0_i32_554 = arith.constant 0 : i32
    %1519 = vector.broadcast %c0_i32_554 : i32 to vector<1x512xi32>
    %1520 = arith.cmpi sge, %1518, %1519 : vector<1x512xi32>
    %1521 = arith.andi %1516, %1520 : vector<1x512xi1>
    %c2_i32_555 = arith.constant 2 : i32
    %1522 = vector.broadcast %c2_i32_555 : i32 to vector<1x512xi32>
    %1523 = arith.addi %2, %1522 : vector<1x512xi32>
    %c16_i32_556 = arith.constant 16 : i32
    %1524 = vector.broadcast %c16_i32_556 : i32 to vector<1x512xi32>
    %1525 = arith.cmpi slt, %1523, %1524 : vector<1x512xi32>
    %1526 = arith.andi %1521, %1525 : vector<1x512xi1>
    %cst_557 = arith.constant 1.000000e+00 : f32
    %cst_558 = arith.constant 0.000000e+00 : f32
    %1527 = vector.broadcast %cst_557 : f32 to vector<1x512xf32>
    %1528 = vector.broadcast %cst_558 : f32 to vector<1x512xf32>
    %1529 = arith.select %1526, %1527, %1528 : vector<1x512xi1>, vector<1x512xf32>
    %1530 = vector.extract_strided_slice %809 {offsets = [0, 24], sizes = [8, 1], strides = [1, 1]} : vector<8x25xf32> to vector<8x1xf32>
    %1531 = vector.broadcast %1530 : vector<8x1xf32> to vector<8x512xf32>
    %1532 = vector.broadcast %1529 : vector<1x512xf32> to vector<8x512xf32>
    %1533 = arith.mulf %1531, %1532 : vector<8x512xf32>
    %1534 = arith.mulf %1507, %1533 : vector<8x512xf32>
    %1535 = arith.addf %1506, %1534 : vector<8x512xf32>
    %1536 = vector.broadcast %810 : vector<8x1xf32> to vector<8x512xf32>
    %1537 = arith.addf %1535, %1536 : vector<8x512xf32>
    %c0_559 = arith.constant 0 : index
    %c0_560 = arith.constant 0 : index
    %1538 = vector.load %arg13[%c0_559, %c0_560] : memref<8x1xf32, #tpu.memory_space<vmem>>, vector<8x1xf32>
    %c0_561 = arith.constant 0 : index
    %c0_562 = arith.constant 0 : index
    %1539 = vector.load %arg14[%c0_561, %c0_562] : memref<8x1xf32, #tpu.memory_space<vmem>>, vector<8x1xf32>
    %cst_563 = arith.constant dense<0.000000e+00> : vector<8xf32>
    %1540 = vector.multi_reduction <add>, %1537, %cst_563 [1] : vector<8x512xf32> to vector<8xf32>
    %1541 = vector.shape_cast %1540 : vector<8xf32> to vector<8x1xf32>
    %1542 = arith.mulf %1537, %1537 : vector<8x512xf32>
    %cst_564 = arith.constant dense<0.000000e+00> : vector<8xf32>
    %1543 = vector.multi_reduction <add>, %1542, %cst_564 [1] : vector<8x512xf32> to vector<8xf32>
    %1544 = vector.shape_cast %1543 : vector<8xf32> to vector<8x1xf32>
    %cst_565 = arith.constant 0.001953125 : f32
    %1545 = vector.broadcast %cst_565 : f32 to vector<8x1xf32>
    %1546 = arith.mulf %1541, %1545 : vector<8x1xf32>
    %cst_566 = arith.constant 0.001953125 : f32
    %1547 = vector.broadcast %cst_566 : f32 to vector<8x1xf32>
    %1548 = arith.mulf %1544, %1547 : vector<8x1xf32>
    %1549 = arith.mulf %1546, %1546 : vector<8x1xf32>
    %1550 = arith.subf %1548, %1549 : vector<8x1xf32>
    %cst_567 = arith.constant 9.99999974E-6 : f32
    %1551 = vector.broadcast %cst_567 : f32 to vector<8x1xf32>
    %1552 = arith.addf %1550, %1551 : vector<8x1xf32>
    %1553 = math.rsqrt %1552 : vector<8x1xf32>
    %1554 = arith.mulf %1538, %1553 : vector<8x1xf32>
    %1555 = vector.broadcast %1554 : vector<8x1xf32> to vector<8x512xf32>
    %1556 = arith.mulf %1537, %1555 : vector<8x512xf32>
    %1557 = arith.mulf %1546, %1554 : vector<8x1xf32>
    %1558 = arith.subf %1539, %1557 : vector<8x1xf32>
    %1559 = vector.broadcast %1558 : vector<8x1xf32> to vector<8x512xf32>
    %1560 = arith.addf %1556, %1559 : vector<8x512xf32>
    %c0_568 = arith.constant 0 : index
    %c0_569 = arith.constant 0 : index
    %1561 = vector.load %arg15[%c0_568, %c0_569] : memref<4x8xf32, #tpu.memory_space<vmem>>, vector<4x8xf32>
    %c0_570 = arith.constant 0 : index
    %c0_571 = arith.constant 0 : index
    %1562 = vector.load %arg16[%c0_570, %c0_571] : memref<4x1xf32, #tpu.memory_space<vmem>>, vector<4x1xf32>
    %cst_572 = arith.constant 0.000000e+00 : f32
    %1563 = vector.broadcast %cst_572 : f32 to vector<4x512xf32>
    %1564 = vector.extract_strided_slice %1560 {offsets = [0, 0], sizes = [1, 512], strides = [1, 1]} : vector<8x512xf32> to vector<1x512xf32>
    %1565 = vector.extract_strided_slice %1561 {offsets = [0, 0], sizes = [4, 1], strides = [1, 1]} : vector<4x8xf32> to vector<4x1xf32>
    %1566 = vector.broadcast %1564 : vector<1x512xf32> to vector<4x512xf32>
    %1567 = vector.broadcast %1565 : vector<4x1xf32> to vector<4x512xf32>
    %1568 = arith.mulf %1566, %1567 : vector<4x512xf32>
    %1569 = arith.addf %1563, %1568 : vector<4x512xf32>
    %1570 = vector.extract_strided_slice %1560 {offsets = [1, 0], sizes = [1, 512], strides = [1, 1]} : vector<8x512xf32> to vector<1x512xf32>
    %1571 = vector.extract_strided_slice %1561 {offsets = [0, 1], sizes = [4, 1], strides = [1, 1]} : vector<4x8xf32> to vector<4x1xf32>
    %1572 = vector.broadcast %1570 : vector<1x512xf32> to vector<4x512xf32>
    %1573 = vector.broadcast %1571 : vector<4x1xf32> to vector<4x512xf32>
    %1574 = arith.mulf %1572, %1573 : vector<4x512xf32>
    %1575 = arith.addf %1569, %1574 : vector<4x512xf32>
    %1576 = vector.extract_strided_slice %1560 {offsets = [2, 0], sizes = [1, 512], strides = [1, 1]} : vector<8x512xf32> to vector<1x512xf32>
    %1577 = vector.extract_strided_slice %1561 {offsets = [0, 2], sizes = [4, 1], strides = [1, 1]} : vector<4x8xf32> to vector<4x1xf32>
    %1578 = vector.broadcast %1576 : vector<1x512xf32> to vector<4x512xf32>
    %1579 = vector.broadcast %1577 : vector<4x1xf32> to vector<4x512xf32>
    %1580 = arith.mulf %1578, %1579 : vector<4x512xf32>
    %1581 = arith.addf %1575, %1580 : vector<4x512xf32>
    %1582 = vector.extract_strided_slice %1560 {offsets = [3, 0], sizes = [1, 512], strides = [1, 1]} : vector<8x512xf32> to vector<1x512xf32>
    %1583 = vector.extract_strided_slice %1561 {offsets = [0, 3], sizes = [4, 1], strides = [1, 1]} : vector<4x8xf32> to vector<4x1xf32>
    %1584 = vector.broadcast %1582 : vector<1x512xf32> to vector<4x512xf32>
    %1585 = vector.broadcast %1583 : vector<4x1xf32> to vector<4x512xf32>
    %1586 = arith.mulf %1584, %1585 : vector<4x512xf32>
    %1587 = arith.addf %1581, %1586 : vector<4x512xf32>
    %1588 = vector.extract_strided_slice %1560 {offsets = [4, 0], sizes = [1, 512], strides = [1, 1]} : vector<8x512xf32> to vector<1x512xf32>
    %1589 = vector.extract_strided_slice %1561 {offsets = [0, 4], sizes = [4, 1], strides = [1, 1]} : vector<4x8xf32> to vector<4x1xf32>
    %1590 = vector.broadcast %1588 : vector<1x512xf32> to vector<4x512xf32>
    %1591 = vector.broadcast %1589 : vector<4x1xf32> to vector<4x512xf32>
    %1592 = arith.mulf %1590, %1591 : vector<4x512xf32>
    %1593 = arith.addf %1587, %1592 : vector<4x512xf32>
    %1594 = vector.extract_strided_slice %1560 {offsets = [5, 0], sizes = [1, 512], strides = [1, 1]} : vector<8x512xf32> to vector<1x512xf32>
    %1595 = vector.extract_strided_slice %1561 {offsets = [0, 5], sizes = [4, 1], strides = [1, 1]} : vector<4x8xf32> to vector<4x1xf32>
    %1596 = vector.broadcast %1594 : vector<1x512xf32> to vector<4x512xf32>
    %1597 = vector.broadcast %1595 : vector<4x1xf32> to vector<4x512xf32>
    %1598 = arith.mulf %1596, %1597 : vector<4x512xf32>
    %1599 = arith.addf %1593, %1598 : vector<4x512xf32>
    %1600 = vector.extract_strided_slice %1560 {offsets = [6, 0], sizes = [1, 512], strides = [1, 1]} : vector<8x512xf32> to vector<1x512xf32>
    %1601 = vector.extract_strided_slice %1561 {offsets = [0, 6], sizes = [4, 1], strides = [1, 1]} : vector<4x8xf32> to vector<4x1xf32>
    %1602 = vector.broadcast %1600 : vector<1x512xf32> to vector<4x512xf32>
    %1603 = vector.broadcast %1601 : vector<4x1xf32> to vector<4x512xf32>
    %1604 = arith.mulf %1602, %1603 : vector<4x512xf32>
    %1605 = arith.addf %1599, %1604 : vector<4x512xf32>
    %1606 = vector.extract_strided_slice %1560 {offsets = [7, 0], sizes = [1, 512], strides = [1, 1]} : vector<8x512xf32> to vector<1x512xf32>
    %1607 = vector.extract_strided_slice %1561 {offsets = [0, 7], sizes = [4, 1], strides = [1, 1]} : vector<4x8xf32> to vector<4x1xf32>
    %1608 = vector.broadcast %1606 : vector<1x512xf32> to vector<4x512xf32>
    %1609 = vector.broadcast %1607 : vector<4x1xf32> to vector<4x512xf32>
    %1610 = arith.mulf %1608, %1609 : vector<4x512xf32>
    %1611 = arith.addf %1605, %1610 : vector<4x512xf32>
    %1612 = vector.broadcast %1562 : vector<4x1xf32> to vector<4x512xf32>
    %1613 = arith.addf %1611, %1612 : vector<4x512xf32>
    %c0_573 = arith.constant 0 : index
    %c0_574 = arith.constant 0 : index
    %1614 = vector.load %arg17[%c0_573, %c0_574] : memref<4x1xf32, #tpu.memory_space<vmem>>, vector<4x1xf32>
    %c0_575 = arith.constant 0 : index
    %c0_576 = arith.constant 0 : index
    %1615 = vector.load %arg18[%c0_575, %c0_576] : memref<4x1xf32, #tpu.memory_space<vmem>>, vector<4x1xf32>
    %cst_577 = arith.constant dense<0.000000e+00> : vector<4xf32>
    %1616 = vector.multi_reduction <add>, %1613, %cst_577 [1] : vector<4x512xf32> to vector<4xf32>
    %1617 = vector.shape_cast %1616 : vector<4xf32> to vector<4x1xf32>
    %1618 = arith.mulf %1613, %1613 : vector<4x512xf32>
    %cst_578 = arith.constant dense<0.000000e+00> : vector<4xf32>
    %1619 = vector.multi_reduction <add>, %1618, %cst_578 [1] : vector<4x512xf32> to vector<4xf32>
    %1620 = vector.shape_cast %1619 : vector<4xf32> to vector<4x1xf32>
    %cst_579 = arith.constant 0.001953125 : f32
    %1621 = vector.broadcast %cst_579 : f32 to vector<4x1xf32>
    %1622 = arith.mulf %1617, %1621 : vector<4x1xf32>
    %cst_580 = arith.constant 0.001953125 : f32
    %1623 = vector.broadcast %cst_580 : f32 to vector<4x1xf32>
    %1624 = arith.mulf %1620, %1623 : vector<4x1xf32>
    %1625 = arith.mulf %1622, %1622 : vector<4x1xf32>
    %1626 = arith.subf %1624, %1625 : vector<4x1xf32>
    %cst_581 = arith.constant 9.99999974E-6 : f32
    %1627 = vector.broadcast %cst_581 : f32 to vector<4x1xf32>
    %1628 = arith.addf %1626, %1627 : vector<4x1xf32>
    %1629 = math.rsqrt %1628 : vector<4x1xf32>
    %1630 = arith.mulf %1614, %1629 : vector<4x1xf32>
    %1631 = vector.broadcast %1630 : vector<4x1xf32> to vector<4x512xf32>
    %1632 = arith.mulf %1613, %1631 : vector<4x512xf32>
    %1633 = arith.mulf %1622, %1630 : vector<4x1xf32>
    %1634 = arith.subf %1615, %1633 : vector<4x1xf32>
    %1635 = vector.broadcast %1634 : vector<4x1xf32> to vector<4x512xf32>
    %1636 = arith.addf %1632, %1635 : vector<4x512xf32>
    %1637 = arith.addf %1636, %0 : vector<4x512xf32>
    %cst_582 = arith.constant 0.000000e+00 : f32
    %1638 = vector.broadcast %cst_582 : f32 to vector<4x512xf32>
    %1639 = arith.maximumf %1637, %1638 : vector<4x512xf32>
    %c0_583 = arith.constant 0 : index
    %c0_584 = arith.constant 0 : index
    %1640 = vector.load %arg19[%c0_583, %c0_584] : memref<4x512xf32, #tpu.memory_space<vmem>>, vector<4x512xf32>
    tpu.vector_store %arg19[%c0_583, %c0_584], %1639 {strides = array<i32>} : memref<4x512xf32, #tpu.memory_space<vmem>>, vector<4x512xf32>,
    return
  }
}

</mosaic_0001>

<llo_original>
// kernel: tpu_custom_call.1
$region0: #{tpu_custom_call.1}
  #allocation0 [shape = 'u32[]', space=smem, size = 0x4, offset = 0x4, fixed_abs, tag = 'smem constant byte address 0x4 - core index']
  #allocation1 [shape = 'u32[144,128]{1,0:T(1,128)}', space=vmem, size = 0x12000, scoped, tag = 'internal scratch']
  %s0 = inlined_call_operand.vmem [shape: f32[4,512], index: 0, kind: input, shape index: {}]
  %s1 = inlined_call_operand.vmem [shape: s32[1,512], index: 1, kind: input, shape index: {}]
  %s2 = inlined_call_operand.vmem [shape: s32[1,512], index: 2, kind: input, shape index: {}]
  %s3 = inlined_call_operand.vmem [shape: f32[4,25], index: 3, kind: input, shape index: {}]
  %s4 = inlined_call_operand.vmem [shape: f32[4,1], index: 4, kind: input, shape index: {}]
  %s5 = inlined_call_operand.vmem [shape: f32[4,1], index: 5, kind: input, shape index: {}]
  %s6 = inlined_call_operand.vmem [shape: f32[4,1], index: 6, kind: input, shape index: {}]
  %s7 = inlined_call_operand.vmem [shape: f32[8,4], index: 7, kind: input, shape index: {}]
  %s8 = inlined_call_operand.vmem [shape: f32[8,1], index: 8, kind: input, shape index: {}]
  %s9 = inlined_call_operand.vmem [shape: f32[8,1], index: 9, kind: input, shape index: {}]
  %s10 = inlined_call_operand.vmem [shape: f32[8,1], index: 10, kind: input, shape index: {}]
  %s11 = inlined_call_operand.vmem [shape: f32[8,25], index: 11, kind: input, shape index: {}]
  %s12 = inlined_call_operand.vmem [shape: f32[8,1], index: 12, kind: input, shape index: {}]
  %s13 = inlined_call_operand.vmem [shape: f32[8,1], index: 13, kind: input, shape index: {}]
  %s14 = inlined_call_operand.vmem [shape: f32[8,1], index: 14, kind: input, shape index: {}]
  %s15 = inlined_call_operand.vmem [shape: f32[4,8], index: 15, kind: input, shape index: {}]
  %s16 = inlined_call_operand.vmem [shape: f32[4,1], index: 16, kind: input, shape index: {}]
  %s17 = inlined_call_operand.vmem [shape: f32[4,1], index: 17, kind: input, shape index: {}]
  %s18 = inlined_call_operand.vmem [shape: f32[4,1], index: 18, kind: input, shape index: {}]
  %s19 = inlined_call_operand.hbm [shape: f32[4,512], index: 19, kind: output, shape index: {}]
  %s20 = sld [smem:[#allocation0]]
  $region86: #{tpu_custom_call.1} parent=0
    _
  %s22 = ssub.s32 1, %s20
  %s23 = scalar_select 0, %s22, %s20
  $region1: #{tpu_custom_call.1} parent=0
    #allocation2 [shape = 'u8[8192]{0}', space=vmem, size = 0x2000, scoped, tag = 'output window, operand 0, single buffered']
    #allocation3 [shape = 's32[1]{0}', space=sflag, size = 0x4, scoped, tag = 'scoped memory for tpu_custom_call.1']
    %24 = vsyncpa [#allocation3], 0
    // Predicated region
    $region2: #{tpu_custom_call.1} parent=1 // pred_check
      _
    $region3: #{tpu_custom_call.1} parent=1 // pred_check_branch
      %26 = sbr.rel (0) target = $region5
    $region4: #{tpu_custom_call.1} parent=1 // pred_region
      _
    $region5: #{tpu_custom_call.1} parent=1 // pred_fallthru
      _
    // Predicated region
    $region6: #{tpu_custom_call.1} parent=1 // pred_check
      _
    $region7: #{tpu_custom_call.1} parent=1 // pred_check_branch
      %28 = sbr.rel (0) target = $region9
    $region8: #{tpu_custom_call.1} parent=1 // pred_region
      _
    $region9: #{tpu_custom_call.1} parent=1 // pred_fallthru
      _
    // Predicated region
    $region10: #{tpu_custom_call.1} parent=1 // pred_check
      _
    $region11: #{tpu_custom_call.1} parent=1 // pred_check_branch
      %30 = sbr.rel (0) target = $region13
    $region12: #{tpu_custom_call.1} parent=1 // pred_region
      _
    $region13: #{tpu_custom_call.1} parent=1 // pred_fallthru
      _
    // Predicated region
    $region14: #{tpu_custom_call.1} parent=1 // pred_check
      _
    $region15: #{tpu_custom_call.1} parent=1 // pred_check_branch
      %32 = sbr.rel (0) target = $region17
    $region16: #{tpu_custom_call.1} parent=1 // pred_region
      _
    $region17: #{tpu_custom_call.1} parent=1 // pred_fallthru
      _
    // Predicated region
    $region18: #{tpu_custom_call.1} parent=1 // pred_check
      _
    $region19: #{tpu_custom_call.1} parent=1 // pred_check_branch
      %34 = sbr.rel (0) target = $region21
    $region20: #{tpu_custom_call.1} parent=1 // pred_region
      _
    $region21: #{tpu_custom_call.1} parent=1 // pred_fallthru
      _
    // Predicated region
    $region22: #{tpu_custom_call.1} parent=1 // pred_check
      _
    $region23: #{tpu_custom_call.1} parent=1 // pred_check_branch
      %36 = sbr.rel (0) target = $region25
    $region24: #{tpu_custom_call.1} parent=1 // pred_region
      _
    $region25: #{tpu_custom_call.1} parent=1 // pred_fallthru
      _
    // Predicated region
    $region26: #{tpu_custom_call.1} parent=1 // pred_check
      _
    $region27: #{tpu_custom_call.1} parent=1 // pred_check_branch
      %38 = sbr.rel (0) target = $region29
    $region28: #{tpu_custom_call.1} parent=1 // pred_region
      _
    $region29: #{tpu_custom_call.1} parent=1 // pred_fallthru
      _
    // Predicated region
    $region30: #{tpu_custom_call.1} parent=1 // pred_check
      _
    $region31: #{tpu_custom_call.1} parent=1 // pred_check_branch
      %40 = sbr.rel (0) target = $region33
    $region32: #{tpu_custom_call.1} parent=1 // pred_region
      _
    $region33: #{tpu_custom_call.1} parent=1 // pred_fallthru
      _
    // Predicated region
    $region34: #{tpu_custom_call.1} parent=1 // pred_check
      _
    $region35: #{tpu_custom_call.1} parent=1 // pred_check_branch
      %42 = sbr.rel (0) target = $region37
    $region36: #{tpu_custom_call.1} parent=1 // pred_region
      _
    $region37: #{tpu_custom_call.1} parent=1 // pred_fallthru
      _
    // Predicated region
    $region38: #{tpu_custom_call.1} parent=1 // pred_check
      _
    $region39: #{tpu_custom_call.1} parent=1 // pred_check_branch
      %44 = sbr.rel (0) target = $region41
    $region40: #{tpu_custom_call.1} parent=1 // pred_region
      _
    $region41: #{tpu_custom_call.1} parent=1 // pred_fallthru
      _
    // Predicated region
    $region42: #{tpu_custom_call.1} parent=1 // pred_check
      _
    $region43: #{tpu_custom_call.1} parent=1 // pred_check_branch
      %46 = sbr.rel (0) target = $region45
    $region44: #{tpu_custom_call.1} parent=1 // pred_region
      _
    $region45: #{tpu_custom_call.1} parent=1 // pred_fallthru
      _
    // Predicated region
    $region46: #{tpu_custom_call.1} parent=1 // pred_check
      _
    $region47: #{tpu_custom_call.1} parent=1 // pred_check_branch
      %48 = sbr.rel (0) target = $region49
    $region48: #{tpu_custom_call.1} parent=1 // pred_region
      _
    $region49: #{tpu_custom_call.1} parent=1 // pred_fallthru
      _
    // Predicated region
    $region50: #{tpu_custom_call.1} parent=1 // pred_check
      _
    $region51: #{tpu_custom_call.1} parent=1 // pred_check_branch
      %50 = sbr.rel (0) target = $region53
    $region52: #{tpu_custom_call.1} parent=1 // pred_region
      _
    $region53: #{tpu_custom_call.1} parent=1 // pred_fallthru
      _
    // Predicated region
    $region54: #{tpu_custom_call.1} parent=1 // pred_check
      _
    $region55: #{tpu_custom_call.1} parent=1 // pred_check_branch
      %52 = sbr.rel (0) target = $region57
    $region56: #{tpu_custom_call.1} parent=1 // pred_region
      _
    $region57: #{tpu_custom_call.1} parent=1 // pred_fallthru
      _
    // Predicated region
    $region58: #{tpu_custom_call.1} parent=1 // pred_check
      _
    $region59: #{tpu_custom_call.1} parent=1 // pred_check_branch
      %54 = sbr.rel (0) target = $region61
    $region60: #{tpu_custom_call.1} parent=1 // pred_region
      _
    $region61: #{tpu_custom_call.1} parent=1 // pred_fallthru
      _
    // Predicated region
    $region62: #{tpu_custom_call.1} parent=1 // pred_check
      _
    $region63: #{tpu_custom_call.1} parent=1 // pred_check_branch
      %56 = sbr.rel (0) target = $region65
    $region64: #{tpu_custom_call.1} parent=1 // pred_region
      _
    $region65: #{tpu_custom_call.1} parent=1 // pred_fallthru
      _
    // Predicated region
    $region66: #{tpu_custom_call.1} parent=1 // pred_check
      _
    $region67: #{tpu_custom_call.1} parent=1 // pred_check_branch
      %58 = sbr.rel (0) target = $region69
    $region68: #{tpu_custom_call.1} parent=1 // pred_region
      _
    $region69: #{tpu_custom_call.1} parent=1 // pred_fallthru
      _
    // Predicated region
    $region70: #{tpu_custom_call.1} parent=1 // pred_check
      _
    $region71: #{tpu_custom_call.1} parent=1 // pred_check_branch
      %60 = sbr.rel (0) target = $region73
    $region72: #{tpu_custom_call.1} parent=1 // pred_region
      _
    $region73: #{tpu_custom_call.1} parent=1 // pred_fallthru
      _
    // Predicated region
    $region74: #{tpu_custom_call.1} parent=1 // pred_check
      _
    $region75: #{tpu_custom_call.1} parent=1 // pred_check_branch
      %62 = sbr.rel (0) target = $region77
    $region76: #{tpu_custom_call.1} parent=1 // pred_region
      _
    $region77: #{tpu_custom_call.1} parent=1 // pred_fallthru
      _
    %v63 = vld [vmem:[%s0] sm:$0xff]
    %v64 = vld [vmem:[%s0 + $0x8] sm:$0xff]
    %v65 = vld [vmem:[%s1] sm:$0xf]
    %v66 = vld [vmem:[%s2] sm:$0xf]
    %v67 = vld [vmem:[%s3] sm:$0xf]
    %v68 = vld [vmem:[%s4] sm:$0xf]
    %v71 = vcombine.high %v63, %v63
    %v72 = vcombine.high %v64, %v64
    %75 = vrot.lane.b32.xlu0 %v63, 34
    %v76 = vpop.permute.xlu0 %75
    %77 = vrot.lane.b32.xlu0 %v71, 34
    %v78 = vpop.permute.xlu0 %77
    %79 = vrot.lane.b32.xlu0 %v64, 34
    %v80 = vpop.permute.xlu0 %79
    %81 = vrot.lane.b32.xlu0 %v72, 34
    %v82 = vpop.permute.xlu0 %81
    %v83 = vlaneseq
    %v84 = vand.u32 %v83, 127
    %vm85 = vcmp.lt.s32.totalorder %v84, 34
    %v86 = vsel %vm85, %v80, %v82
    %v87 = vsel %vm85, %v78, %v80
    %v88 = vsel %vm85, %v76, %v78
    %v89 = vsel %vm85, %v82, %v76
    %v90 = vadd.s32 %v65, 4294967294
    %vm91 = vcmp.ge.s32.totalorder %v90, 0
    %vm92 = vcmp.lt.s32.totalorder %v90, 16
    %vm93 = vmand %vm91, %vm92
    %v94 = vadd.s32 %v66, 4294967294
    %vm95 = vcmp.ge.s32.totalorder %v94, 0
    %vm96 = vmand %vm93, %vm95
    %vm97 = vcmp.lt.s32.totalorder %v94, 16
    %vm98 = vmand %vm96, %vm97
    %v99 = vsel %vm98, 1.0, 0.0
    %101 = vset.pattern.permute.xlu0 0
    %102 = vperm.xlu0 %101, %v67
    %v103 = vpop.permute.xlu0 %102
    %v106 = vlaneseq
    %v107 = vshrl.u32 %v106, 7
    %v108 = vsub.s32 0, %v107
    %v109 = vrot.slane %v99, %v108
    %v110 = vlaneseq
    %v111 = vshrl.u32 %v110, 7
    %v112 = vsub.s32 1, %v111
    %v113 = vrot.slane %v99, %v112
    %v114 = vlaneseq
    %v115 = vshrl.u32 %v114, 7
    %v116 = vsub.s32 2, %v115
    %v117 = vrot.slane %v99, %v116
    %v118 = vlaneseq
    %v119 = vshrl.u32 %v118, 7
    %v120 = vsub.s32 3, %v119
    %v121 = vrot.slane %v99, %v120
    %v126 = vmul.f32 %v103, %v109
    %v127 = vmul.f32 %v103, %v113
    %v128 = vmul.f32 %v103, %v117
    %v129 = vmul.f32 %v103, %v121
    %v130 = vmul.f32 %v89, %v126
    %v131 = vmul.f32 %v88, %v127
    %v132 = vmul.f32 %v87, %v128
    %v133 = vmul.f32 %v86, %v129
    %v134 = vadd.f32 %v130, 0.0
    %v135 = vadd.f32 %v131, 0.0
    %v136 = vadd.f32 %v132, 0.0
    %v137 = vadd.f32 %v133, 0.0
    %138 = vrot.lane.b32.xlu0 %v63, 33
    %v139 = vpop.permute.xlu0 %138
    %140 = vrot.lane.b32.xlu0 %v71, 33
    %v141 = vpop.permute.xlu0 %140
    %142 = vrot.lane.b32.xlu0 %v64, 33
    %v143 = vpop.permute.xlu0 %142
    %144 = vrot.lane.b32.xlu0 %v72, 33
    %v145 = vpop.permute.xlu0 %144
    %vm146 = vcmp.lt.s32.totalorder %v84, 33
    %v147 = vsel %vm146, %v143, %v145
    %v148 = vsel %vm146, %v141, %v143
    %v149 = vsel %vm146, %v139, %v141
    %v150 = vsel %vm146, %v145, %v139
    %v151 = vadd.s32 %v66, 4294967295
    %vm152 = vcmp.ge.s32.totalorder %v151, 0
    %vm153 = vmand %vm93, %vm152
    %vm154 = vcmp.lt.s32.totalorder %v151, 16
    %vm155 = vmand %vm153, %vm154
    %v156 = vsel %vm155, 1.0, 0.0
    %157 = vset.pattern.permute.xlu0 1
    %158 = vperm.xlu0 %157, %v67
    %v159 = vpop.permute.xlu0 %158
    %v162 = vlaneseq
    %v163 = vshrl.u32 %v162, 7
    %v164 = vsub.s32 0, %v163
    %v165 = vrot.slane %v156, %v164
    %v166 = vlaneseq
    %v167 = vshrl.u32 %v166, 7
    %v168 = vsub.s32 1, %v167
    %v169 = vrot.slane %v156, %v168
    %v170 = vlaneseq
    %v171 = vshrl.u32 %v170, 7
    %v172 = vsub.s32 2, %v171
    %v173 = vrot.slane %v156, %v172
    %v174 = vlaneseq
    %v175 = vshrl.u32 %v174, 7
    %v176 = vsub.s32 3, %v175
    %v177 = vrot.slane %v156, %v176
    %v182 = vmul.f32 %v159, %v165
    %v183 = vmul.f32 %v159, %v169
    %v184 = vmul.f32 %v159, %v173
    %v185 = vmul.f32 %v159, %v177
    %v186 = vmul.f32 %v150, %v182
    %v187 = vmul.f32 %v149, %v183
    %v188 = vmul.f32 %v148, %v184
    %v189 = vmul.f32 %v147, %v185
    %v190 = vadd.f32 %v134, %v186
    %v191 = vadd.f32 %v135, %v187
    %v192 = vadd.f32 %v136, %v188
    %v193 = vadd.f32 %v137, %v189
    %194 = vrot.lane.b32.xlu0 %v63, 32
    %v195 = vpop.permute.xlu0 %194
    %196 = vrot.lane.b32.xlu0 %v71, 32
    %v197 = vpop.permute.xlu0 %196
    %198 = vrot.lane.b32.xlu0 %v64, 32
    %v199 = vpop.permute.xlu0 %198
    %200 = vrot.lane.b32.xlu0 %v72, 32
    %v201 = vpop.permute.xlu0 %200
    %vm202 = vcmp.lt.s32.totalorder %v84, 32
    %v203 = vsel %vm202, %v199, %v201
    %v204 = vsel %vm202, %v197, %v199
    %v205 = vsel %vm202, %v195, %v197
    %v206 = vsel %vm202, %v201, %v195
    %vm207 = vcmp.ge.s32.totalorder %v66, 0
    %vm208 = vmand %vm93, %vm207
    %vm209 = vcmp.lt.s32.totalorder %v66, 16
    %vm210 = vmand %vm208, %vm209
    %v211 = vsel %vm210, 1.0, 0.0
    %212 = vset.pattern.permute.xlu0 2
    %213 = vperm.xlu0 %212, %v67
    %v214 = vpop.permute.xlu0 %213
    %v217 = vlaneseq
    %v218 = vshrl.u32 %v217, 7
    %v219 = vsub.s32 0, %v218
    %v220 = vrot.slane %v211, %v219
    %v221 = vlaneseq
    %v222 = vshrl.u32 %v221, 7
    %v223 = vsub.s32 1, %v222
    %v224 = vrot.slane %v211, %v223
    %v225 = vlaneseq
    %v226 = vshrl.u32 %v225, 7
    %v227 = vsub.s32 2, %v226
    %v228 = vrot.slane %v211, %v227
    %v229 = vlaneseq
    %v230 = vshrl.u32 %v229, 7
    %v231 = vsub.s32 3, %v230
    %v232 = vrot.slane %v211, %v231
    %v237 = vmul.f32 %v214, %v220
    %v238 = vmul.f32 %v214, %v224
    %v239 = vmul.f32 %v214, %v228
    %v240 = vmul.f32 %v214, %v232
    %v241 = vmul.f32 %v206, %v237
    %v242 = vmul.f32 %v205, %v238
    %v243 = vmul.f32 %v204, %v239
    %v244 = vmul.f32 %v203, %v240
    %v245 = vadd.f32 %v190, %v241
    %v246 = vadd.f32 %v191, %v242
    %v247 = vadd.f32 %v192, %v243
    %v248 = vadd.f32 %v193, %v244
    %249 = vrot.lane.b32.xlu0 %v63, 31
    %v250 = vpop.permute.xlu0 %249
    %251 = vrot.lane.b32.xlu0 %v71, 31
    %v252 = vpop.permute.xlu0 %251
    %253 = vrot.lane.b32.xlu0 %v64, 31
    %v254 = vpop.permute.xlu0 %253
    %255 = vrot.lane.b32.xlu0 %v72, 31
    %v256 = vpop.permute.xlu0 %255
    %vm257 = vcmp.lt.s32.totalorder %v84, 31
    %v258 = vsel %vm257, %v254, %v256
    %v259 = vsel %vm257, %v252, %v254
    %v260 = vsel %vm257, %v250, %v252
    %v261 = vsel %vm257, %v256, %v250
    %v262 = vadd.s32 %v66, 1
    %vm263 = vcmp.ge.s32.totalorder %v262, 0
    %vm264 = vmand %vm93, %vm263
    %vm265 = vcmp.lt.s32.totalorder %v262, 16
    %vm266 = vmand %vm264, %vm265
    %v267 = vsel %vm266, 1.0, 0.0
    %268 = vset.pattern.permute.xlu0 3
    %269 = vperm.xlu0 %268, %v67
    %v270 = vpop.permute.xlu0 %269
    %v273 = vlaneseq
    %v274 = vshrl.u32 %v273, 7
    %v275 = vsub.s32 0, %v274
    %v276 = vrot.slane %v267, %v275
    %v277 = vlaneseq
    %v278 = vshrl.u32 %v277, 7
    %v279 = vsub.s32 1, %v278
    %v280 = vrot.slane %v267, %v279
    %v281 = vlaneseq
    %v282 = vshrl.u32 %v281, 7
    %v283 = vsub.s32 2, %v282
    %v284 = vrot.slane %v267, %v283
    %v285 = vlaneseq
    %v286 = vshrl.u32 %v285, 7
    %v287 = vsub.s32 3, %v286
    %v288 = vrot.slane %v267, %v287
    %v293 = vmul.f32 %v270, %v276
    %v294 = vmul.f32 %v270, %v280
    %v295 = vmul.f32 %v270, %v284
    %v296 = vmul.f32 %v270, %v288
    %v297 = vmul.f32 %v261, %v293
    %v298 = vmul.f32 %v260, %v294
    %v299 = vmul.f32 %v259, %v295
    %v300 = vmul.f32 %v258, %v296
    %v301 = vadd.f32 %v245, %v297
    %v302 = vadd.f32 %v246, %v298
    %v303 = vadd.f32 %v247, %v299
    %v304 = vadd.f32 %v248, %v300
    %305 = vrot.lane.b32.xlu0 %v63, 30
    %v306 = vpop.permute.xlu0 %305
    %307 = vrot.lane.b32.xlu0 %v71, 30
    %v308 = vpop.permute.xlu0 %307
    %309 = vrot.lane.b32.xlu0 %v64, 30
    %v310 = vpop.permute.xlu0 %309
    %311 = vrot.lane.b32.xlu0 %v72, 30
    %v312 = vpop.permute.xlu0 %311
    %vm313 = vcmp.lt.s32.totalorder %v84, 30
    %v314 = vsel %vm313, %v310, %v312
    %v315 = vsel %vm313, %v308, %v310
    %v316 = vsel %vm313, %v306, %v308
    %v317 = vsel %vm313, %v312, %v306
    %v318 = vadd.s32 %v66, 2
    %vm319 = vcmp.ge.s32.totalorder %v318, 0
    %vm320 = vmand %vm93, %vm319
    %vm321 = vcmp.lt.s32.totalorder %v318, 16
    %vm322 = vmand %vm320, %vm321
    %v323 = vsel %vm322, 1.0, 0.0
    %324 = vset.pattern.permute.xlu0 4
    %325 = vperm.xlu0 %324, %v67
    %v326 = vpop.permute.xlu0 %325
    %v329 = vlaneseq
    %v330 = vshrl.u32 %v329, 7
    %v331 = vsub.s32 0, %v330
    %v332 = vrot.slane %v323, %v331
    %v333 = vlaneseq
    %v334 = vshrl.u32 %v333, 7
    %v335 = vsub.s32 1, %v334
    %v336 = vrot.slane %v323, %v335
    %v337 = vlaneseq
    %v338 = vshrl.u32 %v337, 7
    %v339 = vsub.s32 2, %v338
    %v340 = vrot.slane %v323, %v339
    %v341 = vlaneseq
    %v342 = vshrl.u32 %v341, 7
    %v343 = vsub.s32 3, %v342
    %v344 = vrot.slane %v323, %v343
    %v349 = vmul.f32 %v326, %v332
    %v350 = vmul.f32 %v326, %v336
    %v351 = vmul.f32 %v326, %v340
    %v352 = vmul.f32 %v326, %v344
    %v353 = vmul.f32 %v317, %v349
    %v354 = vmul.f32 %v316, %v350
    %v355 = vmul.f32 %v315, %v351
    %v356 = vmul.f32 %v314, %v352
    %v357 = vadd.f32 %v301, %v353
    %v358 = vadd.f32 %v302, %v354
    %v359 = vadd.f32 %v303, %v355
    %v360 = vadd.f32 %v304, %v356
    %361 = vrot.lane.b32.xlu0 %v63, 18
    %v362 = vpop.permute.xlu0 %361
    %363 = vrot.lane.b32.xlu0 %v71, 18
    %v364 = vpop.permute.xlu0 %363
    %365 = vrot.lane.b32.xlu0 %v64, 18
    %v366 = vpop.permute.xlu0 %365
    %367 = vrot.lane.b32.xlu0 %v72, 18
    %v368 = vpop.permute.xlu0 %367
    %vm369 = vcmp.lt.s32.totalorder %v84, 18
    %v370 = vsel %vm369, %v366, %v368
    %v371 = vsel %vm369, %v364, %v366
    %v372 = vsel %vm369, %v362, %v364
    %v373 = vsel %vm369, %v368, %v362
    %v374 = vadd.s32 %v65, 4294967295
    %vm375 = vcmp.ge.s32.totalorder %v374, 0
    %vm376 = vcmp.lt.s32.totalorder %v374, 16
    %vm377 = vmand %vm375, %vm376
    %vm378 = vmand %vm377, %vm95
    %vm379 = vmand %vm378, %vm97
    %v380 = vsel %vm379, 1.0, 0.0
    %381 = vset.pattern.permute.xlu0 5
    %382 = vperm.xlu0 %381, %v67
    %v383 = vpop.permute.xlu0 %382
    %v386 = vlaneseq
    %v387 = vshrl.u32 %v386, 7
    %v388 = vsub.s32 0, %v387
    %v389 = vrot.slane %v380, %v388
    %v390 = vlaneseq
    %v391 = vshrl.u32 %v390, 7
    %v392 = vsub.s32 1, %v391
    %v393 = vrot.slane %v380, %v392
    %v394 = vlaneseq
    %v395 = vshrl.u32 %v394, 7
    %v396 = vsub.s32 2, %v395
    %v397 = vrot.slane %v380, %v396
    %v398 = vlaneseq
    %v399 = vshrl.u32 %v398, 7
    %v400 = vsub.s32 3, %v399
    %v401 = vrot.slane %v380, %v400
    %v406 = vmul.f32 %v383, %v389
    %v407 = vmul.f32 %v383, %v393
    %v408 = vmul.f32 %v383, %v397
    %v409 = vmul.f32 %v383, %v401
    %v410 = vmul.f32 %v373, %v406
    %v411 = vmul.f32 %v372, %v407
    %v412 = vmul.f32 %v371, %v408
    %v413 = vmul.f32 %v370, %v409
    %v414 = vadd.f32 %v357, %v410
    %v415 = vadd.f32 %v358, %v411
    %v416 = vadd.f32 %v359, %v412
    %v417 = vadd.f32 %v360, %v413
    %418 = vrot.lane.b32.xlu0 %v63, 17
    %v419 = vpop.permute.xlu0 %418
    %420 = vrot.lane.b32.xlu0 %v71, 17
    %v421 = vpop.permute.xlu0 %420
    %422 = vrot.lane.b32.xlu0 %v64, 17
    %v423 = vpop.permute.xlu0 %422
    %424 = vrot.lane.b32.xlu0 %v72, 17
    %v425 = vpop.permute.xlu0 %424
    %vm426 = vcmp.lt.s32.totalorder %v84, 17
    %v427 = vsel %vm426, %v423, %v425
    %v428 = vsel %vm426, %v421, %v423
    %v429 = vsel %vm426, %v419, %v421
    %v430 = vsel %vm426, %v425, %v419
    %vm431 = vmand %vm377, %vm152
    %vm432 = vmand %vm431, %vm154
    %v433 = vsel %vm432, 1.0, 0.0
    %434 = vset.pattern.permute.xlu0 6
    %435 = vperm.xlu0 %434, %v67
    %v436 = vpop.permute.xlu0 %435
    %v439 = vlaneseq
    %v440 = vshrl.u32 %v439, 7
    %v441 = vsub.s32 0, %v440
    %v442 = vrot.slane %v433, %v441
    %v443 = vlaneseq
    %v444 = vshrl.u32 %v443, 7
    %v445 = vsub.s32 1, %v444
    %v446 = vrot.slane %v433, %v445
    %v447 = vlaneseq
    %v448 = vshrl.u32 %v447, 7
    %v449 = vsub.s32 2, %v448
    %v450 = vrot.slane %v433, %v449
    %v451 = vlaneseq
    %v452 = vshrl.u32 %v451, 7
    %v453 = vsub.s32 3, %v452
    %v454 = vrot.slane %v433, %v453
    %v459 = vmul.f32 %v436, %v442
    %v460 = vmul.f32 %v436, %v446
    %v461 = vmul.f32 %v436, %v450
    %v462 = vmul.f32 %v436, %v454
    %v463 = vmul.f32 %v430, %v459
    %v464 = vmul.f32 %v429, %v460
    %v465 = vmul.f32 %v428, %v461
    %v466 = vmul.f32 %v427, %v462
    %v467 = vadd.f32 %v414, %v463
    %v468 = vadd.f32 %v415, %v464
    %v469 = vadd.f32 %v416, %v465
    %v470 = vadd.f32 %v417, %v466
    %471 = vrot.lane.b32.xlu0 %v63, 16
    %v472 = vpop.permute.xlu0 %471
    %473 = vrot.lane.b32.xlu0 %v71, 16
    %v474 = vpop.permute.xlu0 %473
    %475 = vrot.lane.b32.xlu0 %v64, 16
    %v476 = vpop.permute.xlu0 %475
    %477 = vrot.lane.b32.xlu0 %v72, 16
    %v478 = vpop.permute.xlu0 %477
    %vm479 = vcmp.lt.s32.totalorder %v84, 16
    %v480 = vsel %vm479, %v476, %v478
    %v481 = vsel %vm479, %v474, %v476
    %v482 = vsel %vm479, %v472, %v474
    %v483 = vsel %vm479, %v478, %v472
    %vm484 = vmand %vm377, %vm207
    %vm485 = vmand %vm484, %vm209
    %v486 = vsel %vm485, 1.0, 0.0
    %487 = vset.pattern.permute.xlu0 7
    %488 = vperm.xlu0 %487, %v67
    %v489 = vpop.permute.xlu0 %488
    %v492 = vlaneseq
    %v493 = vshrl.u32 %v492, 7
    %v494 = vsub.s32 0, %v493
    %v495 = vrot.slane %v486, %v494
    %v496 = vlaneseq
    %v497 = vshrl.u32 %v496, 7
    %v498 = vsub.s32 1, %v497
    %v499 = vrot.slane %v486, %v498
    %v500 = vlaneseq
    %v501 = vshrl.u32 %v500, 7
    %v502 = vsub.s32 2, %v501
    %v503 = vrot.slane %v486, %v502
    %v504 = vlaneseq
    %v505 = vshrl.u32 %v504, 7
    %v506 = vsub.s32 3, %v505
    %v507 = vrot.slane %v486, %v506
    %v512 = vmul.f32 %v489, %v495
    %v513 = vmul.f32 %v489, %v499
    %v514 = vmul.f32 %v489, %v503
    %v515 = vmul.f32 %v489, %v507
    %v516 = vmul.f32 %v483, %v512
    %v517 = vmul.f32 %v482, %v513
    %v518 = vmul.f32 %v481, %v514
    %v519 = vmul.f32 %v480, %v515
    %v520 = vadd.f32 %v467, %v516
    %v521 = vadd.f32 %v468, %v517
    %v522 = vadd.f32 %v469, %v518
    %v523 = vadd.f32 %v470, %v519
    %524 = vrot.lane.b32.xlu0 %v63, 15
    %v525 = vpop.permute.xlu0 %524
    %526 = vrot.lane.b32.xlu0 %v71, 15
    %v527 = vpop.permute.xlu0 %526
    %528 = vrot.lane.b32.xlu0 %v64, 15
    %v529 = vpop.permute.xlu0 %528
    %530 = vrot.lane.b32.xlu0 %v72, 15
    %v531 = vpop.permute.xlu0 %530
    %vm532 = vcmp.lt.s32.totalorder %v84, 15
    %v533 = vsel %vm532, %v529, %v531
    %v534 = vsel %vm532, %v527, %v529
    %v535 = vsel %vm532, %v525, %v527
    %v536 = vsel %vm532, %v531, %v525
    %vm537 = vmand %vm377, %vm263
    %vm538 = vmand %vm537, %vm265
    %v539 = vsel %vm538, 1.0, 0.0
    %540 = vset.pattern.permute.xlu0 8
    %541 = vperm.xlu0 %540, %v67
    %v542 = vpop.permute.xlu0 %541
    %v545 = vlaneseq
    %v546 = vshrl.u32 %v545, 7
    %v547 = vsub.s32 0, %v546
    %v548 = vrot.slane %v539, %v547
    %v549 = vlaneseq
    %v550 = vshrl.u32 %v549, 7
    %v551 = vsub.s32 1, %v550
    %v552 = vrot.slane %v539, %v551
    %v553 = vlaneseq
    %v554 = vshrl.u32 %v553, 7
    %v555 = vsub.s32 2, %v554
    %v556 = vrot.slane %v539, %v555
    %v557 = vlaneseq
    %v558 = vshrl.u32 %v557, 7
    %v559 = vsub.s32 3, %v558
    %v560 = vrot.slane %v539, %v559
    %v565 = vmul.f32 %v542, %v548
    %v566 = vmul.f32 %v542, %v552
    %v567 = vmul.f32 %v542, %v556
    %v568 = vmul.f32 %v542, %v560
    %v569 = vmul.f32 %v536, %v565
    %v570 = vmul.f32 %v535, %v566
    %v571 = vmul.f32 %v534, %v567
    %v572 = vmul.f32 %v533, %v568
    %v573 = vadd.f32 %v520, %v569
    %v574 = vadd.f32 %v521, %v570
    %v575 = vadd.f32 %v522, %v571
    %v576 = vadd.f32 %v523, %v572
    %577 = vrot.lane.b32.xlu0 %v63, 14
    %v578 = vpop.permute.xlu0 %577
    %579 = vrot.lane.b32.xlu0 %v71, 14
    %v580 = vpop.permute.xlu0 %579
    %581 = vrot.lane.b32.xlu0 %v64, 14
    %v582 = vpop.permute.xlu0 %581
    %583 = vrot.lane.b32.xlu0 %v72, 14
    %v584 = vpop.permute.xlu0 %583
    %vm585 = vcmp.lt.s32.totalorder %v84, 14
    %v586 = vsel %vm585, %v582, %v584
    %v587 = vsel %vm585, %v580, %v582
    %v588 = vsel %vm585, %v578, %v580
    %v589 = vsel %vm585, %v584, %v578
    %vm590 = vmand %vm377, %vm319
    %vm591 = vmand %vm590, %vm321
    %v592 = vsel %vm591, 1.0, 0.0
    %593 = vset.pattern.permute.xlu0 9
    %594 = vperm.xlu0 %593, %v67
    %v595 = vpop.permute.xlu0 %594
    %v598 = vlaneseq
    %v599 = vshrl.u32 %v598, 7
    %v600 = vsub.s32 0, %v599
    %v601 = vrot.slane %v592, %v600
    %v602 = vlaneseq
    %v603 = vshrl.u32 %v602, 7
    %v604 = vsub.s32 1, %v603
    %v605 = vrot.slane %v592, %v604
    %v606 = vlaneseq
    %v607 = vshrl.u32 %v606, 7
    %v608 = vsub.s32 2, %v607
    %v609 = vrot.slane %v592, %v608
    %v610 = vlaneseq
    %v611 = vshrl.u32 %v610, 7
    %v612 = vsub.s32 3, %v611
    %v613 = vrot.slane %v592, %v612
    %v618 = vmul.f32 %v595, %v601
    %v619 = vmul.f32 %v595, %v605
    %v620 = vmul.f32 %v595, %v609
    %v621 = vmul.f32 %v595, %v613
    %v622 = vmul.f32 %v589, %v618
    %v623 = vmul.f32 %v588, %v619
    %v624 = vmul.f32 %v587, %v620
    %v625 = vmul.f32 %v586, %v621
    %v626 = vadd.f32 %v573, %v622
    %v627 = vadd.f32 %v574, %v623
    %v628 = vadd.f32 %v575, %v624
    %v629 = vadd.f32 %v576, %v625
    %630 = vrot.lane.b32.xlu0 %v63, 2
    %v631 = vpop.permute.xlu0 %630
    %632 = vrot.lane.b32.xlu0 %v71, 2
    %v633 = vpop.permute.xlu0 %632
    %634 = vrot.lane.b32.xlu0 %v64, 2
    %v635 = vpop.permute.xlu0 %634
    %636 = vrot.lane.b32.xlu0 %v72, 2
    %v637 = vpop.permute.xlu0 %636
    %vm638 = vcmp.lt.s32.totalorder %v84, 2
    %v639 = vsel %vm638, %v635, %v637
    %v640 = vsel %vm638, %v633, %v635
    %v641 = vsel %vm638, %v631, %v633
    %v642 = vsel %vm638, %v637, %v631
    %vm643 = vcmp.ge.s32.totalorder %v65, 0
    %vm644 = vcmp.lt.s32.totalorder %v65, 16
    %vm645 = vmand %vm643, %vm644
    %vm646 = vmand %vm645, %vm95
    %vm647 = vmand %vm646, %vm97
    %v648 = vsel %vm647, 1.0, 0.0
    %649 = vset.pattern.permute.xlu0 10
    %650 = vperm.xlu0 %649, %v67
    %v651 = vpop.permute.xlu0 %650
    %v654 = vlaneseq
    %v655 = vshrl.u32 %v654, 7
    %v656 = vsub.s32 0, %v655
    %v657 = vrot.slane %v648, %v656
    %v658 = vlaneseq
    %v659 = vshrl.u32 %v658, 7
    %v660 = vsub.s32 1, %v659
    %v661 = vrot.slane %v648, %v660
    %v662 = vlaneseq
    %v663 = vshrl.u32 %v662, 7
    %v664 = vsub.s32 2, %v663
    %v665 = vrot.slane %v648, %v664
    %v666 = vlaneseq
    %v667 = vshrl.u32 %v666, 7
    %v668 = vsub.s32 3, %v667
    %v669 = vrot.slane %v648, %v668
    %v674 = vmul.f32 %v651, %v657
    %v675 = vmul.f32 %v651, %v661
    %v676 = vmul.f32 %v651, %v665
    %v677 = vmul.f32 %v651, %v669
    %v678 = vmul.f32 %v642, %v674
    %v679 = vmul.f32 %v641, %v675
    %v680 = vmul.f32 %v640, %v676
    %v681 = vmul.f32 %v639, %v677
    %v682 = vadd.f32 %v626, %v678
    %v683 = vadd.f32 %v627, %v679
    %v684 = vadd.f32 %v628, %v680
    %v685 = vadd.f32 %v629, %v681
    %686 = vrot.lane.b32.xlu0 %v63, 1
    %v687 = vpop.permute.xlu0 %686
    %688 = vrot.lane.b32.xlu0 %v71, 1
    %v689 = vpop.permute.xlu0 %688
    %690 = vrot.lane.b32.xlu0 %v64, 1
    %v691 = vpop.permute.xlu0 %690
    %692 = vrot.lane.b32.xlu0 %v72, 1
    %v693 = vpop.permute.xlu0 %692
    %vm694 = vcmp.lt.s32.totalorder %v84, 1
    %v695 = vsel %vm694, %v691, %v693
    %v696 = vsel %vm694, %v689, %v691
    %v697 = vsel %vm694, %v687, %v689
    %v698 = vsel %vm694, %v693, %v687
    %vm699 = vmand %vm645, %vm152
    %vm700 = vmand %vm699, %vm154
    %v701 = vsel %vm700, 1.0, 0.0
    %702 = vset.pattern.permute.xlu0 11
    %703 = vperm.xlu0 %702, %v67
    %v704 = vpop.permute.xlu0 %703
    %v707 = vlaneseq
    %v708 = vshrl.u32 %v707, 7
    %v709 = vsub.s32 0, %v708
    %v710 = vrot.slane %v701, %v709
    %v711 = vlaneseq
    %v712 = vshrl.u32 %v711, 7
    %v713 = vsub.s32 1, %v712
    %v714 = vrot.slane %v701, %v713
    %v715 = vlaneseq
    %v716 = vshrl.u32 %v715, 7
    %v717 = vsub.s32 2, %v716
    %v718 = vrot.slane %v701, %v717
    %v719 = vlaneseq
    %v720 = vshrl.u32 %v719, 7
    %v721 = vsub.s32 3, %v720
    %v722 = vrot.slane %v701, %v721
    %v727 = vmul.f32 %v704, %v710
    %v728 = vmul.f32 %v704, %v714
    %v729 = vmul.f32 %v704, %v718
    %v730 = vmul.f32 %v704, %v722
    %v731 = vmul.f32 %v698, %v727
    %v732 = vmul.f32 %v697, %v728
    %v733 = vmul.f32 %v696, %v729
    %v734 = vmul.f32 %v695, %v730
    %v735 = vadd.f32 %v682, %v731
    %v736 = vadd.f32 %v683, %v732
    %v737 = vadd.f32 %v684, %v733
    %v738 = vadd.f32 %v685, %v734
    %vm739 = vmand %vm645, %vm207
    %vm740 = vmand %vm739, %vm209
    %v741 = vsel %vm740, 1.0, 0.0
    %742 = vset.pattern.permute.xlu0 12
    %743 = vperm.xlu0 %742, %v67
    %v744 = vpop.permute.xlu0 %743
    %v747 = vlaneseq
    %v748 = vshrl.u32 %v747, 7
    %v749 = vsub.s32 0, %v748
    %v750 = vrot.slane %v741, %v749
    %v751 = vlaneseq
    %v752 = vshrl.u32 %v751, 7
    %v753 = vsub.s32 1, %v752
    %v754 = vrot.slane %v741, %v753
    %v755 = vlaneseq
    %v756 = vshrl.u32 %v755, 7
    %v757 = vsub.s32 2, %v756
    %v758 = vrot.slane %v741, %v757
    %v759 = vlaneseq
    %v760 = vshrl.u32 %v759, 7
    %v761 = vsub.s32 3, %v760
    %v762 = vrot.slane %v741, %v761
    %v767 = vmul.f32 %v744, %v750
    %v768 = vmul.f32 %v744, %v754
    %v769 = vmul.f32 %v744, %v758
    %v770 = vmul.f32 %v744, %v762
    %v775 = vcombine.low %v767, %v768
    %v776 = vcombine.low %v769, %v770
    %v779 = vmul.f32 %v63, %v775
    %v780 = vmul.f32 %v64, %v776
    %v783 = vcombine.high %v779, %v779
    %v784 = vcombine.high %v780, %v780
    %v787 = vadd.f32 %v735, %v779
    %v788 = vadd.f32 %v736, %v783
    %v789 = vadd.f32 %v737, %v780
    %v790 = vadd.f32 %v738, %v784
    %791 = vrot.lane.b32.xlu0 %v63, 127
    %v792 = vpop.permute.xlu0 %791
    %793 = vrot.lane.b32.xlu0 %v71, 127
    %v794 = vpop.permute.xlu0 %793
    %795 = vrot.lane.b32.xlu0 %v64, 127
    %v796 = vpop.permute.xlu0 %795
    %797 = vrot.lane.b32.xlu0 %v72, 127
    %v798 = vpop.permute.xlu0 %797
    %vm799 = vcmp.lt.s32.totalorder %v84, 127
    %v800 = vsel %vm799, %v796, %v798
    %v801 = vsel %vm799, %v794, %v796
    %v802 = vsel %vm799, %v792, %v794
    %v803 = vsel %vm799, %v798, %v792
    %vm804 = vmand %vm645, %vm263
    %vm805 = vmand %vm804, %vm265
    %v806 = vsel %vm805, 1.0, 0.0
    %807 = vset.pattern.permute.xlu0 13
    %808 = vperm.xlu0 %807, %v67
    %v809 = vpop.permute.xlu0 %808
    %v812 = vlaneseq
    %v813 = vshrl.u32 %v812, 7
    %v814 = vsub.s32 0, %v813
    %v815 = vrot.slane %v806, %v814
    %v816 = vlaneseq
    %v817 = vshrl.u32 %v816, 7
    %v818 = vsub.s32 1, %v817
    %v819 = vrot.slane %v806, %v818
    %v820 = vlaneseq
    %v821 = vshrl.u32 %v820, 7
    %v822 = vsub.s32 2, %v821
    %v823 = vrot.slane %v806, %v822
    %v824 = vlaneseq
    %v825 = vshrl.u32 %v824, 7
    %v826 = vsub.s32 3, %v825
    %v827 = vrot.slane %v806, %v826
    %v832 = vmul.f32 %v809, %v815
    %v833 = vmul.f32 %v809, %v819
    %v834 = vmul.f32 %v809, %v823
    %v835 = vmul.f32 %v809, %v827
    %v836 = vmul.f32 %v802, %v832
    %v837 = vmul.f32 %v801, %v833
    %v838 = vmul.f32 %v800, %v834
    %v839 = vmul.f32 %v803, %v835
    %v840 = vadd.f32 %v787, %v836
    %v841 = vadd.f32 %v788, %v837
    %v842 = vadd.f32 %v789, %v838
    %v843 = vadd.f32 %v790, %v839
    %844 = vrot.lane.b32.xlu0 %v63, 126
    %v845 = vpop.permute.xlu0 %844
    %846 = vrot.lane.b32.xlu0 %v71, 126
    %v847 = vpop.permute.xlu0 %846
    %848 = vrot.lane.b32.xlu0 %v64, 126
    %v849 = vpop.permute.xlu0 %848
    %850 = vrot.lane.b32.xlu0 %v72, 126
    %v851 = vpop.permute.xlu0 %850
    %vm852 = vcmp.lt.s32.totalorder %v84, 126
    %v853 = vsel %vm852, %v849, %v851
    %v854 = vsel %vm852, %v847, %v849
    %v855 = vsel %vm852, %v845, %v847
    %v856 = vsel %vm852, %v851, %v845
    %vm857 = vmand %vm645, %vm319
    %vm858 = vmand %vm857, %vm321
    %v859 = vsel %vm858, 1.0, 0.0
    %860 = vset.pattern.permute.xlu0 14
    %861 = vperm.xlu0 %860, %v67
    %v862 = vpop.permute.xlu0 %861
    %v865 = vlaneseq
    %v866 = vshrl.u32 %v865, 7
    %v867 = vsub.s32 0, %v866
    %v868 = vrot.slane %v859, %v867
    %v869 = vlaneseq
    %v870 = vshrl.u32 %v869, 7
    %v871 = vsub.s32 1, %v870
    %v872 = vrot.slane %v859, %v871
    %v873 = vlaneseq
    %v874 = vshrl.u32 %v873, 7
    %v875 = vsub.s32 2, %v874
    %v876 = vrot.slane %v859, %v875
    %v877 = vlaneseq
    %v878 = vshrl.u32 %v877, 7
    %v879 = vsub.s32 3, %v878
    %v880 = vrot.slane %v859, %v879
    %v885 = vmul.f32 %v862, %v868
    %v886 = vmul.f32 %v862, %v872
    %v887 = vmul.f32 %v862, %v876
    %v888 = vmul.f32 %v862, %v880
    %v889 = vmul.f32 %v855, %v885
    %v890 = vmul.f32 %v854, %v886
    %v891 = vmul.f32 %v853, %v887
    %v892 = vmul.f32 %v856, %v888
    %v893 = vadd.f32 %v840, %v889
    %v894 = vadd.f32 %v841, %v890
    %v895 = vadd.f32 %v842, %v891
    %v896 = vadd.f32 %v843, %v892
    %897 = vrot.lane.b32.xlu0 %v63, 114
    %v898 = vpop.permute.xlu0 %897
    %899 = vrot.lane.b32.xlu0 %v71, 114
    %v900 = vpop.permute.xlu0 %899
    %901 = vrot.lane.b32.xlu0 %v64, 114
    %v902 = vpop.permute.xlu0 %901
    %903 = vrot.lane.b32.xlu0 %v72, 114
    %v904 = vpop.permute.xlu0 %903
    %vm905 = vcmp.lt.s32.totalorder %v84, 114
    %v906 = vsel %vm905, %v902, %v904
    %v907 = vsel %vm905, %v900, %v902
    %v908 = vsel %vm905, %v898, %v900
    %v909 = vsel %vm905, %v904, %v898
    %v910 = vadd.s32 %v65, 1
    %vm911 = vcmp.ge.s32.totalorder %v910, 0
    %vm912 = vcmp.lt.s32.totalorder %v910, 16
    %vm913 = vmand %vm911, %vm912
    %vm914 = vmand %vm913, %vm95
    %vm915 = vmand %vm914, %vm97
    %v916 = vsel %vm915, 1.0, 0.0
    %917 = vset.pattern.permute.xlu0 15
    %918 = vperm.xlu0 %917, %v67
    %v919 = vpop.permute.xlu0 %918
    %v922 = vlaneseq
    %v923 = vshrl.u32 %v922, 7
    %v924 = vsub.s32 0, %v923
    %v925 = vrot.slane %v916, %v924
    %v926 = vlaneseq
    %v927 = vshrl.u32 %v926, 7
    %v928 = vsub.s32 1, %v927
    %v929 = vrot.slane %v916, %v928
    %v930 = vlaneseq
    %v931 = vshrl.u32 %v930, 7
    %v932 = vsub.s32 2, %v931
    %v933 = vrot.slane %v916, %v932
    %v934 = vlaneseq
    %v935 = vshrl.u32 %v934, 7
    %v936 = vsub.s32 3, %v935
    %v937 = vrot.slane %v916, %v936
    %v942 = vmul.f32 %v919, %v925
    %v943 = vmul.f32 %v919, %v929
    %v944 = vmul.f32 %v919, %v933
    %v945 = vmul.f32 %v919, %v937
    %v946 = vmul.f32 %v908, %v942
    %v947 = vmul.f32 %v907, %v943
    %v948 = vmul.f32 %v906, %v944
    %v949 = vmul.f32 %v909, %v945
    %v950 = vadd.f32 %v893, %v946
    %v951 = vadd.f32 %v894, %v947
    %v952 = vadd.f32 %v895, %v948
    %v953 = vadd.f32 %v896, %v949
    %954 = vrot.lane.b32.xlu0 %v63, 113
    %v955 = vpop.permute.xlu0 %954
    %956 = vrot.lane.b32.xlu0 %v71, 113
    %v957 = vpop.permute.xlu0 %956
    %958 = vrot.lane.b32.xlu0 %v64, 113
    %v959 = vpop.permute.xlu0 %958
    %960 = vrot.lane.b32.xlu0 %v72, 113
    %v961 = vpop.permute.xlu0 %960
    %vm962 = vcmp.lt.s32.totalorder %v84, 113
    %v963 = vsel %vm962, %v959, %v961
    %v964 = vsel %vm962, %v957, %v959
    %v965 = vsel %vm962, %v955, %v957
    %v966 = vsel %vm962, %v961, %v955
    %vm967 = vmand %vm913, %vm152
    %vm968 = vmand %vm967, %vm154
    %v969 = vsel %vm968, 1.0, 0.0
    %970 = vset.pattern.permute.xlu0 16
    %971 = vperm.xlu0 %970, %v67
    %v972 = vpop.permute.xlu0 %971
    %v975 = vlaneseq
    %v976 = vshrl.u32 %v975, 7
    %v977 = vsub.s32 0, %v976
    %v978 = vrot.slane %v969, %v977
    %v979 = vlaneseq
    %v980 = vshrl.u32 %v979, 7
    %v981 = vsub.s32 1, %v980
    %v982 = vrot.slane %v969, %v981
    %v983 = vlaneseq
    %v984 = vshrl.u32 %v983, 7
    %v985 = vsub.s32 2, %v984
    %v986 = vrot.slane %v969, %v985
    %v987 = vlaneseq
    %v988 = vshrl.u32 %v987, 7
    %v989 = vsub.s32 3, %v988
    %v990 = vrot.slane %v969, %v989
    %v995 = vmul.f32 %v972, %v978
    %v996 = vmul.f32 %v972, %v982
    %v997 = vmul.f32 %v972, %v986
    %v998 = vmul.f32 %v972, %v990
    %v999 = vmul.f32 %v965, %v995
    %v1000 = vmul.f32 %v964, %v996
    %v1001 = vmul.f32 %v963, %v997
    %v1002 = vmul.f32 %v966, %v998
    %v1003 = vadd.f32 %v950, %v999
    %v1004 = vadd.f32 %v951, %v1000
    %v1005 = vadd.f32 %v952, %v1001
    %v1006 = vadd.f32 %v953, %v1002
    %1007 = vrot.lane.b32.xlu0 %v63, 112
    %v1008 = vpop.permute.xlu0 %1007
    %1009 = vrot.lane.b32.xlu0 %v71, 112
    %v1010 = vpop.permute.xlu0 %1009
    %1011 = vrot.lane.b32.xlu0 %v64, 112
    %v1012 = vpop.permute.xlu0 %1011
    %1013 = vrot.lane.b32.xlu0 %v72, 112
    %v1014 = vpop.permute.xlu0 %1013
    %vm1015 = vcmp.lt.s32.totalorder %v84, 112
    %v1016 = vsel %vm1015, %v1012, %v1014
    %v1017 = vsel %vm1015, %v1010, %v1012
    %v1018 = vsel %vm1015, %v1008, %v1010
    %v1019 = vsel %vm1015, %v1014, %v1008
    %vm1020 = vmand %vm913, %vm207
    %vm1021 = vmand %vm1020, %vm209
    %v1022 = vsel %vm1021, 1.0, 0.0
    %1023 = vset.pattern.permute.xlu0 17
    %1024 = vperm.xlu0 %1023, %v67
    %v1025 = vpop.permute.xlu0 %1024
    %v1028 = vlaneseq
    %v1029 = vshrl.u32 %v1028, 7
    %v1030 = vsub.s32 0, %v1029
    %v1031 = vrot.slane %v1022, %v1030
    %v1032 = vlaneseq
    %v1033 = vshrl.u32 %v1032, 7
    %v1034 = vsub.s32 1, %v1033
    %v1035 = vrot.slane %v1022, %v1034
    %v1036 = vlaneseq
    %v1037 = vshrl.u32 %v1036, 7
    %v1038 = vsub.s32 2, %v1037
    %v1039 = vrot.slane %v1022, %v1038
    %v1040 = vlaneseq
    %v1041 = vshrl.u32 %v1040, 7
    %v1042 = vsub.s32 3, %v1041
    %v1043 = vrot.slane %v1022, %v1042
    %v1048 = vmul.f32 %v1025, %v1031
    %v1049 = vmul.f32 %v1025, %v1035
    %v1050 = vmul.f32 %v1025, %v1039
    %v1051 = vmul.f32 %v1025, %v1043
    %v1052 = vmul.f32 %v1018, %v1048
    %v1053 = vmul.f32 %v1017, %v1049
    %v1054 = vmul.f32 %v1016, %v1050
    %v1055 = vmul.f32 %v1019, %v1051
    %v1056 = vadd.f32 %v1003, %v1052
    %v1057 = vadd.f32 %v1004, %v1053
    %v1058 = vadd.f32 %v1005, %v1054
    %v1059 = vadd.f32 %v1006, %v1055
    %1060 = vrot.lane.b32.xlu0 %v63, 111
    %v1061 = vpop.permute.xlu0 %1060
    %1062 = vrot.lane.b32.xlu0 %v71, 111
    %v1063 = vpop.permute.xlu0 %1062
    %1064 = vrot.lane.b32.xlu0 %v64, 111
    %v1065 = vpop.permute.xlu0 %1064
    %1066 = vrot.lane.b32.xlu0 %v72, 111
    %v1067 = vpop.permute.xlu0 %1066
    %vm1068 = vcmp.lt.s32.totalorder %v84, 111
    %v1069 = vsel %vm1068, %v1065, %v1067
    %v1070 = vsel %vm1068, %v1063, %v1065
    %v1071 = vsel %vm1068, %v1061, %v1063
    %v1072 = vsel %vm1068, %v1067, %v1061
    %vm1073 = vmand %vm913, %vm263
    %vm1074 = vmand %vm1073, %vm265
    %v1075 = vsel %vm1074, 1.0, 0.0
    %1076 = vset.pattern.permute.xlu0 18
    %1077 = vperm.xlu0 %1076, %v67
    %v1078 = vpop.permute.xlu0 %1077
    %v1081 = vlaneseq
    %v1082 = vshrl.u32 %v1081, 7
    %v1083 = vsub.s32 0, %v1082
    %v1084 = vrot.slane %v1075, %v1083
    %v1085 = vlaneseq
    %v1086 = vshrl.u32 %v1085, 7
    %v1087 = vsub.s32 1, %v1086
    %v1088 = vrot.slane %v1075, %v1087
    %v1089 = vlaneseq
    %v1090 = vshrl.u32 %v1089, 7
    %v1091 = vsub.s32 2, %v1090
    %v1092 = vrot.slane %v1075, %v1091
    %v1093 = vlaneseq
    %v1094 = vshrl.u32 %v1093, 7
    %v1095 = vsub.s32 3, %v1094
    %v1096 = vrot.slane %v1075, %v1095
    %v1101 = vmul.f32 %v1078, %v1084
    %v1102 = vmul.f32 %v1078, %v1088
    %v1103 = vmul.f32 %v1078, %v1092
    %v1104 = vmul.f32 %v1078, %v1096
    %v1105 = vmul.f32 %v1071, %v1101
    %v1106 = vmul.f32 %v1070, %v1102
    %v1107 = vmul.f32 %v1069, %v1103
    %v1108 = vmul.f32 %v1072, %v1104
    %v1109 = vadd.f32 %v1056, %v1105
    %v1110 = vadd.f32 %v1057, %v1106
    %v1111 = vadd.f32 %v1058, %v1107
    %v1112 = vadd.f32 %v1059, %v1108
    %1113 = vrot.lane.b32.xlu0 %v63, 110
    %v1114 = vpop.permute.xlu0 %1113
    %1115 = vrot.lane.b32.xlu0 %v71, 110
    %v1116 = vpop.permute.xlu0 %1115
    %1117 = vrot.lane.b32.xlu0 %v64, 110
    %v1118 = vpop.permute.xlu0 %1117
    %1119 = vrot.lane.b32.xlu0 %v72, 110
    %v1120 = vpop.permute.xlu0 %1119
    %vm1121 = vcmp.lt.s32.totalorder %v84, 110
    %v1122 = vsel %vm1121, %v1118, %v1120
    %v1123 = vsel %vm1121, %v1116, %v1118
    %v1124 = vsel %vm1121, %v1114, %v1116
    %v1125 = vsel %vm1121, %v1120, %v1114
    %vm1126 = vmand %vm913, %vm319
    %vm1127 = vmand %vm1126, %vm321
    %v1128 = vsel %vm1127, 1.0, 0.0
    %1129 = vset.pattern.permute.xlu0 19
    %1130 = vperm.xlu0 %1129, %v67
    %v1131 = vpop.permute.xlu0 %1130
    %v1134 = vlaneseq
    %v1135 = vshrl.u32 %v1134, 7
    %v1136 = vsub.s32 0, %v1135
    %v1137 = vrot.slane %v1128, %v1136
    %v1138 = vlaneseq
    %v1139 = vshrl.u32 %v1138, 7
    %v1140 = vsub.s32 1, %v1139
    %v1141 = vrot.slane %v1128, %v1140
    %v1142 = vlaneseq
    %v1143 = vshrl.u32 %v1142, 7
    %v1144 = vsub.s32 2, %v1143
    %v1145 = vrot.slane %v1128, %v1144
    %v1146 = vlaneseq
    %v1147 = vshrl.u32 %v1146, 7
    %v1148 = vsub.s32 3, %v1147
    %v1149 = vrot.slane %v1128, %v1148
    %v1154 = vmul.f32 %v1131, %v1137
    %v1155 = vmul.f32 %v1131, %v1141
    %v1156 = vmul.f32 %v1131, %v1145
    %v1157 = vmul.f32 %v1131, %v1149
    %v1158 = vmul.f32 %v1124, %v1154
    %v1159 = vmul.f32 %v1123, %v1155
    %v1160 = vmul.f32 %v1122, %v1156
    %v1161 = vmul.f32 %v1125, %v1157
    %v1162 = vadd.f32 %v1109, %v1158
    %v1163 = vadd.f32 %v1110, %v1159
    %v1164 = vadd.f32 %v1111, %v1160
    %v1165 = vadd.f32 %v1112, %v1161
    %1166 = vrot.lane.b32.xlu0 %v63, 98
    %v1167 = vpop.permute.xlu0 %1166
    %1168 = vrot.lane.b32.xlu0 %v71, 98
    %v1169 = vpop.permute.xlu0 %1168
    %1170 = vrot.lane.b32.xlu0 %v64, 98
    %v1171 = vpop.permute.xlu0 %1170
    %1172 = vrot.lane.b32.xlu0 %v72, 98
    %v1173 = vpop.permute.xlu0 %1172
    %vm1174 = vcmp.lt.s32.totalorder %v84, 98
    %v1175 = vsel %vm1174, %v1171, %v1173
    %v1176 = vsel %vm1174, %v1169, %v1171
    %v1177 = vsel %vm1174, %v1167, %v1169
    %v1178 = vsel %vm1174, %v1173, %v1167
    %v1179 = vadd.s32 %v65, 2
    %vm1180 = vcmp.ge.s32.totalorder %v1179, 0
    %vm1181 = vcmp.lt.s32.totalorder %v1179, 16
    %vm1182 = vmand %vm1180, %vm1181
    %vm1183 = vmand %vm1182, %vm95
    %vm1184 = vmand %vm1183, %vm97
    %v1185 = vsel %vm1184, 1.0, 0.0
    %1186 = vset.pattern.permute.xlu0 20
    %1187 = vperm.xlu0 %1186, %v67
    %v1188 = vpop.permute.xlu0 %1187
    %v1191 = vlaneseq
    %v1192 = vshrl.u32 %v1191, 7
    %v1193 = vsub.s32 0, %v1192
    %v1194 = vrot.slane %v1185, %v1193
    %v1195 = vlaneseq
    %v1196 = vshrl.u32 %v1195, 7
    %v1197 = vsub.s32 1, %v1196
    %v1198 = vrot.slane %v1185, %v1197
    %v1199 = vlaneseq
    %v1200 = vshrl.u32 %v1199, 7
    %v1201 = vsub.s32 2, %v1200
    %v1202 = vrot.slane %v1185, %v1201
    %v1203 = vlaneseq
    %v1204 = vshrl.u32 %v1203, 7
    %v1205 = vsub.s32 3, %v1204
    %v1206 = vrot.slane %v1185, %v1205
    %v1211 = vmul.f32 %v1188, %v1194
    %v1212 = vmul.f32 %v1188, %v1198
    %v1213 = vmul.f32 %v1188, %v1202
    %v1214 = vmul.f32 %v1188, %v1206
    %v1215 = vmul.f32 %v1177, %v1211
    %v1216 = vmul.f32 %v1176, %v1212
    %v1217 = vmul.f32 %v1175, %v1213
    %v1218 = vmul.f32 %v1178, %v1214
    %v1219 = vadd.f32 %v1162, %v1215
    %v1220 = vadd.f32 %v1163, %v1216
    %v1221 = vadd.f32 %v1164, %v1217
    %v1222 = vadd.f32 %v1165, %v1218
    %1223 = vrot.lane.b32.xlu0 %v63, 97
    %v1224 = vpop.permute.xlu0 %1223
    %1225 = vrot.lane.b32.xlu0 %v71, 97
    %v1226 = vpop.permute.xlu0 %1225
    %1227 = vrot.lane.b32.xlu0 %v64, 97
    %v1228 = vpop.permute.xlu0 %1227
    %1229 = vrot.lane.b32.xlu0 %v72, 97
    %v1230 = vpop.permute.xlu0 %1229
    %vm1231 = vcmp.lt.s32.totalorder %v84, 97
    %v1232 = vsel %vm1231, %v1228, %v1230
    %v1233 = vsel %vm1231, %v1226, %v1228
    %v1234 = vsel %vm1231, %v1224, %v1226
    %v1235 = vsel %vm1231, %v1230, %v1224
    %vm1236 = vmand %vm1182, %vm152
    %vm1237 = vmand %vm1236, %vm154
    %v1238 = vsel %vm1237, 1.0, 0.0
    %1239 = vset.pattern.permute.xlu0 21
    %1240 = vperm.xlu0 %1239, %v67
    %v1241 = vpop.permute.xlu0 %1240
    %v1244 = vlaneseq
    %v1245 = vshrl.u32 %v1244, 7
    %v1246 = vsub.s32 0, %v1245
    %v1247 = vrot.slane %v1238, %v1246
    %v1248 = vlaneseq
    %v1249 = vshrl.u32 %v1248, 7
    %v1250 = vsub.s32 1, %v1249
    %v1251 = vrot.slane %v1238, %v1250
    %v1252 = vlaneseq
    %v1253 = vshrl.u32 %v1252, 7
    %v1254 = vsub.s32 2, %v1253
    %v1255 = vrot.slane %v1238, %v1254
    %v1256 = vlaneseq
    %v1257 = vshrl.u32 %v1256, 7
    %v1258 = vsub.s32 3, %v1257
    %v1259 = vrot.slane %v1238, %v1258
    %v1264 = vmul.f32 %v1241, %v1247
    %v1265 = vmul.f32 %v1241, %v1251
    %v1266 = vmul.f32 %v1241, %v1255
    %v1267 = vmul.f32 %v1241, %v1259
    %v1268 = vmul.f32 %v1234, %v1264
    %v1269 = vmul.f32 %v1233, %v1265
    %v1270 = vmul.f32 %v1232, %v1266
    %v1271 = vmul.f32 %v1235, %v1267
    %v1272 = vadd.f32 %v1219, %v1268
    %v1273 = vadd.f32 %v1220, %v1269
    %v1274 = vadd.f32 %v1221, %v1270
    %v1275 = vadd.f32 %v1222, %v1271
    %1276 = vrot.lane.b32.xlu0 %v63, 96
    %v1277 = vpop.permute.xlu0 %1276
    %1278 = vrot.lane.b32.xlu0 %v71, 96
    %v1279 = vpop.permute.xlu0 %1278
    %1280 = vrot.lane.b32.xlu0 %v64, 96
    %v1281 = vpop.permute.xlu0 %1280
    %1282 = vrot.lane.b32.xlu0 %v72, 96
    %v1283 = vpop.permute.xlu0 %1282
    %vm1284 = vcmp.lt.s32.totalorder %v84, 96
    %v1285 = vsel %vm1284, %v1281, %v1283
    %v1286 = vsel %vm1284, %v1279, %v1281
    %v1287 = vsel %vm1284, %v1277, %v1279
    %v1288 = vsel %vm1284, %v1283, %v1277
    %vm1289 = vmand %vm1182, %vm207
    %vm1290 = vmand %vm1289, %vm209
    %v1291 = vsel %vm1290, 1.0, 0.0
    %1292 = vset.pattern.permute.xlu0 22
    %1293 = vperm.xlu0 %1292, %v67
    %v1294 = vpop.permute.xlu0 %1293
    %v1297 = vlaneseq
    %v1298 = vshrl.u32 %v1297, 7
    %v1299 = vsub.s32 0, %v1298
    %v1300 = vrot.slane %v1291, %v1299
    %v1301 = vlaneseq
    %v1302 = vshrl.u32 %v1301, 7
    %v1303 = vsub.s32 1, %v1302
    %v1304 = vrot.slane %v1291, %v1303
    %v1305 = vlaneseq
    %v1306 = vshrl.u32 %v1305, 7
    %v1307 = vsub.s32 2, %v1306
    %v1308 = vrot.slane %v1291, %v1307
    %v1309 = vlaneseq
    %v1310 = vshrl.u32 %v1309, 7
    %v1311 = vsub.s32 3, %v1310
    %v1312 = vrot.slane %v1291, %v1311
    %v1317 = vmul.f32 %v1294, %v1300
    %v1318 = vmul.f32 %v1294, %v1304
    %v1319 = vmul.f32 %v1294, %v1308
    %v1320 = vmul.f32 %v1294, %v1312
    %v1321 = vmul.f32 %v1287, %v1317
    %v1322 = vmul.f32 %v1286, %v1318
    %v1323 = vmul.f32 %v1285, %v1319
    %v1324 = vmul.f32 %v1288, %v1320
    %v1325 = vadd.f32 %v1272, %v1321
    %v1326 = vadd.f32 %v1273, %v1322
    %v1327 = vadd.f32 %v1274, %v1323
    %v1328 = vadd.f32 %v1275, %v1324
    %1329 = vrot.lane.b32.xlu0 %v63, 95
    %v1330 = vpop.permute.xlu0 %1329
    %1331 = vrot.lane.b32.xlu0 %v71, 95
    %v1332 = vpop.permute.xlu0 %1331
    %1333 = vrot.lane.b32.xlu0 %v64, 95
    %v1334 = vpop.permute.xlu0 %1333
    %1335 = vrot.lane.b32.xlu0 %v72, 95
    %v1336 = vpop.permute.xlu0 %1335
    %vm1337 = vcmp.lt.s32.totalorder %v84, 95
    %v1338 = vsel %vm1337, %v1334, %v1336
    %v1339 = vsel %vm1337, %v1332, %v1334
    %v1340 = vsel %vm1337, %v1330, %v1332
    %v1341 = vsel %vm1337, %v1336, %v1330
    %vm1342 = vmand %vm1182, %vm263
    %vm1343 = vmand %vm1342, %vm265
    %v1344 = vsel %vm1343, 1.0, 0.0
    %1345 = vset.pattern.permute.xlu0 23
    %1346 = vperm.xlu0 %1345, %v67
    %v1347 = vpop.permute.xlu0 %1346
    %v1350 = vlaneseq
    %v1351 = vshrl.u32 %v1350, 7
    %v1352 = vsub.s32 0, %v1351
    %v1353 = vrot.slane %v1344, %v1352
    %v1354 = vlaneseq
    %v1355 = vshrl.u32 %v1354, 7
    %v1356 = vsub.s32 1, %v1355
    %v1357 = vrot.slane %v1344, %v1356
    %v1358 = vlaneseq
    %v1359 = vshrl.u32 %v1358, 7
    %v1360 = vsub.s32 2, %v1359
    %v1361 = vrot.slane %v1344, %v1360
    %v1362 = vlaneseq
    %v1363 = vshrl.u32 %v1362, 7
    %v1364 = vsub.s32 3, %v1363
    %v1365 = vrot.slane %v1344, %v1364
    %v1370 = vmul.f32 %v1347, %v1353
    %v1371 = vmul.f32 %v1347, %v1357
    %v1372 = vmul.f32 %v1347, %v1361
    %v1373 = vmul.f32 %v1347, %v1365
    %v1374 = vmul.f32 %v1340, %v1370
    %v1375 = vmul.f32 %v1339, %v1371
    %v1376 = vmul.f32 %v1338, %v1372
    %v1377 = vmul.f32 %v1341, %v1373
    %v1378 = vadd.f32 %v1325, %v1374
    %v1379 = vadd.f32 %v1326, %v1375
    %v1380 = vadd.f32 %v1327, %v1376
    %v1381 = vadd.f32 %v1328, %v1377
    %1382 = vrot.lane.b32.xlu0 %v63, 94
    %v1383 = vpop.permute.xlu0 %1382
    %1384 = vrot.lane.b32.xlu0 %v71, 94
    %v1385 = vpop.permute.xlu0 %1384
    %1386 = vrot.lane.b32.xlu0 %v64, 94
    %v1387 = vpop.permute.xlu0 %1386
    %1388 = vrot.lane.b32.xlu0 %v72, 94
    %v1389 = vpop.permute.xlu0 %1388
    %vm1390 = vcmp.lt.s32.totalorder %v84, 94
    %v1391 = vsel %vm1390, %v1387, %v1389
    %v1392 = vsel %vm1390, %v1385, %v1387
    %v1393 = vsel %vm1390, %v1383, %v1385
    %v1394 = vsel %vm1390, %v1389, %v1383
    %vm1395 = vmand %vm1182, %vm319
    %vm1396 = vmand %vm1395, %vm321
    %v1397 = vsel %vm1396, 1.0, 0.0
    %1398 = vset.pattern.permute.xlu0 24
    %1399 = vperm.xlu0 %1398, %v67
    %v1400 = vpop.permute.xlu0 %1399
    %v1403 = vlaneseq
    %v1404 = vshrl.u32 %v1403, 7
    %v1405 = vsub.s32 0, %v1404
    %v1406 = vrot.slane %v1397, %v1405
    %v1407 = vlaneseq
    %v1408 = vshrl.u32 %v1407, 7
    %v1409 = vsub.s32 1, %v1408
    %v1410 = vrot.slane %v1397, %v1409
    %v1411 = vlaneseq
    %v1412 = vshrl.u32 %v1411, 7
    %v1413 = vsub.s32 2, %v1412
    %v1414 = vrot.slane %v1397, %v1413
    %v1415 = vlaneseq
    %v1416 = vshrl.u32 %v1415, 7
    %v1417 = vsub.s32 3, %v1416
    %v1418 = vrot.slane %v1397, %v1417
    %v1423 = vmul.f32 %v1400, %v1406
    %v1424 = vmul.f32 %v1400, %v1410
    %v1425 = vmul.f32 %v1400, %v1414
    %v1426 = vmul.f32 %v1400, %v1418
    %v1427 = vmul.f32 %v1393, %v1423
    %v1428 = vmul.f32 %v1392, %v1424
    %v1429 = vmul.f32 %v1391, %v1425
    %v1430 = vmul.f32 %v1394, %v1426
    %v1431 = vadd.f32 %v1378, %v1427
    %v1432 = vadd.f32 %v1379, %v1428
    %v1433 = vadd.f32 %v1380, %v1429
    %v1434 = vadd.f32 %v1381, %v1430
    %1436 = vset.pattern.permute.xlu0 0
    %1437 = vperm.xlu0 %1436, %v68
    %v1438 = vpop.permute.xlu0 %1437
    %v1440 = vadd.f32 %v1431, %v1438
    %v1441 = vadd.f32 %v1432, %v1438
    %v1442 = vadd.f32 %v1433, %v1438
    %v1443 = vadd.f32 %v1434, %v1438
    %v1444 = vld [vmem:[%s5] sm:$0xf]
    %v1445 = vld [vmem:[%s6] sm:$0xf]
    %vm1446 = vcmask 1043456
    %v1447 = vsel %vm1446, %v1440, 0.0
    %v1448 = vsel %vm1446, %v1441, 0.0
    %v1449 = vadd.f32 %v1447, %v1448
    %v1450 = vsel %vm1446, %v1442, 0.0
    %v1451 = vadd.f32 %v1449, %v1450
    %v1452 = vsel %vm1446, %v1443, 0.0
    %v1453 = vadd.f32 %v1451, %v1452
    %1454 = vadd.xlane.f32.xlu0 %v1453
    %v1455 = vpop.xlane.xlu0 %1454
    %v1456 = vmul.f32 %v1440, %v1440
    %v1457 = vmul.f32 %v1441, %v1441
    %v1458 = vmul.f32 %v1442, %v1442
    %v1459 = vmul.f32 %v1443, %v1443
    %v1460 = vsel %vm1446, %v1456, 0.0
    %v1461 = vsel %vm1446, %v1457, 0.0
    %v1462 = vadd.f32 %v1460, %v1461
    %v1463 = vsel %vm1446, %v1458, 0.0
    %v1464 = vadd.f32 %v1462, %v1463
    %v1465 = vsel %vm1446, %v1459, 0.0
    %v1466 = vadd.f32 %v1464, %v1465
    %1467 = vadd.xlane.f32.xlu0 %v1466
    %v1468 = vpop.xlane.xlu0 %1467
    %v1469 = vmul.f32 %v1455, 0.001953125
    %v1470 = vmul.f32 %v1468, 0.001953125
    %v1471 = vmul.f32 %v1469, %v1469
    %v1472 = vsub.f32 %v1470, %v1471
    %v1473 = vadd.f32 %v1472, 1e-05
    %v1474 = vrsqrt.pop %v1473
    %v1475 = vmul.f32 %v1444, %v1474
    %1477 = vset.pattern.permute.xlu0 0
    %1478 = vperm.xlu0 %1477, %v1475
    %v1479 = vpop.permute.xlu0 %1478
    %v1481 = vmul.f32 %v1440, %v1479
    %v1482 = vmul.f32 %v1441, %v1479
    %v1483 = vmul.f32 %v1442, %v1479
    %v1484 = vmul.f32 %v1443, %v1479
    %v1485 = vmul.f32 %v1469, %v1475
    %v1486 = vsub.f32 %v1445, %v1485
    %1488 = vset.pattern.permute.xlu0 0
    %1489 = vperm.xlu0 %1488, %v1486
    %v1490 = vpop.permute.xlu0 %1489
    %v1492 = vadd.f32 %v1481, %v1490
    %v1493 = vadd.f32 %v1482, %v1490
    %v1494 = vadd.f32 %v1483, %v1490
    %v1495 = vadd.f32 %v1484, %v1490
    %v1496 = vld [vmem:[%s7] sm:$0xff]
    %v1497 = vld [vmem:[%s8] sm:$0xff]
    %v1498 = vlaneseq
    %v1499 = vshrl.u32 %v1498, 7
    %v1500 = vsub.s32 0, %v1499
    %v1501 = vrot.slane %v1492, %v1500
    %v1502 = vlaneseq
    %v1503 = vshrl.u32 %v1502, 7
    %v1504 = vsub.s32 0, %v1503
    %v1505 = vrot.slane %v1493, %v1504
    %v1506 = vlaneseq
    %v1507 = vshrl.u32 %v1506, 7
    %v1508 = vsub.s32 0, %v1507
    %v1509 = vrot.slane %v1494, %v1508
    %v1510 = vlaneseq
    %v1511 = vshrl.u32 %v1510, 7
    %v1512 = vsub.s32 0, %v1511
    %v1513 = vrot.slane %v1495, %v1512
    %1515 = vset.pattern.permute.xlu0 0
    %1516 = vperm.xlu0 %1515, %v1496
    %v1517 = vpop.permute.xlu0 %1516
    %v1519 = vmul.f32 %v1501, %v1517
    %v1520 = vmul.f32 %v1505, %v1517
    %v1521 = vmul.f32 %v1509, %v1517
    %v1522 = vmul.f32 %v1513, %v1517
    %v1523 = vadd.f32 %v1519, 0.0
    %v1524 = vadd.f32 %v1520, 0.0
    %v1525 = vadd.f32 %v1521, 0.0
    %v1526 = vadd.f32 %v1522, 0.0
    %v1527 = vlaneseq
    %v1528 = vshrl.u32 %v1527, 7
    %v1529 = vsub.s32 1, %v1528
    %v1530 = vrot.slane %v1492, %v1529
    %v1531 = vlaneseq
    %v1532 = vshrl.u32 %v1531, 7
    %v1533 = vsub.s32 1, %v1532
    %v1534 = vrot.slane %v1493, %v1533
    %v1535 = vlaneseq
    %v1536 = vshrl.u32 %v1535, 7
    %v1537 = vsub.s32 1, %v1536
    %v1538 = vrot.slane %v1494, %v1537
    %v1539 = vlaneseq
    %v1540 = vshrl.u32 %v1539, 7
    %v1541 = vsub.s32 1, %v1540
    %v1542 = vrot.slane %v1495, %v1541
    %1543 = vset.pattern.permute.xlu0 1
    %1544 = vperm.xlu0 %1543, %v1496
    %v1545 = vpop.permute.xlu0 %1544
    %v1547 = vmul.f32 %v1530, %v1545
    %v1548 = vmul.f32 %v1534, %v1545
    %v1549 = vmul.f32 %v1538, %v1545
    %v1550 = vmul.f32 %v1542, %v1545
    %v1551 = vadd.f32 %v1523, %v1547
    %v1552 = vadd.f32 %v1524, %v1548
    %v1553 = vadd.f32 %v1525, %v1549
    %v1554 = vadd.f32 %v1526, %v1550
    %v1555 = vlaneseq
    %v1556 = vshrl.u32 %v1555, 7
    %v1557 = vsub.s32 2, %v1556
    %v1558 = vrot.slane %v1492, %v1557
    %v1559 = vlaneseq
    %v1560 = vshrl.u32 %v1559, 7
    %v1561 = vsub.s32 2, %v1560
    %v1562 = vrot.slane %v1493, %v1561
    %v1563 = vlaneseq
    %v1564 = vshrl.u32 %v1563, 7
    %v1565 = vsub.s32 2, %v1564
    %v1566 = vrot.slane %v1494, %v1565
    %v1567 = vlaneseq
    %v1568 = vshrl.u32 %v1567, 7
    %v1569 = vsub.s32 2, %v1568
    %v1570 = vrot.slane %v1495, %v1569
    %1571 = vset.pattern.permute.xlu0 2
    %1572 = vperm.xlu0 %1571, %v1496
    %v1573 = vpop.permute.xlu0 %1572
    %v1575 = vmul.f32 %v1558, %v1573
    %v1576 = vmul.f32 %v1562, %v1573
    %v1577 = vmul.f32 %v1566, %v1573
    %v1578 = vmul.f32 %v1570, %v1573
    %v1579 = vadd.f32 %v1551, %v1575
    %v1580 = vadd.f32 %v1552, %v1576
    %v1581 = vadd.f32 %v1553, %v1577
    %v1582 = vadd.f32 %v1554, %v1578
    %v1583 = vlaneseq
    %v1584 = vshrl.u32 %v1583, 7
    %v1585 = vsub.s32 3, %v1584
    %v1586 = vrot.slane %v1492, %v1585
    %v1587 = vlaneseq
    %v1588 = vshrl.u32 %v1587, 7
    %v1589 = vsub.s32 3, %v1588
    %v1590 = vrot.slane %v1493, %v1589
    %v1591 = vlaneseq
    %v1592 = vshrl.u32 %v1591, 7
    %v1593 = vsub.s32 3, %v1592
    %v1594 = vrot.slane %v1494, %v1593
    %v1595 = vlaneseq
    %v1596 = vshrl.u32 %v1595, 7
    %v1597 = vsub.s32 3, %v1596
    %v1598 = vrot.slane %v1495, %v1597
    %1599 = vset.pattern.permute.xlu0 3
    %1600 = vperm.xlu0 %1599, %v1496
    %v1601 = vpop.permute.xlu0 %1600
    %v1603 = vmul.f32 %v1586, %v1601
    %v1604 = vmul.f32 %v1590, %v1601
    %v1605 = vmul.f32 %v1594, %v1601
    %v1606 = vmul.f32 %v1598, %v1601
    %v1607 = vadd.f32 %v1579, %v1603
    %v1608 = vadd.f32 %v1580, %v1604
    %v1609 = vadd.f32 %v1581, %v1605
    %v1610 = vadd.f32 %v1582, %v1606
    %1612 = vset.pattern.permute.xlu0 0
    %1613 = vperm.xlu0 %1612, %v1497
    %v1614 = vpop.permute.xlu0 %1613
    %v1616 = vadd.f32 %v1607, %v1614
    %v1617 = vadd.f32 %v1608, %v1614
    %v1618 = vadd.f32 %v1609, %v1614
    %v1619 = vadd.f32 %v1610, %v1614
    %v1620 = vld [vmem:[%s9] sm:$0xff]
    %v1621 = vld [vmem:[%s10] sm:$0xff]
    %v1622 = vadd.f32 %v1616, %v1617
    %v1623 = vadd.f32 %v1622, %v1618
    %v1624 = vadd.f32 %v1623, %v1619
    %1625 = vadd.xlane.f32.xlu0 %v1624
    %v1626 = vpop.xlane.xlu0 %1625
    %v1627 = vmul.f32 %v1616, %v1616
    %v1628 = vmul.f32 %v1617, %v1617
    %v1629 = vmul.f32 %v1618, %v1618
    %v1630 = vmul.f32 %v1619, %v1619
    %v1631 = vadd.f32 %v1627, %v1628
    %v1632 = vadd.f32 %v1631, %v1629
    %v1633 = vadd.f32 %v1632, %v1630
    %1634 = vadd.xlane.f32.xlu0 %v1633
    %v1635 = vpop.xlane.xlu0 %1634
    %v1636 = vmul.f32 %v1626, 0.001953125
    %v1637 = vmul.f32 %v1635, 0.001953125
    %v1638 = vmul.f32 %v1636, %v1636
    %v1639 = vsub.f32 %v1637, %v1638
    %v1640 = vadd.f32 %v1639, 1e-05
    %v1641 = vrsqrt.pop %v1640
    %v1642 = vmul.f32 %v1620, %v1641
    %1644 = vset.pattern.permute.xlu0 0
    %1645 = vperm.xlu0 %1644, %v1642
    %v1646 = vpop.permute.xlu0 %1645
    %v1648 = vmul.f32 %v1616, %v1646
    %v1649 = vmul.f32 %v1617, %v1646
    %v1650 = vmul.f32 %v1618, %v1646
    %v1651 = vmul.f32 %v1619, %v1646
    %v1652 = vmul.f32 %v1636, %v1642
    %v1653 = vsub.f32 %v1621, %v1652
    %1655 = vset.pattern.permute.xlu0 0
    %1656 = vperm.xlu0 %1655, %v1653
    %v1657 = vpop.permute.xlu0 %1656
    %v1659 = vadd.f32 %v1648, %v1657
    %v1660 = vadd.f32 %v1649, %v1657
    %v1661 = vadd.f32 %v1650, %v1657
    %v1662 = vadd.f32 %v1651, %v1657
    %v1663 = vmax.f32 %v1659, 0.0
    %v1664 = vmax.f32 %v1660, 0.0
    %v1665 = vmax.f32 %v1661, 0.0
    %v1666 = vmax.f32 %v1662, 0.0
    %v1667 = vld [vmem:[%s11] sm:$0xff]
    %v1668 = vld [vmem:[%s12] sm:$0xff]
    %1669 = vrot.lane.b32.xlu0 %v1663, 34
    %v1670 = vpop.permute.xlu0 %1669
    %1671 = vrot.lane.b32.xlu0 %v1664, 34
    %v1672 = vpop.permute.xlu0 %1671
    %1673 = vrot.lane.b32.xlu0 %v1665, 34
    %v1674 = vpop.permute.xlu0 %1673
    %1675 = vrot.lane.b32.xlu0 %v1666, 34
    %v1676 = vpop.permute.xlu0 %1675
    %v1677 = vsel %vm85, %v1674, %v1676
    %v1678 = vsel %vm85, %v1672, %v1674
    %v1679 = vsel %vm85, %v1670, %v1672
    %v1680 = vsel %vm85, %v1676, %v1670
    %1682 = vset.pattern.permute.xlu0 0
    %1683 = vperm.xlu0 %1682, %v1667
    %v1684 = vpop.permute.xlu0 %1683
    %v1686 = vmul.f32 %v1684, %v109
    %v1687 = vmul.f32 %v1684, %v113
    %v1688 = vmul.f32 %v1684, %v117
    %v1689 = vmul.f32 %v1684, %v121
    %v1690 = vmul.f32 %v1680, %v1686
    %v1691 = vmul.f32 %v1679, %v1687
    %v1692 = vmul.f32 %v1678, %v1688
    %v1693 = vmul.f32 %v1677, %v1689
    %v1694 = vadd.f32 %v1690, 0.0
    %v1695 = vadd.f32 %v1691, 0.0
    %v1696 = vadd.f32 %v1692, 0.0
    %v1697 = vadd.f32 %v1693, 0.0
    %1698 = vrot.lane.b32.xlu0 %v1663, 33
    %v1699 = vpop.permute.xlu0 %1698
    %1700 = vrot.lane.b32.xlu0 %v1664, 33
    %v1701 = vpop.permute.xlu0 %1700
    %1702 = vrot.lane.b32.xlu0 %v1665, 33
    %v1703 = vpop.permute.xlu0 %1702
    %1704 = vrot.lane.b32.xlu0 %v1666, 33
    %v1705 = vpop.permute.xlu0 %1704
    %v1706 = vsel %vm146, %v1703, %v1705
    %v1707 = vsel %vm146, %v1701, %v1703
    %v1708 = vsel %vm146, %v1699, %v1701
    %v1709 = vsel %vm146, %v1705, %v1699
    %1710 = vset.pattern.permute.xlu0 1
    %1711 = vperm.xlu0 %1710, %v1667
    %v1712 = vpop.permute.xlu0 %1711
    %v1714 = vmul.f32 %v1712, %v165
    %v1715 = vmul.f32 %v1712, %v169
    %v1716 = vmul.f32 %v1712, %v173
    %v1717 = vmul.f32 %v1712, %v177
    %v1718 = vmul.f32 %v1709, %v1714
    %v1719 = vmul.f32 %v1708, %v1715
    %v1720 = vmul.f32 %v1707, %v1716
    %v1721 = vmul.f32 %v1706, %v1717
    %v1722 = vadd.f32 %v1694, %v1718
    %v1723 = vadd.f32 %v1695, %v1719
    %v1724 = vadd.f32 %v1696, %v1720
    %v1725 = vadd.f32 %v1697, %v1721
    %1726 = vrot.lane.b32.xlu0 %v1663, 32
    %v1727 = vpop.permute.xlu0 %1726
    %1728 = vrot.lane.b32.xlu0 %v1664, 32
    %v1729 = vpop.permute.xlu0 %1728
    %1730 = vrot.lane.b32.xlu0 %v1665, 32
    %v1731 = vpop.permute.xlu0 %1730
    %1732 = vrot.lane.b32.xlu0 %v1666, 32
    %v1733 = vpop.permute.xlu0 %1732
    %v1734 = vsel %vm202, %v1731, %v1733
    %v1735 = vsel %vm202, %v1729, %v1731
    %v1736 = vsel %vm202, %v1727, %v1729
    %v1737 = vsel %vm202, %v1733, %v1727
    %1738 = vset.pattern.permute.xlu0 2
    %1739 = vperm.xlu0 %1738, %v1667
    %v1740 = vpop.permute.xlu0 %1739
    %v1742 = vmul.f32 %v1740, %v220
    %v1743 = vmul.f32 %v1740, %v224
    %v1744 = vmul.f32 %v1740, %v228
    %v1745 = vmul.f32 %v1740, %v232
    %v1746 = vmul.f32 %v1737, %v1742
    %v1747 = vmul.f32 %v1736, %v1743
    %v1748 = vmul.f32 %v1735, %v1744
    %v1749 = vmul.f32 %v1734, %v1745
    %v1750 = vadd.f32 %v1722, %v1746
    %v1751 = vadd.f32 %v1723, %v1747
    %v1752 = vadd.f32 %v1724, %v1748
    %v1753 = vadd.f32 %v1725, %v1749
    %1754 = vrot.lane.b32.xlu0 %v1663, 31
    %v1755 = vpop.permute.xlu0 %1754
    %1756 = vrot.lane.b32.xlu0 %v1664, 31
    %v1757 = vpop.permute.xlu0 %1756
    %1758 = vrot.lane.b32.xlu0 %v1665, 31
    %v1759 = vpop.permute.xlu0 %1758
    %1760 = vrot.lane.b32.xlu0 %v1666, 31
    %v1761 = vpop.permute.xlu0 %1760
    %v1762 = vsel %vm257, %v1759, %v1761
    %v1763 = vsel %vm257, %v1757, %v1759
    %v1764 = vsel %vm257, %v1755, %v1757
    %v1765 = vsel %vm257, %v1761, %v1755
    %1766 = vset.pattern.permute.xlu0 3
    %1767 = vperm.xlu0 %1766, %v1667
    %v1768 = vpop.permute.xlu0 %1767
    %v1770 = vmul.f32 %v1768, %v276
    %v1771 = vmul.f32 %v1768, %v280
    %v1772 = vmul.f32 %v1768, %v284
    %v1773 = vmul.f32 %v1768, %v288
    %v1774 = vmul.f32 %v1765, %v1770
    %v1775 = vmul.f32 %v1764, %v1771
    %v1776 = vmul.f32 %v1763, %v1772
    %v1777 = vmul.f32 %v1762, %v1773
    %v1778 = vadd.f32 %v1750, %v1774
    %v1779 = vadd.f32 %v1751, %v1775
    %v1780 = vadd.f32 %v1752, %v1776
    %v1781 = vadd.f32 %v1753, %v1777
    %1782 = vrot.lane.b32.xlu0 %v1663, 30
    %v1783 = vpop.permute.xlu0 %1782
    %1784 = vrot.lane.b32.xlu0 %v1664, 30
    %v1785 = vpop.permute.xlu0 %1784
    %1786 = vrot.lane.b32.xlu0 %v1665, 30
    %v1787 = vpop.permute.xlu0 %1786
    %1788 = vrot.lane.b32.xlu0 %v1666, 30
    %v1789 = vpop.permute.xlu0 %1788
    %v1790 = vsel %vm313, %v1787, %v1789
    %v1791 = vsel %vm313, %v1785, %v1787
    %v1792 = vsel %vm313, %v1783, %v1785
    %v1793 = vsel %vm313, %v1789, %v1783
    %1794 = vset.pattern.permute.xlu0 4
    %1795 = vperm.xlu0 %1794, %v1667
    %v1796 = vpop.permute.xlu0 %1795
    %v1798 = vmul.f32 %v1796, %v332
    %v1799 = vmul.f32 %v1796, %v336
    %v1800 = vmul.f32 %v1796, %v340
    %v1801 = vmul.f32 %v1796, %v344
    %v1802 = vmul.f32 %v1793, %v1798
    %v1803 = vmul.f32 %v1792, %v1799
    %v1804 = vmul.f32 %v1791, %v1800
    %v1805 = vmul.f32 %v1790, %v1801
    %v1806 = vadd.f32 %v1778, %v1802
    %v1807 = vadd.f32 %v1779, %v1803
    %v1808 = vadd.f32 %v1780, %v1804
    %v1809 = vadd.f32 %v1781, %v1805
    %1810 = vrot.lane.b32.xlu0 %v1663, 18
    %v1811 = vpop.permute.xlu0 %1810
    %1812 = vrot.lane.b32.xlu0 %v1664, 18
    %v1813 = vpop.permute.xlu0 %1812
    %1814 = vrot.lane.b32.xlu0 %v1665, 18
    %v1815 = vpop.permute.xlu0 %1814
    %1816 = vrot.lane.b32.xlu0 %v1666, 18
    %v1817 = vpop.permute.xlu0 %1816
    %v1818 = vsel %vm369, %v1815, %v1817
    %v1819 = vsel %vm369, %v1813, %v1815
    %v1820 = vsel %vm369, %v1811, %v1813
    %v1821 = vsel %vm369, %v1817, %v1811
    %1822 = vset.pattern.permute.xlu0 5
    %1823 = vperm.xlu0 %1822, %v1667
    %v1824 = vpop.permute.xlu0 %1823
    %v1826 = vmul.f32 %v1824, %v389
    %v1827 = vmul.f32 %v1824, %v393
    %v1828 = vmul.f32 %v1824, %v397
    %v1829 = vmul.f32 %v1824, %v401
    %v1830 = vmul.f32 %v1821, %v1826
    %v1831 = vmul.f32 %v1820, %v1827
    %v1832 = vmul.f32 %v1819, %v1828
    %v1833 = vmul.f32 %v1818, %v1829
    %v1834 = vadd.f32 %v1806, %v1830
    %v1835 = vadd.f32 %v1807, %v1831
    %v1836 = vadd.f32 %v1808, %v1832
    %v1837 = vadd.f32 %v1809, %v1833
    %1838 = vrot.lane.b32.xlu0 %v1663, 17
    %v1839 = vpop.permute.xlu0 %1838
    %1840 = vrot.lane.b32.xlu0 %v1664, 17
    %v1841 = vpop.permute.xlu0 %1840
    %1842 = vrot.lane.b32.xlu0 %v1665, 17
    %v1843 = vpop.permute.xlu0 %1842
    %1844 = vrot.lane.b32.xlu0 %v1666, 17
    %v1845 = vpop.permute.xlu0 %1844
    %v1846 = vsel %vm426, %v1843, %v1845
    %v1847 = vsel %vm426, %v1841, %v1843
    %v1848 = vsel %vm426, %v1839, %v1841
    %v1849 = vsel %vm426, %v1845, %v1839
    %1850 = vset.pattern.permute.xlu0 6
    %1851 = vperm.xlu0 %1850, %v1667
    %v1852 = vpop.permute.xlu0 %1851
    %v1854 = vmul.f32 %v1852, %v442
    %v1855 = vmul.f32 %v1852, %v446
    %v1856 = vmul.f32 %v1852, %v450
    %v1857 = vmul.f32 %v1852, %v454
    %v1858 = vmul.f32 %v1849, %v1854
    %v1859 = vmul.f32 %v1848, %v1855
    %v1860 = vmul.f32 %v1847, %v1856
    %v1861 = vmul.f32 %v1846, %v1857
    %v1862 = vadd.f32 %v1834, %v1858
    %v1863 = vadd.f32 %v1835, %v1859
    %v1864 = vadd.f32 %v1836, %v1860
    %v1865 = vadd.f32 %v1837, %v1861
    %1866 = vrot.lane.b32.xlu0 %v1663, 16
    %v1867 = vpop.permute.xlu0 %1866
    %1868 = vrot.lane.b32.xlu0 %v1664, 16
    %v1869 = vpop.permute.xlu0 %1868
    %1870 = vrot.lane.b32.xlu0 %v1665, 16
    %v1871 = vpop.permute.xlu0 %1870
    %1872 = vrot.lane.b32.xlu0 %v1666, 16
    %v1873 = vpop.permute.xlu0 %1872
    %v1874 = vsel %vm479, %v1871, %v1873
    %v1875 = vsel %vm479, %v1869, %v1871
    %v1876 = vsel %vm479, %v1867, %v1869
    %v1877 = vsel %vm479, %v1873, %v1867
    %1878 = vset.pattern.permute.xlu0 7
    %1879 = vperm.xlu0 %1878, %v1667
    %v1880 = vpop.permute.xlu0 %1879
    %v1882 = vmul.f32 %v1880, %v495
    %v1883 = vmul.f32 %v1880, %v499
    %v1884 = vmul.f32 %v1880, %v503
    %v1885 = vmul.f32 %v1880, %v507
    %v1886 = vmul.f32 %v1877, %v1882
    %v1887 = vmul.f32 %v1876, %v1883
    %v1888 = vmul.f32 %v1875, %v1884
    %v1889 = vmul.f32 %v1874, %v1885
    %v1890 = vadd.f32 %v1862, %v1886
    %v1891 = vadd.f32 %v1863, %v1887
    %v1892 = vadd.f32 %v1864, %v1888
    %v1893 = vadd.f32 %v1865, %v1889
    %1894 = vrot.lane.b32.xlu0 %v1663, 15
    %v1895 = vpop.permute.xlu0 %1894
    %1896 = vrot.lane.b32.xlu0 %v1664, 15
    %v1897 = vpop.permute.xlu0 %1896
    %1898 = vrot.lane.b32.xlu0 %v1665, 15
    %v1899 = vpop.permute.xlu0 %1898
    %1900 = vrot.lane.b32.xlu0 %v1666, 15
    %v1901 = vpop.permute.xlu0 %1900
    %v1902 = vsel %vm532, %v1899, %v1901
    %v1903 = vsel %vm532, %v1897, %v1899
    %v1904 = vsel %vm532, %v1895, %v1897
    %v1905 = vsel %vm532, %v1901, %v1895
    %1906 = vset.pattern.permute.xlu0 8
    %1907 = vperm.xlu0 %1906, %v1667
    %v1908 = vpop.permute.xlu0 %1907
    %v1910 = vmul.f32 %v1908, %v548
    %v1911 = vmul.f32 %v1908, %v552
    %v1912 = vmul.f32 %v1908, %v556
    %v1913 = vmul.f32 %v1908, %v560
    %v1914 = vmul.f32 %v1905, %v1910
    %v1915 = vmul.f32 %v1904, %v1911
    %v1916 = vmul.f32 %v1903, %v1912
    %v1917 = vmul.f32 %v1902, %v1913
    %v1918 = vadd.f32 %v1890, %v1914
    %v1919 = vadd.f32 %v1891, %v1915
    %v1920 = vadd.f32 %v1892, %v1916
    %v1921 = vadd.f32 %v1893, %v1917
    %1922 = vrot.lane.b32.xlu0 %v1663, 14
    %v1923 = vpop.permute.xlu0 %1922
    %1924 = vrot.lane.b32.xlu0 %v1664, 14
    %v1925 = vpop.permute.xlu0 %1924
    %1926 = vrot.lane.b32.xlu0 %v1665, 14
    %v1927 = vpop.permute.xlu0 %1926
    %1928 = vrot.lane.b32.xlu0 %v1666, 14
    %v1929 = vpop.permute.xlu0 %1928
    %v1930 = vsel %vm585, %v1927, %v1929
    %v1931 = vsel %vm585, %v1925, %v1927
    %v1932 = vsel %vm585, %v1923, %v1925
    %v1933 = vsel %vm585, %v1929, %v1923
    %1934 = vset.pattern.permute.xlu0 9
    %1935 = vperm.xlu0 %1934, %v1667
    %v1936 = vpop.permute.xlu0 %1935
    %v1938 = vmul.f32 %v1936, %v601
    %v1939 = vmul.f32 %v1936, %v605
    %v1940 = vmul.f32 %v1936, %v609
    %v1941 = vmul.f32 %v1936, %v613
    %v1942 = vmul.f32 %v1933, %v1938
    %v1943 = vmul.f32 %v1932, %v1939
    %v1944 = vmul.f32 %v1931, %v1940
    %v1945 = vmul.f32 %v1930, %v1941
    %v1946 = vadd.f32 %v1918, %v1942
    %v1947 = vadd.f32 %v1919, %v1943
    %v1948 = vadd.f32 %v1920, %v1944
    %v1949 = vadd.f32 %v1921, %v1945
    %1950 = vrot.lane.b32.xlu0 %v1663, 2
    %v1951 = vpop.permute.xlu0 %1950
    %1952 = vrot.lane.b32.xlu0 %v1664, 2
    %v1953 = vpop.permute.xlu0 %1952
    %1954 = vrot.lane.b32.xlu0 %v1665, 2
    %v1955 = vpop.permute.xlu0 %1954
    %1956 = vrot.lane.b32.xlu0 %v1666, 2
    %v1957 = vpop.permute.xlu0 %1956
    %v1958 = vsel %vm638, %v1955, %v1957
    %v1959 = vsel %vm638, %v1953, %v1955
    %v1960 = vsel %vm638, %v1951, %v1953
    %v1961 = vsel %vm638, %v1957, %v1951
    %1962 = vset.pattern.permute.xlu0 10
    %1963 = vperm.xlu0 %1962, %v1667
    %v1964 = vpop.permute.xlu0 %1963
    %v1966 = vmul.f32 %v1964, %v657
    %v1967 = vmul.f32 %v1964, %v661
    %v1968 = vmul.f32 %v1964, %v665
    %v1969 = vmul.f32 %v1964, %v669
    %v1970 = vmul.f32 %v1961, %v1966
    %v1971 = vmul.f32 %v1960, %v1967
    %v1972 = vmul.f32 %v1959, %v1968
    %v1973 = vmul.f32 %v1958, %v1969
    %v1974 = vadd.f32 %v1946, %v1970
    %v1975 = vadd.f32 %v1947, %v1971
    %v1976 = vadd.f32 %v1948, %v1972
    %v1977 = vadd.f32 %v1949, %v1973
    %1978 = vrot.lane.b32.xlu0 %v1663, 1
    %v1979 = vpop.permute.xlu0 %1978
    %1980 = vrot.lane.b32.xlu0 %v1664, 1
    %v1981 = vpop.permute.xlu0 %1980
    %1982 = vrot.lane.b32.xlu0 %v1665, 1
    %v1983 = vpop.permute.xlu0 %1982
    %1984 = vrot.lane.b32.xlu0 %v1666, 1
    %v1985 = vpop.permute.xlu0 %1984
    %v1986 = vsel %vm694, %v1983, %v1985
    %v1987 = vsel %vm694, %v1981, %v1983
    %v1988 = vsel %vm694, %v1979, %v1981
    %v1989 = vsel %vm694, %v1985, %v1979
    %1990 = vset.pattern.permute.xlu0 11
    %1991 = vperm.xlu0 %1990, %v1667
    %v1992 = vpop.permute.xlu0 %1991
    %v1994 = vmul.f32 %v1992, %v710
    %v1995 = vmul.f32 %v1992, %v714
    %v1996 = vmul.f32 %v1992, %v718
    %v1997 = vmul.f32 %v1992, %v722
    %v1998 = vmul.f32 %v1989, %v1994
    %v1999 = vmul.f32 %v1988, %v1995
    %v2000 = vmul.f32 %v1987, %v1996
    %v2001 = vmul.f32 %v1986, %v1997
    %v2002 = vadd.f32 %v1974, %v1998
    %v2003 = vadd.f32 %v1975, %v1999
    %v2004 = vadd.f32 %v1976, %v2000
    %v2005 = vadd.f32 %v1977, %v2001
    %2006 = vset.pattern.permute.xlu0 12
    %2007 = vperm.xlu0 %2006, %v1667
    %v2008 = vpop.permute.xlu0 %2007
    %v2010 = vmul.f32 %v2008, %v750
    %v2011 = vmul.f32 %v2008, %v754
    %v2012 = vmul.f32 %v2008, %v758
    %v2013 = vmul.f32 %v2008, %v762
    %v2014 = vmul.f32 %v1663, %v2010
    %v2015 = vmul.f32 %v1664, %v2011
    %v2016 = vmul.f32 %v1665, %v2012
    %v2017 = vmul.f32 %v1666, %v2013
    %v2018 = vadd.f32 %v2002, %v2014
    %v2019 = vadd.f32 %v2003, %v2015
    %v2020 = vadd.f32 %v2004, %v2016
    %v2021 = vadd.f32 %v2005, %v2017
    %2022 = vrot.lane.b32.xlu0 %v1663, 127
    %v2023 = vpop.permute.xlu0 %2022
    %2024 = vrot.lane.b32.xlu0 %v1664, 127
    %v2025 = vpop.permute.xlu0 %2024
    %2026 = vrot.lane.b32.xlu0 %v1665, 127
    %v2027 = vpop.permute.xlu0 %2026
    %2028 = vrot.lane.b32.xlu0 %v1666, 127
    %v2029 = vpop.permute.xlu0 %2028
    %v2030 = vsel %vm799, %v2027, %v2029
    %v2031 = vsel %vm799, %v2025, %v2027
    %v2032 = vsel %vm799, %v2023, %v2025
    %v2033 = vsel %vm799, %v2029, %v2023
    %2034 = vset.pattern.permute.xlu0 13
    %2035 = vperm.xlu0 %2034, %v1667
    %v2036 = vpop.permute.xlu0 %2035
    %v2038 = vmul.f32 %v2036, %v815
    %v2039 = vmul.f32 %v2036, %v819
    %v2040 = vmul.f32 %v2036, %v823
    %v2041 = vmul.f32 %v2036, %v827
    %v2042 = vmul.f32 %v2032, %v2038
    %v2043 = vmul.f32 %v2031, %v2039
    %v2044 = vmul.f32 %v2030, %v2040
    %v2045 = vmul.f32 %v2033, %v2041
    %v2046 = vadd.f32 %v2018, %v2042
    %v2047 = vadd.f32 %v2019, %v2043
    %v2048 = vadd.f32 %v2020, %v2044
    %v2049 = vadd.f32 %v2021, %v2045
    %2050 = vrot.lane.b32.xlu0 %v1663, 126
    %v2051 = vpop.permute.xlu0 %2050
    %2052 = vrot.lane.b32.xlu0 %v1664, 126
    %v2053 = vpop.permute.xlu0 %2052
    %2054 = vrot.lane.b32.xlu0 %v1665, 126
    %v2055 = vpop.permute.xlu0 %2054
    %2056 = vrot.lane.b32.xlu0 %v1666, 126
    %v2057 = vpop.permute.xlu0 %2056
    %v2058 = vsel %vm852, %v2055, %v2057
    %v2059 = vsel %vm852, %v2053, %v2055
    %v2060 = vsel %vm852, %v2051, %v2053
    %v2061 = vsel %vm852, %v2057, %v2051
    %2062 = vset.pattern.permute.xlu0 14
    %2063 = vperm.xlu0 %2062, %v1667
    %v2064 = vpop.permute.xlu0 %2063
    %v2066 = vmul.f32 %v2064, %v868
    %v2067 = vmul.f32 %v2064, %v872
    %v2068 = vmul.f32 %v2064, %v876
    %v2069 = vmul.f32 %v2064, %v880
    %v2070 = vmul.f32 %v2060, %v2066
    %v2071 = vmul.f32 %v2059, %v2067
    %v2072 = vmul.f32 %v2058, %v2068
    %v2073 = vmul.f32 %v2061, %v2069
    %v2074 = vadd.f32 %v2046, %v2070
    %v2075 = vadd.f32 %v2047, %v2071
    %v2076 = vadd.f32 %v2048, %v2072
    %v2077 = vadd.f32 %v2049, %v2073
    %2078 = vrot.lane.b32.xlu0 %v1663, 114
    %v2079 = vpop.permute.xlu0 %2078
    %2080 = vrot.lane.b32.xlu0 %v1664, 114
    %v2081 = vpop.permute.xlu0 %2080
    %2082 = vrot.lane.b32.xlu0 %v1665, 114
    %v2083 = vpop.permute.xlu0 %2082
    %2084 = vrot.lane.b32.xlu0 %v1666, 114
    %v2085 = vpop.permute.xlu0 %2084
    %v2086 = vsel %vm905, %v2083, %v2085
    %v2087 = vsel %vm905, %v2081, %v2083
    %v2088 = vsel %vm905, %v2079, %v2081
    %v2089 = vsel %vm905, %v2085, %v2079
    %2090 = vset.pattern.permute.xlu0 15
    %2091 = vperm.xlu0 %2090, %v1667
    %v2092 = vpop.permute.xlu0 %2091
    %v2094 = vmul.f32 %v2092, %v925
    %v2095 = vmul.f32 %v2092, %v929
    %v2096 = vmul.f32 %v2092, %v933
    %v2097 = vmul.f32 %v2092, %v937
    %v2098 = vmul.f32 %v2088, %v2094
    %v2099 = vmul.f32 %v2087, %v2095
    %v2100 = vmul.f32 %v2086, %v2096
    %v2101 = vmul.f32 %v2089, %v2097
    %v2102 = vadd.f32 %v2074, %v2098
    %v2103 = vadd.f32 %v2075, %v2099
    %v2104 = vadd.f32 %v2076, %v2100
    %v2105 = vadd.f32 %v2077, %v2101
    %2106 = vrot.lane.b32.xlu0 %v1663, 113
    %v2107 = vpop.permute.xlu0 %2106
    %2108 = vrot.lane.b32.xlu0 %v1664, 113
    %v2109 = vpop.permute.xlu0 %2108
    %2110 = vrot.lane.b32.xlu0 %v1665, 113
    %v2111 = vpop.permute.xlu0 %2110
    %2112 = vrot.lane.b32.xlu0 %v1666, 113
    %v2113 = vpop.permute.xlu0 %2112
    %v2114 = vsel %vm962, %v2111, %v2113
    %v2115 = vsel %vm962, %v2109, %v2111
    %v2116 = vsel %vm962, %v2107, %v2109
    %v2117 = vsel %vm962, %v2113, %v2107
    %2118 = vset.pattern.permute.xlu0 16
    %2119 = vperm.xlu0 %2118, %v1667
    %v2120 = vpop.permute.xlu0 %2119
    %v2122 = vmul.f32 %v2120, %v978
    %v2123 = vmul.f32 %v2120, %v982
    %v2124 = vmul.f32 %v2120, %v986
    %v2125 = vmul.f32 %v2120, %v990
    %v2126 = vmul.f32 %v2116, %v2122
    %v2127 = vmul.f32 %v2115, %v2123
    %v2128 = vmul.f32 %v2114, %v2124
    %v2129 = vmul.f32 %v2117, %v2125
    %v2130 = vadd.f32 %v2102, %v2126
    %v2131 = vadd.f32 %v2103, %v2127
    %v2132 = vadd.f32 %v2104, %v2128
    %v2133 = vadd.f32 %v2105, %v2129
    %2134 = vrot.lane.b32.xlu0 %v1663, 112
    %v2135 = vpop.permute.xlu0 %2134
    %2136 = vrot.lane.b32.xlu0 %v1664, 112
    %v2137 = vpop.permute.xlu0 %2136
    %2138 = vrot.lane.b32.xlu0 %v1665, 112
    %v2139 = vpop.permute.xlu0 %2138
    %2140 = vrot.lane.b32.xlu0 %v1666, 112
    %v2141 = vpop.permute.xlu0 %2140
    %v2142 = vsel %vm1015, %v2139, %v2141
    %v2143 = vsel %vm1015, %v2137, %v2139
    %v2144 = vsel %vm1015, %v2135, %v2137
    %v2145 = vsel %vm1015, %v2141, %v2135
    %2146 = vset.pattern.permute.xlu0 17
    %2147 = vperm.xlu0 %2146, %v1667
    %v2148 = vpop.permute.xlu0 %2147
    %v2150 = vmul.f32 %v2148, %v1031
    %v2151 = vmul.f32 %v2148, %v1035
    %v2152 = vmul.f32 %v2148, %v1039
    %v2153 = vmul.f32 %v2148, %v1043
    %v2154 = vmul.f32 %v2144, %v2150
    %v2155 = vmul.f32 %v2143, %v2151
    %v2156 = vmul.f32 %v2142, %v2152
    %v2157 = vmul.f32 %v2145, %v2153
    %v2158 = vadd.f32 %v2130, %v2154
    %v2159 = vadd.f32 %v2131, %v2155
    %v2160 = vadd.f32 %v2132, %v2156
    %v2161 = vadd.f32 %v2133, %v2157
    %2162 = vrot.lane.b32.xlu0 %v1663, 111
    %v2163 = vpop.permute.xlu0 %2162
    %2164 = vrot.lane.b32.xlu0 %v1664, 111
    %v2165 = vpop.permute.xlu0 %2164
    %2166 = vrot.lane.b32.xlu0 %v1665, 111
    %v2167 = vpop.permute.xlu0 %2166
    %2168 = vrot.lane.b32.xlu0 %v1666, 111
    %v2169 = vpop.permute.xlu0 %2168
    %v2170 = vsel %vm1068, %v2167, %v2169
    %v2171 = vsel %vm1068, %v2165, %v2167
    %v2172 = vsel %vm1068, %v2163, %v2165
    %v2173 = vsel %vm1068, %v2169, %v2163
    %2174 = vset.pattern.permute.xlu0 18
    %2175 = vperm.xlu0 %2174, %v1667
    %v2176 = vpop.permute.xlu0 %2175
    %v2178 = vmul.f32 %v2176, %v1084
    %v2179 = vmul.f32 %v2176, %v1088
    %v2180 = vmul.f32 %v2176, %v1092
    %v2181 = vmul.f32 %v2176, %v1096
    %v2182 = vmul.f32 %v2172, %v2178
    %v2183 = vmul.f32 %v2171, %v2179
    %v2184 = vmul.f32 %v2170, %v2180
    %v2185 = vmul.f32 %v2173, %v2181
    %v2186 = vadd.f32 %v2158, %v2182
    %v2187 = vadd.f32 %v2159, %v2183
    %v2188 = vadd.f32 %v2160, %v2184
    %v2189 = vadd.f32 %v2161, %v2185
    %2190 = vrot.lane.b32.xlu0 %v1663, 110
    %v2191 = vpop.permute.xlu0 %2190
    %2192 = vrot.lane.b32.xlu0 %v1664, 110
    %v2193 = vpop.permute.xlu0 %2192
    %2194 = vrot.lane.b32.xlu0 %v1665, 110
    %v2195 = vpop.permute.xlu0 %2194
    %2196 = vrot.lane.b32.xlu0 %v1666, 110
    %v2197 = vpop.permute.xlu0 %2196
    %v2198 = vsel %vm1121, %v2195, %v2197
    %v2199 = vsel %vm1121, %v2193, %v2195
    %v2200 = vsel %vm1121, %v2191, %v2193
    %v2201 = vsel %vm1121, %v2197, %v2191
    %2202 = vset.pattern.permute.xlu0 19
    %2203 = vperm.xlu0 %2202, %v1667
    %v2204 = vpop.permute.xlu0 %2203
    %v2206 = vmul.f32 %v2204, %v1137
    %v2207 = vmul.f32 %v2204, %v1141
    %v2208 = vmul.f32 %v2204, %v1145
    %v2209 = vmul.f32 %v2204, %v1149
    %v2210 = vmul.f32 %v2200, %v2206
    %v2211 = vmul.f32 %v2199, %v2207
    %v2212 = vmul.f32 %v2198, %v2208
    %v2213 = vmul.f32 %v2201, %v2209
    %v2214 = vadd.f32 %v2186, %v2210
    %v2215 = vadd.f32 %v2187, %v2211
    %v2216 = vadd.f32 %v2188, %v2212
    %v2217 = vadd.f32 %v2189, %v2213
    %2218 = vrot.lane.b32.xlu0 %v1663, 98
    %v2219 = vpop.permute.xlu0 %2218
    %2220 = vrot.lane.b32.xlu0 %v1664, 98
    %v2221 = vpop.permute.xlu0 %2220
    %2222 = vrot.lane.b32.xlu0 %v1665, 98
    %v2223 = vpop.permute.xlu0 %2222
    %2224 = vrot.lane.b32.xlu0 %v1666, 98
    %v2225 = vpop.permute.xlu0 %2224
    %v2226 = vsel %vm1174, %v2223, %v2225
    %v2227 = vsel %vm1174, %v2221, %v2223
    %v2228 = vsel %vm1174, %v2219, %v2221
    %v2229 = vsel %vm1174, %v2225, %v2219
    %2230 = vset.pattern.permute.xlu0 20
    %2231 = vperm.xlu0 %2230, %v1667
    %v2232 = vpop.permute.xlu0 %2231
    %v2234 = vmul.f32 %v2232, %v1194
    %v2235 = vmul.f32 %v2232, %v1198
    %v2236 = vmul.f32 %v2232, %v1202
    %v2237 = vmul.f32 %v2232, %v1206
    %v2238 = vmul.f32 %v2228, %v2234
    %v2239 = vmul.f32 %v2227, %v2235
    %v2240 = vmul.f32 %v2226, %v2236
    %v2241 = vmul.f32 %v2229, %v2237
    %v2242 = vadd.f32 %v2214, %v2238
    %v2243 = vadd.f32 %v2215, %v2239
    %v2244 = vadd.f32 %v2216, %v2240
    %v2245 = vadd.f32 %v2217, %v2241
    %2246 = vrot.lane.b32.xlu0 %v1663, 97
    %v2247 = vpop.permute.xlu0 %2246
    %2248 = vrot.lane.b32.xlu0 %v1664, 97
    %v2249 = vpop.permute.xlu0 %2248
    %2250 = vrot.lane.b32.xlu0 %v1665, 97
    %v2251 = vpop.permute.xlu0 %2250
    %2252 = vrot.lane.b32.xlu0 %v1666, 97
    %v2253 = vpop.permute.xlu0 %2252
    %v2254 = vsel %vm1231, %v2251, %v2253
    %v2255 = vsel %vm1231, %v2249, %v2251
    %v2256 = vsel %vm1231, %v2247, %v2249
    %v2257 = vsel %vm1231, %v2253, %v2247
    %2258 = vset.pattern.permute.xlu0 21
    %2259 = vperm.xlu0 %2258, %v1667
    %v2260 = vpop.permute.xlu0 %2259
    %v2262 = vmul.f32 %v2260, %v1247
    %v2263 = vmul.f32 %v2260, %v1251
    %v2264 = vmul.f32 %v2260, %v1255
    %v2265 = vmul.f32 %v2260, %v1259
    %v2266 = vmul.f32 %v2256, %v2262
    %v2267 = vmul.f32 %v2255, %v2263
    %v2268 = vmul.f32 %v2254, %v2264
    %v2269 = vmul.f32 %v2257, %v2265
    %v2270 = vadd.f32 %v2242, %v2266
    %v2271 = vadd.f32 %v2243, %v2267
    %v2272 = vadd.f32 %v2244, %v2268
    %v2273 = vadd.f32 %v2245, %v2269
    %2274 = vrot.lane.b32.xlu0 %v1663, 96
    %v2275 = vpop.permute.xlu0 %2274
    %2276 = vrot.lane.b32.xlu0 %v1664, 96
    %v2277 = vpop.permute.xlu0 %2276
    %2278 = vrot.lane.b32.xlu0 %v1665, 96
    %v2279 = vpop.permute.xlu0 %2278
    %2280 = vrot.lane.b32.xlu0 %v1666, 96
    %v2281 = vpop.permute.xlu0 %2280
    %v2282 = vsel %vm1284, %v2279, %v2281
    %v2283 = vsel %vm1284, %v2277, %v2279
    %v2284 = vsel %vm1284, %v2275, %v2277
    %v2285 = vsel %vm1284, %v2281, %v2275
    %2286 = vset.pattern.permute.xlu0 22
    %2287 = vperm.xlu0 %2286, %v1667
    %v2288 = vpop.permute.xlu0 %2287
    %v2290 = vmul.f32 %v2288, %v1300
    %v2291 = vmul.f32 %v2288, %v1304
    %v2292 = vmul.f32 %v2288, %v1308
    %v2293 = vmul.f32 %v2288, %v1312
    %v2294 = vmul.f32 %v2284, %v2290
    %v2295 = vmul.f32 %v2283, %v2291
    %v2296 = vmul.f32 %v2282, %v2292
    %v2297 = vmul.f32 %v2285, %v2293
    %v2298 = vadd.f32 %v2270, %v2294
    %v2299 = vadd.f32 %v2271, %v2295
    %v2300 = vadd.f32 %v2272, %v2296
    %v2301 = vadd.f32 %v2273, %v2297
    %2302 = vrot.lane.b32.xlu0 %v1663, 95
    %v2303 = vpop.permute.xlu0 %2302
    %2304 = vrot.lane.b32.xlu0 %v1664, 95
    %v2305 = vpop.permute.xlu0 %2304
    %2306 = vrot.lane.b32.xlu0 %v1665, 95
    %v2307 = vpop.permute.xlu0 %2306
    %2308 = vrot.lane.b32.xlu0 %v1666, 95
    %v2309 = vpop.permute.xlu0 %2308
    %v2310 = vsel %vm1337, %v2307, %v2309
    %v2311 = vsel %vm1337, %v2305, %v2307
    %v2312 = vsel %vm1337, %v2303, %v2305
    %v2313 = vsel %vm1337, %v2309, %v2303
    %2314 = vset.pattern.permute.xlu0 23
    %2315 = vperm.xlu0 %2314, %v1667
    %v2316 = vpop.permute.xlu0 %2315
    %v2318 = vmul.f32 %v2316, %v1353
    %v2319 = vmul.f32 %v2316, %v1357
    %v2320 = vmul.f32 %v2316, %v1361
    %v2321 = vmul.f32 %v2316, %v1365
    %v2322 = vmul.f32 %v2312, %v2318
    %v2323 = vmul.f32 %v2311, %v2319
    %v2324 = vmul.f32 %v2310, %v2320
    %v2325 = vmul.f32 %v2313, %v2321
    %v2326 = vadd.f32 %v2298, %v2322
    %v2327 = vadd.f32 %v2299, %v2323
    %v2328 = vadd.f32 %v2300, %v2324
    %v2329 = vadd.f32 %v2301, %v2325
    %2330 = vrot.lane.b32.xlu0 %v1663, 94
    %v2331 = vpop.permute.xlu0 %2330
    %2332 = vrot.lane.b32.xlu0 %v1664, 94
    %v2333 = vpop.permute.xlu0 %2332
    %2334 = vrot.lane.b32.xlu0 %v1665, 94
    %v2335 = vpop.permute.xlu0 %2334
    %2336 = vrot.lane.b32.xlu0 %v1666, 94
    %v2337 = vpop.permute.xlu0 %2336
    %v2338 = vsel %vm1390, %v2335, %v2337
    %v2339 = vsel %vm1390, %v2333, %v2335
    %v2340 = vsel %vm1390, %v2331, %v2333
    %v2341 = vsel %vm1390, %v2337, %v2331
    %2342 = vset.pattern.permute.xlu0 24
    %2343 = vperm.xlu0 %2342, %v1667
    %v2344 = vpop.permute.xlu0 %2343
    %v2346 = vmul.f32 %v2344, %v1406
    %v2347 = vmul.f32 %v2344, %v1410
    %v2348 = vmul.f32 %v2344, %v1414
    %v2349 = vmul.f32 %v2344, %v1418
    %v2350 = vmul.f32 %v2340, %v2346
    %v2351 = vmul.f32 %v2339, %v2347
    %v2352 = vmul.f32 %v2338, %v2348
    %v2353 = vmul.f32 %v2341, %v2349
    %v2354 = vadd.f32 %v2326, %v2350
    %v2355 = vadd.f32 %v2327, %v2351
    %v2356 = vadd.f32 %v2328, %v2352
    %v2357 = vadd.f32 %v2329, %v2353
    %2359 = vset.pattern.permute.xlu0 0
    %2360 = vperm.xlu0 %2359, %v1668
    %v2361 = vpop.permute.xlu0 %2360
    %v2363 = vadd.f32 %v2354, %v2361
    %v2364 = vadd.f32 %v2355, %v2361
    %v2365 = vadd.f32 %v2356, %v2361
    %v2366 = vadd.f32 %v2357, %v2361
    %v2367 = vld [vmem:[%s13] sm:$0xff]
    %v2368 = vld [vmem:[%s14] sm:$0xff]
    %v2369 = vadd.f32 %v2363, %v2364
    %v2370 = vadd.f32 %v2369, %v2365
    %v2371 = vadd.f32 %v2370, %v2366
    %2372 = vadd.xlane.f32.xlu0 %v2371
    %v2373 = vpop.xlane.xlu0 %2372
    %v2374 = vmul.f32 %v2363, %v2363
    %v2375 = vmul.f32 %v2364, %v2364
    %v2376 = vmul.f32 %v2365, %v2365
    %v2377 = vmul.f32 %v2366, %v2366
    %v2378 = vadd.f32 %v2374, %v2375
    %v2379 = vadd.f32 %v2378, %v2376
    %v2380 = vadd.f32 %v2379, %v2377
    %2381 = vadd.xlane.f32.xlu0 %v2380
    %v2382 = vpop.xlane.xlu0 %2381
    %v2383 = vmul.f32 %v2373, 0.001953125
    %v2384 = vmul.f32 %v2382, 0.001953125
    %v2385 = vmul.f32 %v2383, %v2383
    %v2386 = vsub.f32 %v2384, %v2385
    %v2387 = vadd.f32 %v2386, 1e-05
    %v2388 = vrsqrt.pop %v2387
    %v2389 = vmul.f32 %v2367, %v2388
    %2391 = vset.pattern.permute.xlu0 0
    %2392 = vperm.xlu0 %2391, %v2389
    %v2393 = vpop.permute.xlu0 %2392
    %v2395 = vmul.f32 %v2363, %v2393
    %v2396 = vmul.f32 %v2364, %v2393
    %v2397 = vmul.f32 %v2365, %v2393
    %v2398 = vmul.f32 %v2366, %v2393
    %v2399 = vmul.f32 %v2383, %v2389
    %v2400 = vsub.f32 %v2368, %v2399
    %2402 = vset.pattern.permute.xlu0 0
    %2403 = vperm.xlu0 %2402, %v2400
    %v2404 = vpop.permute.xlu0 %2403
    %v2406 = vadd.f32 %v2395, %v2404
    %v2407 = vadd.f32 %v2396, %v2404
    %v2408 = vadd.f32 %v2397, %v2404
    %v2409 = vadd.f32 %v2398, %v2404
    %v2410 = vld [vmem:[%s15] sm:$0xf]
    %v2411 = vld [vmem:[%s16] sm:$0xf]
    %v2412 = vlaneseq
    %v2413 = vshrl.u32 %v2412, 7
    %v2414 = vsub.s32 0, %v2413
    %v2415 = vrot.slane %v2406, %v2414
    %v2416 = vlaneseq
    %v2417 = vshrl.u32 %v2416, 7
    %v2418 = vsub.s32 0, %v2417
    %v2419 = vrot.slane %v2407, %v2418
    %v2420 = vlaneseq
    %v2421 = vshrl.u32 %v2420, 7
    %v2422 = vsub.s32 0, %v2421
    %v2423 = vrot.slane %v2408, %v2422
    %v2424 = vlaneseq
    %v2425 = vshrl.u32 %v2424, 7
    %v2426 = vsub.s32 0, %v2425
    %v2427 = vrot.slane %v2409, %v2426
    %2429 = vset.pattern.permute.xlu0 0
    %2430 = vperm.xlu0 %2429, %v2410
    %v2431 = vpop.permute.xlu0 %2430
    %v2433 = vmul.f32 %v2415, %v2431
    %v2434 = vmul.f32 %v2419, %v2431
    %v2435 = vmul.f32 %v2423, %v2431
    %v2436 = vmul.f32 %v2427, %v2431
    %v2437 = vadd.f32 %v2433, 0.0
    %v2438 = vadd.f32 %v2434, 0.0
    %v2439 = vadd.f32 %v2435, 0.0
    %v2440 = vadd.f32 %v2436, 0.0
    %v2441 = vlaneseq
    %v2442 = vshrl.u32 %v2441, 7
    %v2443 = vsub.s32 1, %v2442
    %v2444 = vrot.slane %v2406, %v2443
    %v2445 = vlaneseq
    %v2446 = vshrl.u32 %v2445, 7
    %v2447 = vsub.s32 1, %v2446
    %v2448 = vrot.slane %v2407, %v2447
    %v2449 = vlaneseq
    %v2450 = vshrl.u32 %v2449, 7
    %v2451 = vsub.s32 1, %v2450
    %v2452 = vrot.slane %v2408, %v2451
    %v2453 = vlaneseq
    %v2454 = vshrl.u32 %v2453, 7
    %v2455 = vsub.s32 1, %v2454
    %v2456 = vrot.slane %v2409, %v2455
    %2457 = vset.pattern.permute.xlu0 1
    %2458 = vperm.xlu0 %2457, %v2410
    %v2459 = vpop.permute.xlu0 %2458
    %v2461 = vmul.f32 %v2444, %v2459
    %v2462 = vmul.f32 %v2448, %v2459
    %v2463 = vmul.f32 %v2452, %v2459
    %v2464 = vmul.f32 %v2456, %v2459
    %v2465 = vadd.f32 %v2437, %v2461
    %v2466 = vadd.f32 %v2438, %v2462
    %v2467 = vadd.f32 %v2439, %v2463
    %v2468 = vadd.f32 %v2440, %v2464
    %v2469 = vlaneseq
    %v2470 = vshrl.u32 %v2469, 7
    %v2471 = vsub.s32 2, %v2470
    %v2472 = vrot.slane %v2406, %v2471
    %v2473 = vlaneseq
    %v2474 = vshrl.u32 %v2473, 7
    %v2475 = vsub.s32 2, %v2474
    %v2476 = vrot.slane %v2407, %v2475
    %v2477 = vlaneseq
    %v2478 = vshrl.u32 %v2477, 7
    %v2479 = vsub.s32 2, %v2478
    %v2480 = vrot.slane %v2408, %v2479
    %v2481 = vlaneseq
    %v2482 = vshrl.u32 %v2481, 7
    %v2483 = vsub.s32 2, %v2482
    %v2484 = vrot.slane %v2409, %v2483
    %2485 = vset.pattern.permute.xlu0 2
    %2486 = vperm.xlu0 %2485, %v2410
    %v2487 = vpop.permute.xlu0 %2486
    %v2489 = vmul.f32 %v2472, %v2487
    %v2490 = vmul.f32 %v2476, %v2487
    %v2491 = vmul.f32 %v2480, %v2487
    %v2492 = vmul.f32 %v2484, %v2487
    %v2493 = vadd.f32 %v2465, %v2489
    %v2494 = vadd.f32 %v2466, %v2490
    %v2495 = vadd.f32 %v2467, %v2491
    %v2496 = vadd.f32 %v2468, %v2492
    %v2497 = vlaneseq
    %v2498 = vshrl.u32 %v2497, 7
    %v2499 = vsub.s32 3, %v2498
    %v2500 = vrot.slane %v2406, %v2499
    %v2501 = vlaneseq
    %v2502 = vshrl.u32 %v2501, 7
    %v2503 = vsub.s32 3, %v2502
    %v2504 = vrot.slane %v2407, %v2503
    %v2505 = vlaneseq
    %v2506 = vshrl.u32 %v2505, 7
    %v2507 = vsub.s32 3, %v2506
    %v2508 = vrot.slane %v2408, %v2507
    %v2509 = vlaneseq
    %v2510 = vshrl.u32 %v2509, 7
    %v2511 = vsub.s32 3, %v2510
    %v2512 = vrot.slane %v2409, %v2511
    %2513 = vset.pattern.permute.xlu0 3
    %2514 = vperm.xlu0 %2513, %v2410
    %v2515 = vpop.permute.xlu0 %2514
    %v2517 = vmul.f32 %v2500, %v2515
    %v2518 = vmul.f32 %v2504, %v2515
    %v2519 = vmul.f32 %v2508, %v2515
    %v2520 = vmul.f32 %v2512, %v2515
    %v2521 = vadd.f32 %v2493, %v2517
    %v2522 = vadd.f32 %v2494, %v2518
    %v2523 = vadd.f32 %v2495, %v2519
    %v2524 = vadd.f32 %v2496, %v2520
    %v2525 = vlaneseq
    %v2526 = vshrl.u32 %v2525, 7
    %v2527 = vsub.s32 4, %v2526
    %v2528 = vrot.slane %v2406, %v2527
    %v2529 = vlaneseq
    %v2530 = vshrl.u32 %v2529, 7
    %v2531 = vsub.s32 4, %v2530
    %v2532 = vrot.slane %v2407, %v2531
    %v2533 = vlaneseq
    %v2534 = vshrl.u32 %v2533, 7
    %v2535 = vsub.s32 4, %v2534
    %v2536 = vrot.slane %v2408, %v2535
    %v2537 = vlaneseq
    %v2538 = vshrl.u32 %v2537, 7
    %v2539 = vsub.s32 4, %v2538
    %v2540 = vrot.slane %v2409, %v2539
    %2541 = vset.pattern.permute.xlu0 4
    %2542 = vperm.xlu0 %2541, %v2410
    %v2543 = vpop.permute.xlu0 %2542
    %v2545 = vmul.f32 %v2528, %v2543
    %v2546 = vmul.f32 %v2532, %v2543
    %v2547 = vmul.f32 %v2536, %v2543
    %v2548 = vmul.f32 %v2540, %v2543
    %v2549 = vadd.f32 %v2521, %v2545
    %v2550 = vadd.f32 %v2522, %v2546
    %v2551 = vadd.f32 %v2523, %v2547
    %v2552 = vadd.f32 %v2524, %v2548
    %v2553 = vlaneseq
    %v2554 = vshrl.u32 %v2553, 7
    %v2555 = vsub.s32 5, %v2554
    %v2556 = vrot.slane %v2406, %v2555
    %v2557 = vlaneseq
    %v2558 = vshrl.u32 %v2557, 7
    %v2559 = vsub.s32 5, %v2558
    %v2560 = vrot.slane %v2407, %v2559
    %v2561 = vlaneseq
    %v2562 = vshrl.u32 %v2561, 7
    %v2563 = vsub.s32 5, %v2562
    %v2564 = vrot.slane %v2408, %v2563
    %v2565 = vlaneseq
    %v2566 = vshrl.u32 %v2565, 7
    %v2567 = vsub.s32 5, %v2566
    %v2568 = vrot.slane %v2409, %v2567
    %2569 = vset.pattern.permute.xlu0 5
    %2570 = vperm.xlu0 %2569, %v2410
    %v2571 = vpop.permute.xlu0 %2570
    %v2573 = vmul.f32 %v2556, %v2571
    %v2574 = vmul.f32 %v2560, %v2571
    %v2575 = vmul.f32 %v2564, %v2571
    %v2576 = vmul.f32 %v2568, %v2571
    %v2577 = vadd.f32 %v2549, %v2573
    %v2578 = vadd.f32 %v2550, %v2574
    %v2579 = vadd.f32 %v2551, %v2575
    %v2580 = vadd.f32 %v2552, %v2576
    %v2581 = vlaneseq
    %v2582 = vshrl.u32 %v2581, 7
    %v2583 = vsub.s32 6, %v2582
    %v2584 = vrot.slane %v2406, %v2583
    %v2585 = vlaneseq
    %v2586 = vshrl.u32 %v2585, 7
    %v2587 = vsub.s32 6, %v2586
    %v2588 = vrot.slane %v2407, %v2587
    %v2589 = vlaneseq
    %v2590 = vshrl.u32 %v2589, 7
    %v2591 = vsub.s32 6, %v2590
    %v2592 = vrot.slane %v2408, %v2591
    %v2593 = vlaneseq
    %v2594 = vshrl.u32 %v2593, 7
    %v2595 = vsub.s32 6, %v2594
    %v2596 = vrot.slane %v2409, %v2595
    %2597 = vset.pattern.permute.xlu0 6
    %2598 = vperm.xlu0 %2597, %v2410
    %v2599 = vpop.permute.xlu0 %2598
    %v2601 = vmul.f32 %v2584, %v2599
    %v2602 = vmul.f32 %v2588, %v2599
    %v2603 = vmul.f32 %v2592, %v2599
    %v2604 = vmul.f32 %v2596, %v2599
    %v2605 = vadd.f32 %v2577, %v2601
    %v2606 = vadd.f32 %v2578, %v2602
    %v2607 = vadd.f32 %v2579, %v2603
    %v2608 = vadd.f32 %v2580, %v2604
    %v2609 = vlaneseq
    %v2610 = vshrl.u32 %v2609, 7
    %v2611 = vsub.s32 7, %v2610
    %v2612 = vrot.slane %v2406, %v2611
    %v2613 = vlaneseq
    %v2614 = vshrl.u32 %v2613, 7
    %v2615 = vsub.s32 7, %v2614
    %v2616 = vrot.slane %v2407, %v2615
    %v2617 = vlaneseq
    %v2618 = vshrl.u32 %v2617, 7
    %v2619 = vsub.s32 7, %v2618
    %v2620 = vrot.slane %v2408, %v2619
    %v2621 = vlaneseq
    %v2622 = vshrl.u32 %v2621, 7
    %v2623 = vsub.s32 7, %v2622
    %v2624 = vrot.slane %v2409, %v2623
    %2625 = vset.pattern.permute.xlu0 7
    %2626 = vperm.xlu0 %2625, %v2410
    %v2627 = vpop.permute.xlu0 %2626
    %v2629 = vmul.f32 %v2612, %v2627
    %v2630 = vmul.f32 %v2616, %v2627
    %v2631 = vmul.f32 %v2620, %v2627
    %v2632 = vmul.f32 %v2624, %v2627
    %v2633 = vadd.f32 %v2605, %v2629
    %v2634 = vadd.f32 %v2606, %v2630
    %v2635 = vadd.f32 %v2607, %v2631
    %v2636 = vadd.f32 %v2608, %v2632
    %2638 = vset.pattern.permute.xlu0 0
    %2639 = vperm.xlu0 %2638, %v2411
    %v2640 = vpop.permute.xlu0 %2639
    %v2642 = vadd.f32 %v2633, %v2640
    %v2643 = vadd.f32 %v2634, %v2640
    %v2644 = vadd.f32 %v2635, %v2640
    %v2645 = vadd.f32 %v2636, %v2640
    %v2646 = vld [vmem:[%s17] sm:$0xf]
    %v2647 = vld [vmem:[%s18] sm:$0xf]
    %v2648 = vsel %vm1446, %v2642, 0.0
    %v2649 = vsel %vm1446, %v2643, 0.0
    %v2650 = vadd.f32 %v2648, %v2649
    %v2651 = vsel %vm1446, %v2644, 0.0
    %v2652 = vadd.f32 %v2650, %v2651
    %v2653 = vsel %vm1446, %v2645, 0.0
    %v2654 = vadd.f32 %v2652, %v2653
    %2655 = vadd.xlane.f32.xlu0 %v2654
    %v2656 = vpop.xlane.xlu0 %2655
    %v2657 = vmul.f32 %v2642, %v2642
    %v2658 = vmul.f32 %v2643, %v2643
    %v2659 = vmul.f32 %v2644, %v2644
    %v2660 = vmul.f32 %v2645, %v2645
    %v2661 = vsel %vm1446, %v2657, 0.0
    %v2662 = vsel %vm1446, %v2658, 0.0
    %v2663 = vadd.f32 %v2661, %v2662
    %v2664 = vsel %vm1446, %v2659, 0.0
    %v2665 = vadd.f32 %v2663, %v2664
    %v2666 = vsel %vm1446, %v2660, 0.0
    %v2667 = vadd.f32 %v2665, %v2666
    %2668 = vadd.xlane.f32.xlu0 %v2667
    %v2669 = vpop.xlane.xlu0 %2668
    %v2670 = vmul.f32 %v2656, 0.001953125
    %v2671 = vmul.f32 %v2669, 0.001953125
    %v2672 = vmul.f32 %v2670, %v2670
    %v2673 = vsub.f32 %v2671, %v2672
    %v2674 = vadd.f32 %v2673, 1e-05
    %v2675 = vrsqrt.pop %v2674
    %v2676 = vmul.f32 %v2646, %v2675
    %2678 = vset.pattern.permute.xlu0 0
    %2679 = vperm.xlu0 %2678, %v2676
    %v2680 = vpop.permute.xlu0 %2679
    %v2682 = vmul.f32 %v2642, %v2680
    %v2683 = vmul.f32 %v2643, %v2680
    %v2684 = vmul.f32 %v2644, %v2680
    %v2685 = vmul.f32 %v2645, %v2680
    %v2686 = vmul.f32 %v2670, %v2676
    %v2687 = vsub.f32 %v2647, %v2686
    %2689 = vset.pattern.permute.xlu0 0
    %2690 = vperm.xlu0 %2689, %v2687
    %v2691 = vpop.permute.xlu0 %2690
    %v2693 = vadd.f32 %v2682, %v2691
    %v2694 = vadd.f32 %v2683, %v2691
    %v2695 = vadd.f32 %v2684, %v2691
    %v2696 = vadd.f32 %v2685, %v2691
    %v2697 = vadd.f32 %v2693, %v63
    %v2698 = vadd.f32 %v2694, %v71
    %v2699 = vadd.f32 %v2695, %v64
    %v2700 = vadd.f32 %v2696, %v72
    %v2701 = vmax.f32 %v2697, 0.0
    %v2702 = vmax.f32 %v2698, 0.0
    %v2703 = vmax.f32 %v2699, 0.0
    %v2704 = vmax.f32 %v2700, 0.0
    %v2709 = vcombine.low %v2701, %v2702
    %v2710 = vcombine.low %v2703, %v2704
    %2713 = vst [vmem:[#allocation2] sm:$0xff] %v2709
    %2714 = vst [vmem:[#allocation2 + $0x8] sm:$0xff] %v2710
    // Predicated region
    $region78: #{tpu_custom_call.1} parent=1 // pred_check
      _
    $region79: #{tpu_custom_call.1} parent=1 // pred_check_branch
      %2716 = sbr.rel (0) target = $region81
    $region80: #{tpu_custom_call.1} parent=1 // pred_region
      %s2718 = ssub.s32 256, 256
      %2719 = vsyncadd [#allocation3], %s2718
      %s2721 = sshll.u32 [#allocation2], 4
      %s2722 = int_to_ptr.vmem [resolvable:$true] %s2721
      %2724 = dma.vmem_to_hbm [thread:$0]  %s2722, 256, %s19, [#allocation3]
    $region81: #{tpu_custom_call.1} parent=1 // pred_fallthru
      _
    // Predicated region
    $region82: #{tpu_custom_call.1} parent=1 // pred_check
      _
    $region83: #{tpu_custom_call.1} parent=1 // pred_check_branch
      %2726 = sbr.rel (0) target = $region85
    $region84: #{tpu_custom_call.1} parent=1 // pred_region
      %2727 = dma.done [#allocation3], 256
    $region85: #{tpu_custom_call.1} parent=1 // pred_fallthru
      _
    %2728 = vsyncpa [#allocation3], 1

</llo_original>
